<compile_context>
chip_gen: v5e
topology: v5e:2x2
jax: 0.10.0
libtpu: 0.0.40
codegen_flags: <defaults>
</compile_context>

<pallas_src>
import jax
import jax.numpy as jnp
from jax.experimental import pallas as pl
from jax.experimental.pallas import tpu as pltpu

INPUT_DIM = 1024
HIDDEN1 = 1024
HIDDEN2 = 512
LATENT_DIM = 512
BN_EPS = 1e-5


def pointnet_proj_kernel(x_ref,
                         w1_ref, t1_ref,
                         w2_ref, t2_ref,
                         w3_ref, b3_ref,
                         o_ref):
    """Fused fc1+bn1+relu -> fc2+bn2+relu -> fc3 for one batch tile.

    x is bf16, weights are bf16 with the BN scale pre-folded into their columns,
    shift vectors are f32.  All matmuls accumulate in f32 on the MXU.
    """
    x = x_ref[...]                                                         # (TB, 1024) bf16

    # fc1 + folded bn1 + relu   (drop1 = identity in eval mode)
    h1 = jnp.dot(x, w1_ref[...], preferred_element_type=jnp.float32)      # (TB, 1024) f32
    h1 = jnp.maximum(h1 + t1_ref[...], 0.0)

    # fc2 + folded bn2 + relu   (drop2 = identity in eval mode)
    h2 = jnp.dot(h1.astype(jnp.bfloat16), w2_ref[...],
                 preferred_element_type=jnp.float32)                       # (TB, 512) f32
    h2 = jnp.maximum(h2 + t2_ref[...], 0.0)

    # fc3
    o = jnp.dot(h2.astype(jnp.bfloat16), w3_ref[...],
                preferred_element_type=jnp.float32)                        # (TB, latent) f32
    o_ref[...] = o + b3_ref[...]


def pointnet_projection(x, params, *, block_b=256):
    """x: (B, 1024, 1) or (B, 1024).  Returns (B, LATENT_DIM) float32."""
    B = x.shape[0]
    # bf16 activations: halves the per-tile input DMA; the MXU consumes bf16 anyway.
    x2d = x.reshape(B, INPUT_DIM).astype(jnp.bfloat16)
    w1, t1, w2, t2, w3, b3 = params

    # Batch tiling: whole batch in one tile when small (block dim == full array dim is
    # always legal); otherwise 256-row tiles.  Non-divisible B is handled by Pallas'
    # masked partial last block -- no host-side pad, no output slice.
    tb = B if B <= block_b else block_b
    n_blocks = pl.cdiv(B, tb)
    grid = (n_blocks,)

    def act_spec(cols):
        return pl.BlockSpec((tb, cols), lambda i: (i, 0))

    def const_spec(shape):
        # Grid-invariant operand: constant block index => fetched once; single buffer
        # since there is nothing to double-buffer against.
        return pl.BlockSpec(shape, lambda i: (0,) * len(shape),
                            pipeline_mode=pl.Buffered(buffer_count=1))

    flops = 2 * B * (INPUT_DIM * HIDDEN1 + HIDDEN1 * HIDDEN2 + HIDDEN2 * LATENT_DIM)
    bytes_accessed = (
        sum(int(a.size) * a.dtype.itemsize for a in (w1, t1, w2, t2, w3, b3))
        + int(x2d.size) * 2                      # bf16 activations in
        + B * LATENT_DIM * 4)                    # f32 out

    # "parallel" shards the batch grid across v7x's two TensorCores, but each core then
    # re-fetches its own 3.5 MiB weight copy; only worth it once compute dominates.
    semantics = ("parallel",) if B > 512 else ("arbitrary",)

    out = pl.pallas_call(
        pointnet_proj_kernel,
        out_shape=jax.ShapeDtypeStruct((B, LATENT_DIM), jnp.float32),
        grid_spec=pltpu.PrefetchScalarGridSpec(
            num_scalar_prefetch=0,
            grid=grid,
            in_specs=[
                act_spec(INPUT_DIM),
                const_spec((INPUT_DIM, HIDDEN1)), const_spec((1, HIDDEN1)),
                const_spec((HIDDEN1, HIDDEN2)), const_spec((1, HIDDEN2)),
                const_spec((HIDDEN2, LATENT_DIM)), const_spec((1, LATENT_DIM)),
            ],
            out_specs=act_spec(LATENT_DIM),
        ),
        compiler_params=pltpu.CompilerParams(
            dimension_semantics=semantics,
            # ~3.5 MiB of bf16 weights + small activation tiles; fits every chip's VMEM
            # (v7x physical VMEM is 64 MiB, so stay well under it).
            vmem_limit_bytes=32 << 20,
        ),
        cost_estimate=pl.CostEstimate(
            flops=flops, transcendentals=0, bytes_accessed=bytes_accessed),
    )(x2d, w1, t1, w2, t2, w3, b3)
    return out


def init_params(key):
    """Raw parameters matching the PyTorch module (Linear weights stored as (in, out),
    BatchNorm1d with default gamma=1, beta=0, running_mean=0, running_var=1)."""
    k1, k2, k3, kb1, kb2, kb3 = jax.random.split(key, 6)

    w1 = 0.02 * jax.random.normal(k1, (INPUT_DIM, HIDDEN1), jnp.float32)
    b1 = 0.01 * jax.random.normal(kb1, (1, HIDDEN1), jnp.float32)
    w2 = 0.02 * jax.random.normal(k2, (HIDDEN1, HIDDEN2), jnp.float32)
    b2 = 0.01 * jax.random.normal(kb2, (1, HIDDEN2), jnp.float32)
    w3 = 0.02 * jax.random.normal(k3, (HIDDEN2, LATENT_DIM), jnp.float32)
    b3 = 0.01 * jax.random.normal(kb3, (1, LATENT_DIM), jnp.float32)

    def bn(n):
        gamma = jnp.ones((1, n), jnp.float32)
        beta = jnp.zeros((1, n), jnp.float32)
        mean = jnp.zeros((1, n), jnp.float32)
        var = jnp.ones((1, n), jnp.float32)
        return gamma, beta, mean, var

    return dict(w1=w1, b1=b1, bn1=bn(HIDDEN1),
                w2=w2, b2=b2, bn2=bn(HIDDEN2),
                w3=w3, b3=b3)


def prepare_params(raw):
    """Fold eval-mode BatchNorm into the weights/bias, cast weights to bf16.

    bn(fc(x)) = (x@w + b - mean) * scale + beta  with scale = gamma / sqrt(var + eps)
              = x @ (w * scale) + ((b - mean) * scale + beta)
    """
    def fold(w, b, bn_p):
        gamma, beta, mean, var = bn_p
        scale = gamma / jnp.sqrt(var + BN_EPS)                 # (1, out)
        w_f = (w * scale).astype(jnp.bfloat16)                 # scale broadcast over columns
        t_f = ((b - mean) * scale + beta).astype(jnp.float32)
        return w_f, t_f

    w1f, t1f = fold(raw["w1"], raw["b1"], raw["bn1"])
    w2f, t2f = fold(raw["w2"], raw["b2"], raw["bn2"])
    w3f = raw["w3"].astype(jnp.bfloat16)
    b3f = raw["b3"].astype(jnp.float32)
    return (w1f, t1f, w2f, t2f, w3f, b3f)


def reference_forward_folded(x, params):
    """Pure-JAX reference with the same bf16-rounded weights/activations, f32 math."""
    w1, t1, w2, t2, w3, b3 = [p.astype(jnp.float32) for p in params]
    B = x.shape[0]
    h = x.reshape(B, INPUT_DIM).astype(jnp.bfloat16).astype(jnp.float32)
    h = jnp.maximum(h @ w1 + t1, 0.0)
    h = jnp.maximum(h @ w2 + t2, 0.0)
    return h @ w3 + b3


def reference_forward_f32(x, raw):
    """Pure-f32 reference of the original module (eval mode, full BN math, no folding)."""
    B = x.shape[0]
    h = x.reshape(B, INPUT_DIM).astype(jnp.float32)

    def block(h, w, b, bn_p):
        gamma, beta, mean, var = bn_p
        y = h @ w + b
        y = (y - mean) * gamma / jnp.sqrt(var + BN_EPS) + beta
        return jnp.maximum(y, 0.0)

    h = block(h, raw["w1"], raw["b1"], raw["bn1"])
    h = block(h, raw["w2"], raw["b2"], raw["bn2"])
    return h @ raw["w3"] + raw["b3"]


if __name__ == "__main__":
    key = jax.random.PRNGKey(0)
    kx, kx2, kp = jax.random.split(key, 3)

    raw = init_params(kp)
    params = prepare_params(raw)

    # Main test: B=2 (l3_points from PointNet++ is (B, 1024, 1); forward views it as (B,1024)).
    B = 2
    x = jax.random.normal(kx, (B, INPUT_DIM, 1), jnp.float32)

    out = jax.block_until_ready(pointnet_projection(x, params))
    assert out.shape == (B, LATENT_DIM), out.shape

    ref_folded = reference_forward_folded(x, params)
    ref_f32 = reference_forward_f32(x, raw)
    # bf16 weights/activations on the MXU vs same-rounding reference: tight-ish tolerance.
    assert jnp.allclose(out, ref_folded, atol=2e-2, rtol=2e-2), \
        float(jnp.max(jnp.abs(out - ref_folded)))
    # vs the true f32 PyTorch-equivalent math: looser tolerance (bf16 rounding of weights).
    assert jnp.allclose(out, ref_f32, atol=5e-2, rtol=5e-2), \
        float(jnp.max(jnp.abs(out - ref_f32)))

    # Secondary test: non-divisible batch exercises the masked partial last block
    # (no host-side padding path).
    B2 = 66
    x2 = jax.random.normal(kx2, (B2, INPUT_DIM, 1), jnp.float32)
    out2 = jax.block_until_ready(pointnet_projection(x2, params, block_b=64))
    ref2 = reference_forward_f32(x2, raw)
    assert out2.shape == (B2, LATENT_DIM), out2.shape
    assert jnp.allclose(out2, ref2, atol=5e-2, rtol=5e-2), \
        float(jnp.max(jnp.abs(out2 - ref2)))

    print("KERNEL_OK")
</pallas_src>

<mosaic_0001>
module attributes {stable_mosaic.version = 11 : i64} {
  func.func @pointnet_proj_kernel(%arg0: i32, %arg1: memref<2x1024xbf16, #tpu.memory_space<vmem>>, %arg2: memref<1024x1024xbf16, #tpu.memory_space<vmem>>, %arg3: memref<1x1024xf32, #tpu.memory_space<vmem>>, %arg4: memref<1024x512xbf16, #tpu.memory_space<vmem>>, %arg5: memref<1x512xf32, #tpu.memory_space<vmem>>, %arg6: memref<512x512xbf16, #tpu.memory_space<vmem>>, %arg7: memref<1x512xf32, #tpu.memory_space<vmem>>, %arg8: memref<2x512xf32, #tpu.memory_space<vmem>>) attributes {dimension_semantics = [#tpu.dimension_semantics<arbitrary>], iteration_bounds = array<i64: 1>, scalar_prefetch = 0 : i64, scratch_operands = 0 : i64, tpu.core_type = #tpu.core_type<tc>, window_params = [{transform_indices = @transform_0, window_bounds = array<i64: 2, 1024>}, {pipeline_mode = #tpu.pipeline_mode<synchronous>, transform_indices = @transform_1, window_bounds = array<i64: 1024, 1024>}, {pipeline_mode = #tpu.pipeline_mode<synchronous>, transform_indices = @transform_2, window_bounds = array<i64: 1, 1024>}, {pipeline_mode = #tpu.pipeline_mode<synchronous>, transform_indices = @transform_3, window_bounds = array<i64: 1024, 512>}, {pipeline_mode = #tpu.pipeline_mode<synchronous>, transform_indices = @transform_4, window_bounds = array<i64: 1, 512>}, {pipeline_mode = #tpu.pipeline_mode<synchronous>, transform_indices = @transform_5, window_bounds = array<i64: 512, 512>}, {pipeline_mode = #tpu.pipeline_mode<synchronous>, transform_indices = @transform_6, window_bounds = array<i64: 1, 512>}, {transform_indices = @transform_7, window_bounds = array<i64: 2, 512>}]} {
    %c0 = arith.constant 0 : index
    %c0_0 = arith.constant 0 : index
    %0 = vector.load %arg1[%c0, %c0_0] : memref<2x1024xbf16, #tpu.memory_space<vmem>>, vector<2x1024xbf16>
    %c0_1 = arith.constant 0 : index
    %c0_2 = arith.constant 0 : index
    %1 = vector.load %arg2[%c0_1, %c0_2] : memref<1024x1024xbf16, #tpu.memory_space<vmem>>, vector<1024x1024xbf16>
    %cst = arith.constant dense<0.000000e+00> : vector<2x1024xf32>
    %2 = tpu.matmul %0, %1, %cst {dimension_numbers = #tpu.dot_dimension_numbers<[1], [0], [0], [1], [0, 0, 1, 1], [], []>} : vector<2x1024xbf16>, vector<1024x1024xbf16>, vector<2x1024xf32> -> vector<2x1024xf32>
    %c0_3 = arith.constant 0 : index
    %c0_4 = arith.constant 0 : index
    %3 = vector.load %arg3[%c0_3, %c0_4] : memref<1x1024xf32, #tpu.memory_space<vmem>>, vector<1x1024xf32>
    %4 = vector.broadcast %3 : vector<1x1024xf32> to vector<2x1024xf32>
    %5 = arith.addf %2, %4 : vector<2x1024xf32>
    %cst_5 = arith.constant 0.000000e+00 : f32
    %6 = vector.broadcast %cst_5 : f32 to vector<2x1024xf32>
    %7 = arith.maximumf %5, %6 : vector<2x1024xf32>
    %8 = arith.truncf %7 : vector<2x1024xf32> to vector<2x1024xbf16>
    %c0_6 = arith.constant 0 : index
    %c0_7 = arith.constant 0 : index
    %9 = vector.load %arg4[%c0_6, %c0_7] : memref<1024x512xbf16, #tpu.memory_space<vmem>>, vector<1024x512xbf16>
    %cst_8 = arith.constant dense<0.000000e+00> : vector<2x512xf32>
    %10 = tpu.matmul %8, %9, %cst_8 {dimension_numbers = #tpu.dot_dimension_numbers<[1], [0], [0], [1], [0, 0, 1, 1], [], []>} : vector<2x1024xbf16>, vector<1024x512xbf16>, vector<2x512xf32> -> vector<2x512xf32>
    %c0_9 = arith.constant 0 : index
    %c0_10 = arith.constant 0 : index
    %11 = vector.load %arg5[%c0_9, %c0_10] : memref<1x512xf32, #tpu.memory_space<vmem>>, vector<1x512xf32>
    %12 = vector.broadcast %11 : vector<1x512xf32> to vector<2x512xf32>
    %13 = arith.addf %10, %12 : vector<2x512xf32>
    %cst_11 = arith.constant 0.000000e+00 : f32
    %14 = vector.broadcast %cst_11 : f32 to vector<2x512xf32>
    %15 = arith.maximumf %13, %14 : vector<2x512xf32>
    %16 = arith.truncf %15 : vector<2x512xf32> to vector<2x512xbf16>
    %c0_12 = arith.constant 0 : index
    %c0_13 = arith.constant 0 : index
    %17 = vector.load %arg6[%c0_12, %c0_13] : memref<512x512xbf16, #tpu.memory_space<vmem>>, vector<512x512xbf16>
    %cst_14 = arith.constant dense<0.000000e+00> : vector<2x512xf32>
    %18 = tpu.matmul %16, %17, %cst_14 {dimension_numbers = #tpu.dot_dimension_numbers<[1], [0], [0], [1], [0, 0, 1, 1], [], []>} : vector<2x512xbf16>, vector<512x512xbf16>, vector<2x512xf32> -> vector<2x512xf32>
    %c0_15 = arith.constant 0 : index
    %c0_16 = arith.constant 0 : index
    %19 = vector.load %arg7[%c0_15, %c0_16] : memref<1x512xf32, #tpu.memory_space<vmem>>, vector<1x512xf32>
    %20 = vector.broadcast %19 : vector<1x512xf32> to vector<2x512xf32>
    %21 = arith.addf %18, %20 : vector<2x512xf32>
    %c0_17 = arith.constant 0 : index
    %c0_18 = arith.constant 0 : index
    %22 = vector.load %arg8[%c0_17, %c0_18] : memref<2x512xf32, #tpu.memory_space<vmem>>, vector<2x512xf32>
    tpu.vector_store %arg8[%c0_17, %c0_18], %21 {strides = array<i32>} : memref<2x512xf32, #tpu.memory_space<vmem>>, vector<2x512xf32>,
    return
  }
  func.func @transform_0(%arg0: i32) -> (i32, i32) {
    %c0_i32 = arith.constant 0 : i32
    %c0_i32_0 = arith.constant 0 : i32
    return %arg0, %c0_i32 : i32, i32
  }
  func.func @transform_1(%arg0: i32) -> (i32, i32) {
    %c0_i32 = arith.constant 0 : i32
    %c0_i32_0 = arith.constant 0 : i32
    %c0_i32_1 = arith.constant 0 : i32
    return %c0_i32, %c0_i32_0 : i32, i32
  }
  func.func @transform_2(%arg0: i32) -> (i32, i32) {
    %c0_i32 = arith.constant 0 : i32
    %c0_i32_0 = arith.constant 0 : i32
    %c0_i32_1 = arith.constant 0 : i32
    return %c0_i32, %c0_i32_0 : i32, i32
  }
  func.func @transform_3(%arg0: i32) -> (i32, i32) {
    %c0_i32 = arith.constant 0 : i32
    %c0_i32_0 = arith.constant 0 : i32
    %c0_i32_1 = arith.constant 0 : i32
    return %c0_i32, %c0_i32_0 : i32, i32
  }
  func.func @transform_4(%arg0: i32) -> (i32, i32) {
    %c0_i32 = arith.constant 0 : i32
    %c0_i32_0 = arith.constant 0 : i32
    %c0_i32_1 = arith.constant 0 : i32
    return %c0_i32, %c0_i32_0 : i32, i32
  }
  func.func @transform_5(%arg0: i32) -> (i32, i32) {
    %c0_i32 = arith.constant 0 : i32
    %c0_i32_0 = arith.constant 0 : i32
    %c0_i32_1 = arith.constant 0 : i32
    return %c0_i32, %c0_i32_0 : i32, i32
  }
  func.func @transform_6(%arg0: i32) -> (i32, i32) {
    %c0_i32 = arith.constant 0 : i32
    %c0_i32_0 = arith.constant 0 : i32
    %c0_i32_1 = arith.constant 0 : i32
    return %c0_i32, %c0_i32_0 : i32, i32
  }
  func.func @transform_7(%arg0: i32) -> (i32, i32) {
    %c0_i32 = arith.constant 0 : i32
    %c0_i32_0 = arith.constant 0 : i32
    return %arg0, %c0_i32 : i32, i32
  }
}

</mosaic_0001>

<llo_original>
// kernel: tpu_custom_call.1
$region0: #{tpu_custom_call.1}
  #allocation0 [shape = 'u32[]', space=smem, size = 0x4, offset = 0x4, fixed_abs, tag = 'smem constant byte address 0x4 - core index']
  #allocation1 [shape = 'u32[72,128]{1,0:T(1,128)}', space=vmem, size = 0x9000, scoped, tag = 'internal scratch']
  %s0 = inlined_call_operand.hbm [shape: bf16[2,1024], index: 0, kind: input, shape index: {}]
  %s1 = inlined_call_operand.hbm [shape: bf16[1024,1024], index: 1, kind: input, shape index: {}]
  %s2 = inlined_call_operand.hbm [shape: f32[1,1024], index: 2, kind: input, shape index: {}]
  %s3 = inlined_call_operand.hbm [shape: bf16[1024,512], index: 3, kind: input, shape index: {}]
  %s4 = inlined_call_operand.hbm [shape: f32[1,512], index: 4, kind: input, shape index: {}]
  %s5 = inlined_call_operand.hbm [shape: bf16[512,512], index: 5, kind: input, shape index: {}]
  %s6 = inlined_call_operand.hbm [shape: f32[1,512], index: 6, kind: input, shape index: {}]
  %s7 = inlined_call_operand.hbm [shape: f32[2,512], index: 7, kind: output, shape index: {}]
  %s8 = sld [smem:[#allocation0]]
  $region66: #{tpu_custom_call.1} parent=0
    _
  %s10 = ssub.s32 1, %s8
  %s11 = scalar_select 0, %s10, %s8
  $region1: #{tpu_custom_call.1} parent=0
    #allocation2 [shape = 'u8[4096]{0}', space=vmem, size = 0x1000, scoped, tag = 'input window, operand 0, single buffered']
    #allocation3 [shape = 's32[1]{0}', space=sflag, size = 0x4, scoped, tag = 'scoped memory for tpu_custom_call.1']
    #allocation4 [shape = 's32[1]{0}', space=sflag, size = 0x4, scoped, tag = 'scoped memory for tpu_custom_call.1']
    #allocation5 [shape = 'u8[2097152]{0}', space=vmem, size = 0x200000, scoped, tag = 'input window, operand 1, single buffered']
    #allocation6 [shape = 's32[1]{0}', space=sflag, size = 0x4, scoped, tag = 'scoped memory for tpu_custom_call.1']
    #allocation7 [shape = 'u8[4096]{0}', space=vmem, size = 0x1000, scoped, tag = 'input window, operand 2, single buffered']
    #allocation8 [shape = 'u8[1048576]{0}', space=vmem, size = 0x100000, scoped, tag = 'input window, operand 3, single buffered']
    #allocation9 [shape = 's32[1]{0}', space=sflag, size = 0x4, scoped, tag = 'scoped memory for tpu_custom_call.1']
    #allocation10 [shape = 'u8[2048]{0}', space=vmem, size = 0x800, scoped, tag = 'input window, operand 4, single buffered']
    #allocation11 [shape = 'u8[524288]{0}', space=vmem, size = 0x80000, scoped, tag = 'input window, operand 5, single buffered']
    #allocation12 [shape = 's32[1]{0}', space=sflag, size = 0x4, scoped, tag = 'scoped memory for tpu_custom_call.1']
    #allocation13 [shape = 'u8[2048]{0}', space=vmem, size = 0x800, scoped, tag = 'input window, operand 6, single buffered']
    #allocation14 [shape = 'u8[4096]{0}', space=vmem, size = 0x1000, scoped, tag = 'output window, operand 0, single buffered']
    %12 = vsyncpa [#allocation3], 0
    %13 = vsyncpa [#allocation6], 0
    %14 = vsyncpa [#allocation9], 0
    %15 = vsyncpa [#allocation12], 0
    %16 = vsyncpa [#allocation4], 0
    // Predicated region
    $region2: #{tpu_custom_call.1} parent=1 // pred_check
      _
    $region3: #{tpu_custom_call.1} parent=1 // pred_check_branch
      %18 = sbr.rel (0) target = $region5
    $region4: #{tpu_custom_call.1} parent=1 // pred_region
      %20 = vsyncadd [#allocation3], 0
      %s22 = sshll.u32 %s0, 4
      %s23 = int_to_ptr.hbm [resolvable:$true] %s22
      %s24 = sshll.u32 [#allocation2], 4
      %s25 = int_to_ptr.vmem [resolvable:$true] %s24
      %27 = dma.hbm_to_vmem [thread:$0]  %s23, 128, %s25, [#allocation3]
    $region5: #{tpu_custom_call.1} parent=1 // pred_fallthru
      _
    // Predicated region
    $region6: #{tpu_custom_call.1} parent=1 // pred_check
      _
    $region7: #{tpu_custom_call.1} parent=1 // pred_check_branch
      %29 = sbr.rel (0) target = $region9
    $region8: #{tpu_custom_call.1} parent=1 // pred_region
      %31 = vsyncadd [#allocation6], 0
      %s32 = sshll.u32 %s1, 4
      %s33 = int_to_ptr.hbm [resolvable:$true] %s32
      %s34 = sshll.u32 [#allocation5], 4
      %s35 = int_to_ptr.vmem [resolvable:$true] %s34
      %40 = dma.hbm_to_vmem [thread:$0]  %s33, 65536, %s35, [#allocation6], 512, 512, 32
    $region9: #{tpu_custom_call.1} parent=1 // pred_fallthru
      _
    // Predicated region
    $region10: #{tpu_custom_call.1} parent=1 // pred_check
      _
    $region11: #{tpu_custom_call.1} parent=1 // pred_check_branch
      %42 = sbr.rel (0) target = $region13
    $region12: #{tpu_custom_call.1} parent=1 // pred_region
      %44 = vsyncadd [#allocation6], 0
      %s46 = sshll.u32 %s2, 4
      %s47 = int_to_ptr.hbm [resolvable:$true] %s46
      %s48 = sshll.u32 [#allocation7], 4
      %s49 = int_to_ptr.vmem [resolvable:$true] %s48
      %51 = dma.hbm_to_vmem [thread:$0]  %s47, 128, %s49, [#allocation6]
    $region13: #{tpu_custom_call.1} parent=1 // pred_fallthru
      _
    // Predicated region
    $region14: #{tpu_custom_call.1} parent=1 // pred_check
      _
    $region15: #{tpu_custom_call.1} parent=1 // pred_check_branch
      %53 = sbr.rel (0) target = $region17
    $region16: #{tpu_custom_call.1} parent=1 // pred_region
      %55 = vsyncadd [#allocation9], 0
      %s56 = sshll.u32 %s3, 4
      %s57 = int_to_ptr.hbm [resolvable:$true] %s56
      %s58 = sshll.u32 [#allocation8], 4
      %s59 = int_to_ptr.vmem [resolvable:$true] %s58
      %64 = dma.hbm_to_vmem [thread:$0]  %s57, 32768, %s59, [#allocation9], 256, 256, 16
    $region17: #{tpu_custom_call.1} parent=1 // pred_fallthru
      _
    // Predicated region
    $region18: #{tpu_custom_call.1} parent=1 // pred_check
      _
    $region19: #{tpu_custom_call.1} parent=1 // pred_check_branch
      %66 = sbr.rel (0) target = $region21
    $region20: #{tpu_custom_call.1} parent=1 // pred_region
      %68 = vsyncadd [#allocation9], 0
      %s70 = sshll.u32 %s4, 4
      %s71 = int_to_ptr.hbm [resolvable:$true] %s70
      %s72 = sshll.u32 [#allocation10], 4
      %s73 = int_to_ptr.vmem [resolvable:$true] %s72
      %75 = dma.hbm_to_vmem [thread:$0]  %s71, 64, %s73, [#allocation9]
    $region21: #{tpu_custom_call.1} parent=1 // pred_fallthru
      _
    // Predicated region
    $region22: #{tpu_custom_call.1} parent=1 // pred_check
      _
    $region23: #{tpu_custom_call.1} parent=1 // pred_check_branch
      %77 = sbr.rel (0) target = $region25
    $region24: #{tpu_custom_call.1} parent=1 // pred_region
      %79 = vsyncadd [#allocation12], 0
      %s80 = sshll.u32 %s5, 4
      %s81 = int_to_ptr.hbm [resolvable:$true] %s80
      %s82 = sshll.u32 [#allocation11], 4
      %s83 = int_to_ptr.vmem [resolvable:$true] %s82
      %88 = dma.hbm_to_vmem [thread:$0]  %s81, 16384, %s83, [#allocation12], 256, 256, 16
    $region25: #{tpu_custom_call.1} parent=1 // pred_fallthru
      _
    // Predicated region
    $region26: #{tpu_custom_call.1} parent=1 // pred_check
      _
    $region27: #{tpu_custom_call.1} parent=1 // pred_check_branch
      %90 = sbr.rel (0) target = $region29
    $region28: #{tpu_custom_call.1} parent=1 // pred_region
      %92 = vsyncadd [#allocation12], 0
      %s94 = sshll.u32 %s6, 4
      %s95 = int_to_ptr.hbm [resolvable:$true] %s94
      %s96 = sshll.u32 [#allocation13], 4
      %s97 = int_to_ptr.vmem [resolvable:$true] %s96
      %99 = dma.hbm_to_vmem [thread:$0]  %s95, 64, %s97, [#allocation12]
    $region29: #{tpu_custom_call.1} parent=1 // pred_fallthru
      _
    // Predicated region
    $region30: #{tpu_custom_call.1} parent=1 // pred_check
      _
    $region31: #{tpu_custom_call.1} parent=1 // pred_check_branch
      %101 = sbr.rel (0) target = $region33
    $region32: #{tpu_custom_call.1} parent=1 // pred_region
      %103 = dma.done [#allocation3], 128
    $region33: #{tpu_custom_call.1} parent=1 // pred_fallthru
      _
    // Predicated region
    $region34: #{tpu_custom_call.1} parent=1 // pred_check
      _
    $region35: #{tpu_custom_call.1} parent=1 // pred_check_branch
      %105 = sbr.rel (0) target = $region37
    $region36: #{tpu_custom_call.1} parent=1 // pred_region
      %107 = dma.done [#allocation6], 65536
    $region37: #{tpu_custom_call.1} parent=1 // pred_fallthru
      _
    // Predicated region
    $region38: #{tpu_custom_call.1} parent=1 // pred_check
      _
    $region39: #{tpu_custom_call.1} parent=1 // pred_check_branch
      %109 = sbr.rel (0) target = $region41
    $region40: #{tpu_custom_call.1} parent=1 // pred_region
      %111 = dma.done [#allocation6], 128
    $region41: #{tpu_custom_call.1} parent=1 // pred_fallthru
      _
    // Predicated region
    $region42: #{tpu_custom_call.1} parent=1 // pred_check
      _
    $region43: #{tpu_custom_call.1} parent=1 // pred_check_branch
      %113 = sbr.rel (0) target = $region45
    $region44: #{tpu_custom_call.1} parent=1 // pred_region
      %115 = dma.done [#allocation9], 32768
    $region45: #{tpu_custom_call.1} parent=1 // pred_fallthru
      _
    // Predicated region
    $region46: #{tpu_custom_call.1} parent=1 // pred_check
      _
    $region47: #{tpu_custom_call.1} parent=1 // pred_check_branch
      %117 = sbr.rel (0) target = $region49
    $region48: #{tpu_custom_call.1} parent=1 // pred_region
      %119 = dma.done [#allocation9], 64
    $region49: #{tpu_custom_call.1} parent=1 // pred_fallthru
      _
    // Predicated region
    $region50: #{tpu_custom_call.1} parent=1 // pred_check
      _
    $region51: #{tpu_custom_call.1} parent=1 // pred_check_branch
      %121 = sbr.rel (0) target = $region53
    $region52: #{tpu_custom_call.1} parent=1 // pred_region
      %123 = dma.done [#allocation12], 16384
    $region53: #{tpu_custom_call.1} parent=1 // pred_fallthru
      _
    // Predicated region
    $region54: #{tpu_custom_call.1} parent=1 // pred_check
      _
    $region55: #{tpu_custom_call.1} parent=1 // pred_check_branch
      %125 = sbr.rel (0) target = $region57
    $region56: #{tpu_custom_call.1} parent=1 // pred_region
      %127 = dma.done [#allocation12], 64
    $region57: #{tpu_custom_call.1} parent=1 // pred_fallthru
      _
    %v128 = vld [vmem:[#allocation2] sm:$0xff]
    %v129 = vld [vmem:[#allocation5] sm:$0xff]
    %v130 = vld [vmem:[#allocation5 + $0x8] sm:$0xff]
    %v131 = vld [vmem:[#allocation5 + $0x10] sm:$0xff]
    %v132 = vld [vmem:[#allocation5 + $0x18] sm:$0xff]
    %v133 = vld [vmem:[#allocation5 + $0x20] sm:$0xff]
    %v134 = vld [vmem:[#allocation5 + $0x28] sm:$0xff]
    %v135 = vld [vmem:[#allocation5 + $0x30] sm:$0xff]
    %v136 = vld [vmem:[#allocation5 + $0x38] sm:$0xff]
    %v137 = vld [vmem:[#allocation5 + $0x40] sm:$0xff]
    %v138 = vld [vmem:[#allocation5 + $0x48] sm:$0xff]
    %v139 = vld [vmem:[#allocation5 + $0x50] sm:$0xff]
    %v140 = vld [vmem:[#allocation5 + $0x58] sm:$0xff]
    %v141 = vld [vmem:[#allocation5 + $0x60] sm:$0xff]
    %v142 = vld [vmem:[#allocation5 + $0x68] sm:$0xff]
    %v143 = vld [vmem:[#allocation5 + $0x70] sm:$0xff]
    %v144 = vld [vmem:[#allocation5 + $0x78] sm:$0xff]
    %v145 = vld [vmem:[#allocation5 + $0x80] sm:$0xff]
    %v146 = vld [vmem:[#allocation5 + $0x88] sm:$0xff]
    %v147 = vld [vmem:[#allocation5 + $0x90] sm:$0xff]
    %v148 = vld [vmem:[#allocation5 + $0x98] sm:$0xff]
    %v149 = vld [vmem:[#allocation5 + $0xa0] sm:$0xff]
    %v150 = vld [vmem:[#allocation5 + $0xa8] sm:$0xff]
    %v151 = vld [vmem:[#allocation5 + $0xb0] sm:$0xff]
    %v152 = vld [vmem:[#allocation5 + $0xb8] sm:$0xff]
    %v153 = vld [vmem:[#allocation5 + $0xc0] sm:$0xff]
    %v154 = vld [vmem:[#allocation5 + $0xc8] sm:$0xff]
    %v155 = vld [vmem:[#allocation5 + $0xd0] sm:$0xff]
    %v156 = vld [vmem:[#allocation5 + $0xd8] sm:$0xff]
    %v157 = vld [vmem:[#allocation5 + $0xe0] sm:$0xff]
    %v158 = vld [vmem:[#allocation5 + $0xe8] sm:$0xff]
    %v159 = vld [vmem:[#allocation5 + $0xf0] sm:$0xff]
    %v160 = vld [vmem:[#allocation5 + $0xf8] sm:$0xff]
    %v161 = vld [vmem:[#allocation5 + $0x100] sm:$0xff]
    %v162 = vld [vmem:[#allocation5 + $0x108] sm:$0xff]
    %v163 = vld [vmem:[#allocation5 + $0x110] sm:$0xff]
    %v164 = vld [vmem:[#allocation5 + $0x118] sm:$0xff]
    %v165 = vld [vmem:[#allocation5 + $0x120] sm:$0xff]
    %v166 = vld [vmem:[#allocation5 + $0x128] sm:$0xff]
    %v167 = vld [vmem:[#allocation5 + $0x130] sm:$0xff]
    %v168 = vld [vmem:[#allocation5 + $0x138] sm:$0xff]
    %v169 = vld [vmem:[#allocation5 + $0x140] sm:$0xff]
    %v170 = vld [vmem:[#allocation5 + $0x148] sm:$0xff]
    %v171 = vld [vmem:[#allocation5 + $0x150] sm:$0xff]
    %v172 = vld [vmem:[#allocation5 + $0x158] sm:$0xff]
    %v173 = vld [vmem:[#allocation5 + $0x160] sm:$0xff]
    %v174 = vld [vmem:[#allocation5 + $0x168] sm:$0xff]
    %v175 = vld [vmem:[#allocation5 + $0x170] sm:$0xff]
    %v176 = vld [vmem:[#allocation5 + $0x178] sm:$0xff]
    %v177 = vld [vmem:[#allocation5 + $0x180] sm:$0xff]
    %v178 = vld [vmem:[#allocation5 + $0x188] sm:$0xff]
    %v179 = vld [vmem:[#allocation5 + $0x190] sm:$0xff]
    %v180 = vld [vmem:[#allocation5 + $0x198] sm:$0xff]
    %v181 = vld [vmem:[#allocation5 + $0x1a0] sm:$0xff]
    %v182 = vld [vmem:[#allocation5 + $0x1a8] sm:$0xff]
    %v183 = vld [vmem:[#allocation5 + $0x1b0] sm:$0xff]
    %v184 = vld [vmem:[#allocation5 + $0x1b8] sm:$0xff]
    %v185 = vld [vmem:[#allocation5 + $0x1c0] sm:$0xff]
    %v186 = vld [vmem:[#allocation5 + $0x1c8] sm:$0xff]
    %v187 = vld [vmem:[#allocation5 + $0x1d0] sm:$0xff]
    %v188 = vld [vmem:[#allocation5 + $0x1d8] sm:$0xff]
    %v189 = vld [vmem:[#allocation5 + $0x1e0] sm:$0xff]
    %v190 = vld [vmem:[#allocation5 + $0x1e8] sm:$0xff]
    %v191 = vld [vmem:[#allocation5 + $0x1f0] sm:$0xff]
    %v192 = vld [vmem:[#allocation5 + $0x1f8] sm:$0xff]
    %v193 = vld [vmem:[#allocation5 + $0x200] sm:$0xff]
    %v194 = vld [vmem:[#allocation5 + $0x208] sm:$0xff]
    %v195 = vld [vmem:[#allocation5 + $0x210] sm:$0xff]
    %v196 = vld [vmem:[#allocation5 + $0x218] sm:$0xff]
    %v197 = vld [vmem:[#allocation5 + $0x220] sm:$0xff]
    %v198 = vld [vmem:[#allocation5 + $0x228] sm:$0xff]
    %v199 = vld [vmem:[#allocation5 + $0x230] sm:$0xff]
    %v200 = vld [vmem:[#allocation5 + $0x238] sm:$0xff]
    %v201 = vld [vmem:[#allocation5 + $0x240] sm:$0xff]
    %v202 = vld [vmem:[#allocation5 + $0x248] sm:$0xff]
    %v203 = vld [vmem:[#allocation5 + $0x250] sm:$0xff]
    %v204 = vld [vmem:[#allocation5 + $0x258] sm:$0xff]
    %v205 = vld [vmem:[#allocation5 + $0x260] sm:$0xff]
    %v206 = vld [vmem:[#allocation5 + $0x268] sm:$0xff]
    %v207 = vld [vmem:[#allocation5 + $0x270] sm:$0xff]
    %v208 = vld [vmem:[#allocation5 + $0x278] sm:$0xff]
    %v209 = vld [vmem:[#allocation5 + $0x280] sm:$0xff]
    %v210 = vld [vmem:[#allocation5 + $0x288] sm:$0xff]
    %v211 = vld [vmem:[#allocation5 + $0x290] sm:$0xff]
    %v212 = vld [vmem:[#allocation5 + $0x298] sm:$0xff]
    %v213 = vld [vmem:[#allocation5 + $0x2a0] sm:$0xff]
    %v214 = vld [vmem:[#allocation5 + $0x2a8] sm:$0xff]
    %v215 = vld [vmem:[#allocation5 + $0x2b0] sm:$0xff]
    %v216 = vld [vmem:[#allocation5 + $0x2b8] sm:$0xff]
    %v217 = vld [vmem:[#allocation5 + $0x2c0] sm:$0xff]
    %v218 = vld [vmem:[#allocation5 + $0x2c8] sm:$0xff]
    %v219 = vld [vmem:[#allocation5 + $0x2d0] sm:$0xff]
    %v220 = vld [vmem:[#allocation5 + $0x2d8] sm:$0xff]
    %v221 = vld [vmem:[#allocation5 + $0x2e0] sm:$0xff]
    %v222 = vld [vmem:[#allocation5 + $0x2e8] sm:$0xff]
    %v223 = vld [vmem:[#allocation5 + $0x2f0] sm:$0xff]
    %v224 = vld [vmem:[#allocation5 + $0x2f8] sm:$0xff]
    %v225 = vld [vmem:[#allocation5 + $0x300] sm:$0xff]
    %v226 = vld [vmem:[#allocation5 + $0x308] sm:$0xff]
    %v227 = vld [vmem:[#allocation5 + $0x310] sm:$0xff]
    %v228 = vld [vmem:[#allocation5 + $0x318] sm:$0xff]
    %v229 = vld [vmem:[#allocation5 + $0x320] sm:$0xff]
    %v230 = vld [vmem:[#allocation5 + $0x328] sm:$0xff]
    %v231 = vld [vmem:[#allocation5 + $0x330] sm:$0xff]
    %v232 = vld [vmem:[#allocation5 + $0x338] sm:$0xff]
    %v233 = vld [vmem:[#allocation5 + $0x340] sm:$0xff]
    %v234 = vld [vmem:[#allocation5 + $0x348] sm:$0xff]
    %v235 = vld [vmem:[#allocation5 + $0x350] sm:$0xff]
    %v236 = vld [vmem:[#allocation5 + $0x358] sm:$0xff]
    %v237 = vld [vmem:[#allocation5 + $0x360] sm:$0xff]
    %v238 = vld [vmem:[#allocation5 + $0x368] sm:$0xff]
    %v239 = vld [vmem:[#allocation5 + $0x370] sm:$0xff]
    %v240 = vld [vmem:[#allocation5 + $0x378] sm:$0xff]
    %v241 = vld [vmem:[#allocation5 + $0x380] sm:$0xff]
    %v242 = vld [vmem:[#allocation5 + $0x388] sm:$0xff]
    %v243 = vld [vmem:[#allocation5 + $0x390] sm:$0xff]
    %v244 = vld [vmem:[#allocation5 + $0x398] sm:$0xff]
    %v245 = vld [vmem:[#allocation5 + $0x3a0] sm:$0xff]
    %v246 = vld [vmem:[#allocation5 + $0x3a8] sm:$0xff]
    %v247 = vld [vmem:[#allocation5 + $0x3b0] sm:$0xff]
    %v248 = vld [vmem:[#allocation5 + $0x3b8] sm:$0xff]
    %v249 = vld [vmem:[#allocation5 + $0x3c0] sm:$0xff]
    %v250 = vld [vmem:[#allocation5 + $0x3c8] sm:$0xff]
    %v251 = vld [vmem:[#allocation5 + $0x3d0] sm:$0xff]
    %v252 = vld [vmem:[#allocation5 + $0x3d8] sm:$0xff]
    %v253 = vld [vmem:[#allocation5 + $0x3e0] sm:$0xff]
    %v254 = vld [vmem:[#allocation5 + $0x3e8] sm:$0xff]
    %v255 = vld [vmem:[#allocation5 + $0x3f0] sm:$0xff]
    %v256 = vld [vmem:[#allocation5 + $0x3f8] sm:$0xff]
    %v257 = vld [vmem:[#allocation5 + $0x400] sm:$0xff]
    %v258 = vld [vmem:[#allocation5 + $0x408] sm:$0xff]
    %v259 = vld [vmem:[#allocation5 + $0x410] sm:$0xff]
    %v260 = vld [vmem:[#allocation5 + $0x418] sm:$0xff]
    %v261 = vld [vmem:[#allocation5 + $0x420] sm:$0xff]
    %v262 = vld [vmem:[#allocation5 + $0x428] sm:$0xff]
    %v263 = vld [vmem:[#allocation5 + $0x430] sm:$0xff]
    %v264 = vld [vmem:[#allocation5 + $0x438] sm:$0xff]
    %v265 = vld [vmem:[#allocation5 + $0x440] sm:$0xff]
    %v266 = vld [vmem:[#allocation5 + $0x448] sm:$0xff]
    %v267 = vld [vmem:[#allocation5 + $0x450] sm:$0xff]
    %v268 = vld [vmem:[#allocation5 + $0x458] sm:$0xff]
    %v269 = vld [vmem:[#allocation5 + $0x460] sm:$0xff]
    %v270 = vld [vmem:[#allocation5 + $0x468] sm:$0xff]
    %v271 = vld [vmem:[#allocation5 + $0x470] sm:$0xff]
    %v272 = vld [vmem:[#allocation5 + $0x478] sm:$0xff]
    %v273 = vld [vmem:[#allocation5 + $0x480] sm:$0xff]
    %v274 = vld [vmem:[#allocation5 + $0x488] sm:$0xff]
    %v275 = vld [vmem:[#allocation5 + $0x490] sm:$0xff]
    %v276 = vld [vmem:[#allocation5 + $0x498] sm:$0xff]
    %v277 = vld [vmem:[#allocation5 + $0x4a0] sm:$0xff]
    %v278 = vld [vmem:[#allocation5 + $0x4a8] sm:$0xff]
    %v279 = vld [vmem:[#allocation5 + $0x4b0] sm:$0xff]
    %v280 = vld [vmem:[#allocation5 + $0x4b8] sm:$0xff]
    %v281 = vld [vmem:[#allocation5 + $0x4c0] sm:$0xff]
    %v282 = vld [vmem:[#allocation5 + $0x4c8] sm:$0xff]
    %v283 = vld [vmem:[#allocation5 + $0x4d0] sm:$0xff]
    %v284 = vld [vmem:[#allocation5 + $0x4d8] sm:$0xff]
    %v285 = vld [vmem:[#allocation5 + $0x4e0] sm:$0xff]
    %v286 = vld [vmem:[#allocation5 + $0x4e8] sm:$0xff]
    %v287 = vld [vmem:[#allocation5 + $0x4f0] sm:$0xff]
    %v288 = vld [vmem:[#allocation5 + $0x4f8] sm:$0xff]
    %v289 = vld [vmem:[#allocation5 + $0x500] sm:$0xff]
    %v290 = vld [vmem:[#allocation5 + $0x508] sm:$0xff]
    %v291 = vld [vmem:[#allocation5 + $0x510] sm:$0xff]
    %v292 = vld [vmem:[#allocation5 + $0x518] sm:$0xff]
    %v293 = vld [vmem:[#allocation5 + $0x520] sm:$0xff]
    %v294 = vld [vmem:[#allocation5 + $0x528] sm:$0xff]
    %v295 = vld [vmem:[#allocation5 + $0x530] sm:$0xff]
    %v296 = vld [vmem:[#allocation5 + $0x538] sm:$0xff]
    %v297 = vld [vmem:[#allocation5 + $0x540] sm:$0xff]
    %v298 = vld [vmem:[#allocation5 + $0x548] sm:$0xff]
    %v299 = vld [vmem:[#allocation5 + $0x550] sm:$0xff]
    %v300 = vld [vmem:[#allocation5 + $0x558] sm:$0xff]
    %v301 = vld [vmem:[#allocation5 + $0x560] sm:$0xff]
    %v302 = vld [vmem:[#allocation5 + $0x568] sm:$0xff]
    %v303 = vld [vmem:[#allocation5 + $0x570] sm:$0xff]
    %v304 = vld [vmem:[#allocation5 + $0x578] sm:$0xff]
    %v305 = vld [vmem:[#allocation5 + $0x580] sm:$0xff]
    %v306 = vld [vmem:[#allocation5 + $0x588] sm:$0xff]
    %v307 = vld [vmem:[#allocation5 + $0x590] sm:$0xff]
    %v308 = vld [vmem:[#allocation5 + $0x598] sm:$0xff]
    %v309 = vld [vmem:[#allocation5 + $0x5a0] sm:$0xff]
    %v310 = vld [vmem:[#allocation5 + $0x5a8] sm:$0xff]
    %v311 = vld [vmem:[#allocation5 + $0x5b0] sm:$0xff]
    %v312 = vld [vmem:[#allocation5 + $0x5b8] sm:$0xff]
    %v313 = vld [vmem:[#allocation5 + $0x5c0] sm:$0xff]
    %v314 = vld [vmem:[#allocation5 + $0x5c8] sm:$0xff]
    %v315 = vld [vmem:[#allocation5 + $0x5d0] sm:$0xff]
    %v316 = vld [vmem:[#allocation5 + $0x5d8] sm:$0xff]
    %v317 = vld [vmem:[#allocation5 + $0x5e0] sm:$0xff]
    %v318 = vld [vmem:[#allocation5 + $0x5e8] sm:$0xff]
    %v319 = vld [vmem:[#allocation5 + $0x5f0] sm:$0xff]
    %v320 = vld [vmem:[#allocation5 + $0x5f8] sm:$0xff]
    %v321 = vld [vmem:[#allocation5 + $0x600] sm:$0xff]
    %v322 = vld [vmem:[#allocation5 + $0x608] sm:$0xff]
    %v323 = vld [vmem:[#allocation5 + $0x610] sm:$0xff]
    %v324 = vld [vmem:[#allocation5 + $0x618] sm:$0xff]
    %v325 = vld [vmem:[#allocation5 + $0x620] sm:$0xff]
    %v326 = vld [vmem:[#allocation5 + $0x628] sm:$0xff]
    %v327 = vld [vmem:[#allocation5 + $0x630] sm:$0xff]
    %v328 = vld [vmem:[#allocation5 + $0x638] sm:$0xff]
    %v329 = vld [vmem:[#allocation5 + $0x640] sm:$0xff]
    %v330 = vld [vmem:[#allocation5 + $0x648] sm:$0xff]
    %v331 = vld [vmem:[#allocation5 + $0x650] sm:$0xff]
    %v332 = vld [vmem:[#allocation5 + $0x658] sm:$0xff]
    %v333 = vld [vmem:[#allocation5 + $0x660] sm:$0xff]
    %v334 = vld [vmem:[#allocation5 + $0x668] sm:$0xff]
    %v335 = vld [vmem:[#allocation5 + $0x670] sm:$0xff]
    %v336 = vld [vmem:[#allocation5 + $0x678] sm:$0xff]
    %v337 = vld [vmem:[#allocation5 + $0x680] sm:$0xff]
    %v338 = vld [vmem:[#allocation5 + $0x688] sm:$0xff]
    %v339 = vld [vmem:[#allocation5 + $0x690] sm:$0xff]
    %v340 = vld [vmem:[#allocation5 + $0x698] sm:$0xff]
    %v341 = vld [vmem:[#allocation5 + $0x6a0] sm:$0xff]
    %v342 = vld [vmem:[#allocation5 + $0x6a8] sm:$0xff]
    %v343 = vld [vmem:[#allocation5 + $0x6b0] sm:$0xff]
    %v344 = vld [vmem:[#allocation5 + $0x6b8] sm:$0xff]
    %v345 = vld [vmem:[#allocation5 + $0x6c0] sm:$0xff]
    %v346 = vld [vmem:[#allocation5 + $0x6c8] sm:$0xff]
    %v347 = vld [vmem:[#allocation5 + $0x6d0] sm:$0xff]
    %v348 = vld [vmem:[#allocation5 + $0x6d8] sm:$0xff]
    %v349 = vld [vmem:[#allocation5 + $0x6e0] sm:$0xff]
    %v350 = vld [vmem:[#allocation5 + $0x6e8] sm:$0xff]
    %v351 = vld [vmem:[#allocation5 + $0x6f0] sm:$0xff]
    %v352 = vld [vmem:[#allocation5 + $0x6f8] sm:$0xff]
    %v353 = vld [vmem:[#allocation5 + $0x700] sm:$0xff]
    %v354 = vld [vmem:[#allocation5 + $0x708] sm:$0xff]
    %v355 = vld [vmem:[#allocation5 + $0x710] sm:$0xff]
    %v356 = vld [vmem:[#allocation5 + $0x718] sm:$0xff]
    %v357 = vld [vmem:[#allocation5 + $0x720] sm:$0xff]
    %v358 = vld [vmem:[#allocation5 + $0x728] sm:$0xff]
    %v359 = vld [vmem:[#allocation5 + $0x730] sm:$0xff]
    %v360 = vld [vmem:[#allocation5 + $0x738] sm:$0xff]
    %v361 = vld [vmem:[#allocation5 + $0x740] sm:$0xff]
    %v362 = vld [vmem:[#allocation5 + $0x748] sm:$0xff]
    %v363 = vld [vmem:[#allocation5 + $0x750] sm:$0xff]
    %v364 = vld [vmem:[#allocation5 + $0x758] sm:$0xff]
    %v365 = vld [vmem:[#allocation5 + $0x760] sm:$0xff]
    %v366 = vld [vmem:[#allocation5 + $0x768] sm:$0xff]
    %v367 = vld [vmem:[#allocation5 + $0x770] sm:$0xff]
    %v368 = vld [vmem:[#allocation5 + $0x778] sm:$0xff]
    %v369 = vld [vmem:[#allocation5 + $0x780] sm:$0xff]
    %v370 = vld [vmem:[#allocation5 + $0x788] sm:$0xff]
    %v371 = vld [vmem:[#allocation5 + $0x790] sm:$0xff]
    %v372 = vld [vmem:[#allocation5 + $0x798] sm:$0xff]
    %v373 = vld [vmem:[#allocation5 + $0x7a0] sm:$0xff]
    %v374 = vld [vmem:[#allocation5 + $0x7a8] sm:$0xff]
    %v375 = vld [vmem:[#allocation5 + $0x7b0] sm:$0xff]
    %v376 = vld [vmem:[#allocation5 + $0x7b8] sm:$0xff]
    %v377 = vld [vmem:[#allocation5 + $0x7c0] sm:$0xff]
    %v378 = vld [vmem:[#allocation5 + $0x7c8] sm:$0xff]
    %v379 = vld [vmem:[#allocation5 + $0x7d0] sm:$0xff]
    %v380 = vld [vmem:[#allocation5 + $0x7d8] sm:$0xff]
    %v381 = vld [vmem:[#allocation5 + $0x7e0] sm:$0xff]
    %v382 = vld [vmem:[#allocation5 + $0x7e8] sm:$0xff]
    %v383 = vld [vmem:[#allocation5 + $0x7f0] sm:$0xff]
    %v384 = vld [vmem:[#allocation5 + $0x7f8] sm:$0xff]
    %v385 = vld [vmem:[#allocation5 + $0x800] sm:$0xff]
    %v386 = vld [vmem:[#allocation5 + $0x808] sm:$0xff]
    %v387 = vld [vmem:[#allocation5 + $0x810] sm:$0xff]
    %v388 = vld [vmem:[#allocation5 + $0x818] sm:$0xff]
    %v389 = vld [vmem:[#allocation5 + $0x820] sm:$0xff]
    %v390 = vld [vmem:[#allocation5 + $0x828] sm:$0xff]
    %v391 = vld [vmem:[#allocation5 + $0x830] sm:$0xff]
    %v392 = vld [vmem:[#allocation5 + $0x838] sm:$0xff]
    %v393 = vld [vmem:[#allocation5 + $0x840] sm:$0xff]
    %v394 = vld [vmem:[#allocation5 + $0x848] sm:$0xff]
    %v395 = vld [vmem:[#allocation5 + $0x850] sm:$0xff]
    %v396 = vld [vmem:[#allocation5 + $0x858] sm:$0xff]
    %v397 = vld [vmem:[#allocation5 + $0x860] sm:$0xff]
    %v398 = vld [vmem:[#allocation5 + $0x868] sm:$0xff]
    %v399 = vld [vmem:[#allocation5 + $0x870] sm:$0xff]
    %v400 = vld [vmem:[#allocation5 + $0x878] sm:$0xff]
    %v401 = vld [vmem:[#allocation5 + $0x880] sm:$0xff]
    %v402 = vld [vmem:[#allocation5 + $0x888] sm:$0xff]
    %v403 = vld [vmem:[#allocation5 + $0x890] sm:$0xff]
    %v404 = vld [vmem:[#allocation5 + $0x898] sm:$0xff]
    %v405 = vld [vmem:[#allocation5 + $0x8a0] sm:$0xff]
    %v406 = vld [vmem:[#allocation5 + $0x8a8] sm:$0xff]
    %v407 = vld [vmem:[#allocation5 + $0x8b0] sm:$0xff]
    %v408 = vld [vmem:[#allocation5 + $0x8b8] sm:$0xff]
    %v409 = vld [vmem:[#allocation5 + $0x8c0] sm:$0xff]
    %v410 = vld [vmem:[#allocation5 + $0x8c8] sm:$0xff]
    %v411 = vld [vmem:[#allocation5 + $0x8d0] sm:$0xff]
    %v412 = vld [vmem:[#allocation5 + $0x8d8] sm:$0xff]
    %v413 = vld [vmem:[#allocation5 + $0x8e0] sm:$0xff]
    %v414 = vld [vmem:[#allocation5 + $0x8e8] sm:$0xff]
    %v415 = vld [vmem:[#allocation5 + $0x8f0] sm:$0xff]
    %v416 = vld [vmem:[#allocation5 + $0x8f8] sm:$0xff]
    %v417 = vld [vmem:[#allocation5 + $0x900] sm:$0xff]
    %v418 = vld [vmem:[#allocation5 + $0x908] sm:$0xff]
    %v419 = vld [vmem:[#allocation5 + $0x910] sm:$0xff]
    %v420 = vld [vmem:[#allocation5 + $0x918] sm:$0xff]
    %v421 = vld [vmem:[#allocation5 + $0x920] sm:$0xff]
    %v422 = vld [vmem:[#allocation5 + $0x928] sm:$0xff]
    %v423 = vld [vmem:[#allocation5 + $0x930] sm:$0xff]
    %v424 = vld [vmem:[#allocation5 + $0x938] sm:$0xff]
    %v425 = vld [vmem:[#allocation5 + $0x940] sm:$0xff]
    %v426 = vld [vmem:[#allocation5 + $0x948] sm:$0xff]
    %v427 = vld [vmem:[#allocation5 + $0x950] sm:$0xff]
    %v428 = vld [vmem:[#allocation5 + $0x958] sm:$0xff]
    %v429 = vld [vmem:[#allocation5 + $0x960] sm:$0xff]
    %v430 = vld [vmem:[#allocation5 + $0x968] sm:$0xff]
    %v431 = vld [vmem:[#allocation5 + $0x970] sm:$0xff]
    %v432 = vld [vmem:[#allocation5 + $0x978] sm:$0xff]
    %v433 = vld [vmem:[#allocation5 + $0x980] sm:$0xff]
    %v434 = vld [vmem:[#allocation5 + $0x988] sm:$0xff]
    %v435 = vld [vmem:[#allocation5 + $0x990] sm:$0xff]
    %v436 = vld [vmem:[#allocation5 + $0x998] sm:$0xff]
    %v437 = vld [vmem:[#allocation5 + $0x9a0] sm:$0xff]
    %v438 = vld [vmem:[#allocation5 + $0x9a8] sm:$0xff]
    %v439 = vld [vmem:[#allocation5 + $0x9b0] sm:$0xff]
    %v440 = vld [vmem:[#allocation5 + $0x9b8] sm:$0xff]
    %v441 = vld [vmem:[#allocation5 + $0x9c0] sm:$0xff]
    %v442 = vld [vmem:[#allocation5 + $0x9c8] sm:$0xff]
    %v443 = vld [vmem:[#allocation5 + $0x9d0] sm:$0xff]
    %v444 = vld [vmem:[#allocation5 + $0x9d8] sm:$0xff]
    %v445 = vld [vmem:[#allocation5 + $0x9e0] sm:$0xff]
    %v446 = vld [vmem:[#allocation5 + $0x9e8] sm:$0xff]
    %v447 = vld [vmem:[#allocation5 + $0x9f0] sm:$0xff]
    %v448 = vld [vmem:[#allocation5 + $0x9f8] sm:$0xff]
    %v449 = vld [vmem:[#allocation5 + $0xa00] sm:$0xff]
    %v450 = vld [vmem:[#allocation5 + $0xa08] sm:$0xff]
    %v451 = vld [vmem:[#allocation5 + $0xa10] sm:$0xff]
    %v452 = vld [vmem:[#allocation5 + $0xa18] sm:$0xff]
    %v453 = vld [vmem:[#allocation5 + $0xa20] sm:$0xff]
    %v454 = vld [vmem:[#allocation5 + $0xa28] sm:$0xff]
    %v455 = vld [vmem:[#allocation5 + $0xa30] sm:$0xff]
    %v456 = vld [vmem:[#allocation5 + $0xa38] sm:$0xff]
    %v457 = vld [vmem:[#allocation5 + $0xa40] sm:$0xff]
    %v458 = vld [vmem:[#allocation5 + $0xa48] sm:$0xff]
    %v459 = vld [vmem:[#allocation5 + $0xa50] sm:$0xff]
    %v460 = vld [vmem:[#allocation5 + $0xa58] sm:$0xff]
    %v461 = vld [vmem:[#allocation5 + $0xa60] sm:$0xff]
    %v462 = vld [vmem:[#allocation5 + $0xa68] sm:$0xff]
    %v463 = vld [vmem:[#allocation5 + $0xa70] sm:$0xff]
    %v464 = vld [vmem:[#allocation5 + $0xa78] sm:$0xff]
    %v465 = vld [vmem:[#allocation5 + $0xa80] sm:$0xff]
    %v466 = vld [vmem:[#allocation5 + $0xa88] sm:$0xff]
    %v467 = vld [vmem:[#allocation5 + $0xa90] sm:$0xff]
    %v468 = vld [vmem:[#allocation5 + $0xa98] sm:$0xff]
    %v469 = vld [vmem:[#allocation5 + $0xaa0] sm:$0xff]
    %v470 = vld [vmem:[#allocation5 + $0xaa8] sm:$0xff]
    %v471 = vld [vmem:[#allocation5 + $0xab0] sm:$0xff]
    %v472 = vld [vmem:[#allocation5 + $0xab8] sm:$0xff]
    %v473 = vld [vmem:[#allocation5 + $0xac0] sm:$0xff]
    %v474 = vld [vmem:[#allocation5 + $0xac8] sm:$0xff]
    %v475 = vld [vmem:[#allocation5 + $0xad0] sm:$0xff]
    %v476 = vld [vmem:[#allocation5 + $0xad8] sm:$0xff]
    %v477 = vld [vmem:[#allocation5 + $0xae0] sm:$0xff]
    %v478 = vld [vmem:[#allocation5 + $0xae8] sm:$0xff]
    %v479 = vld [vmem:[#allocation5 + $0xaf0] sm:$0xff]
    %v480 = vld [vmem:[#allocation5 + $0xaf8] sm:$0xff]
    %v481 = vld [vmem:[#allocation5 + $0xb00] sm:$0xff]
    %v482 = vld [vmem:[#allocation5 + $0xb08] sm:$0xff]
    %v483 = vld [vmem:[#allocation5 + $0xb10] sm:$0xff]
    %v484 = vld [vmem:[#allocation5 + $0xb18] sm:$0xff]
    %v485 = vld [vmem:[#allocation5 + $0xb20] sm:$0xff]
    %v486 = vld [vmem:[#allocation5 + $0xb28] sm:$0xff]
    %v487 = vld [vmem:[#allocation5 + $0xb30] sm:$0xff]
    %v488 = vld [vmem:[#allocation5 + $0xb38] sm:$0xff]
    %v489 = vld [vmem:[#allocation5 + $0xb40] sm:$0xff]
    %v490 = vld [vmem:[#allocation5 + $0xb48] sm:$0xff]
    %v491 = vld [vmem:[#allocation5 + $0xb50] sm:$0xff]
    %v492 = vld [vmem:[#allocation5 + $0xb58] sm:$0xff]
    %v493 = vld [vmem:[#allocation5 + $0xb60] sm:$0xff]
    %v494 = vld [vmem:[#allocation5 + $0xb68] sm:$0xff]
    %v495 = vld [vmem:[#allocation5 + $0xb70] sm:$0xff]
    %v496 = vld [vmem:[#allocation5 + $0xb78] sm:$0xff]
    %v497 = vld [vmem:[#allocation5 + $0xb80] sm:$0xff]
    %v498 = vld [vmem:[#allocation5 + $0xb88] sm:$0xff]
    %v499 = vld [vmem:[#allocation5 + $0xb90] sm:$0xff]
    %v500 = vld [vmem:[#allocation5 + $0xb98] sm:$0xff]
    %v501 = vld [vmem:[#allocation5 + $0xba0] sm:$0xff]
    %v502 = vld [vmem:[#allocation5 + $0xba8] sm:$0xff]
    %v503 = vld [vmem:[#allocation5 + $0xbb0] sm:$0xff]
    %v504 = vld [vmem:[#allocation5 + $0xbb8] sm:$0xff]
    %v505 = vld [vmem:[#allocation5 + $0xbc0] sm:$0xff]
    %v506 = vld [vmem:[#allocation5 + $0xbc8] sm:$0xff]
    %v507 = vld [vmem:[#allocation5 + $0xbd0] sm:$0xff]
    %v508 = vld [vmem:[#allocation5 + $0xbd8] sm:$0xff]
    %v509 = vld [vmem:[#allocation5 + $0xbe0] sm:$0xff]
    %v510 = vld [vmem:[#allocation5 + $0xbe8] sm:$0xff]
    %v511 = vld [vmem:[#allocation5 + $0xbf0] sm:$0xff]
    %v512 = vld [vmem:[#allocation5 + $0xbf8] sm:$0xff]
    %v513 = vld [vmem:[#allocation5 + $0xc00] sm:$0xff]
    %v514 = vld [vmem:[#allocation5 + $0xc08] sm:$0xff]
    %v515 = vld [vmem:[#allocation5 + $0xc10] sm:$0xff]
    %v516 = vld [vmem:[#allocation5 + $0xc18] sm:$0xff]
    %v517 = vld [vmem:[#allocation5 + $0xc20] sm:$0xff]
    %v518 = vld [vmem:[#allocation5 + $0xc28] sm:$0xff]
    %v519 = vld [vmem:[#allocation5 + $0xc30] sm:$0xff]
    %v520 = vld [vmem:[#allocation5 + $0xc38] sm:$0xff]
    %v521 = vld [vmem:[#allocation5 + $0xc40] sm:$0xff]
    %v522 = vld [vmem:[#allocation5 + $0xc48] sm:$0xff]
    %v523 = vld [vmem:[#allocation5 + $0xc50] sm:$0xff]
    %v524 = vld [vmem:[#allocation5 + $0xc58] sm:$0xff]
    %v525 = vld [vmem:[#allocation5 + $0xc60] sm:$0xff]
    %v526 = vld [vmem:[#allocation5 + $0xc68] sm:$0xff]
    %v527 = vld [vmem:[#allocation5 + $0xc70] sm:$0xff]
    %v528 = vld [vmem:[#allocation5 + $0xc78] sm:$0xff]
    %v529 = vld [vmem:[#allocation5 + $0xc80] sm:$0xff]
    %v530 = vld [vmem:[#allocation5 + $0xc88] sm:$0xff]
    %v531 = vld [vmem:[#allocation5 + $0xc90] sm:$0xff]
    %v532 = vld [vmem:[#allocation5 + $0xc98] sm:$0xff]
    %v533 = vld [vmem:[#allocation5 + $0xca0] sm:$0xff]
    %v534 = vld [vmem:[#allocation5 + $0xca8] sm:$0xff]
    %v535 = vld [vmem:[#allocation5 + $0xcb0] sm:$0xff]
    %v536 = vld [vmem:[#allocation5 + $0xcb8] sm:$0xff]
    %v537 = vld [vmem:[#allocation5 + $0xcc0] sm:$0xff]
    %v538 = vld [vmem:[#allocation5 + $0xcc8] sm:$0xff]
    %v539 = vld [vmem:[#allocation5 + $0xcd0] sm:$0xff]
    %v540 = vld [vmem:[#allocation5 + $0xcd8] sm:$0xff]
    %v541 = vld [vmem:[#allocation5 + $0xce0] sm:$0xff]
    %v542 = vld [vmem:[#allocation5 + $0xce8] sm:$0xff]
    %v543 = vld [vmem:[#allocation5 + $0xcf0] sm:$0xff]
    %v544 = vld [vmem:[#allocation5 + $0xcf8] sm:$0xff]
    %v545 = vld [vmem:[#allocation5 + $0xd00] sm:$0xff]
    %v546 = vld [vmem:[#allocation5 + $0xd08] sm:$0xff]
    %v547 = vld [vmem:[#allocation5 + $0xd10] sm:$0xff]
    %v548 = vld [vmem:[#allocation5 + $0xd18] sm:$0xff]
    %v549 = vld [vmem:[#allocation5 + $0xd20] sm:$0xff]
    %v550 = vld [vmem:[#allocation5 + $0xd28] sm:$0xff]
    %v551 = vld [vmem:[#allocation5 + $0xd30] sm:$0xff]
    %v552 = vld [vmem:[#allocation5 + $0xd38] sm:$0xff]
    %v553 = vld [vmem:[#allocation5 + $0xd40] sm:$0xff]
    %v554 = vld [vmem:[#allocation5 + $0xd48] sm:$0xff]
    %v555 = vld [vmem:[#allocation5 + $0xd50] sm:$0xff]
    %v556 = vld [vmem:[#allocation5 + $0xd58] sm:$0xff]
    %v557 = vld [vmem:[#allocation5 + $0xd60] sm:$0xff]
    %v558 = vld [vmem:[#allocation5 + $0xd68] sm:$0xff]
    %v559 = vld [vmem:[#allocation5 + $0xd70] sm:$0xff]
    %v560 = vld [vmem:[#allocation5 + $0xd78] sm:$0xff]
    %v561 = vld [vmem:[#allocation5 + $0xd80] sm:$0xff]
    %v562 = vld [vmem:[#allocation5 + $0xd88] sm:$0xff]
    %v563 = vld [vmem:[#allocation5 + $0xd90] sm:$0xff]
    %v564 = vld [vmem:[#allocation5 + $0xd98] sm:$0xff]
    %v565 = vld [vmem:[#allocation5 + $0xda0] sm:$0xff]
    %v566 = vld [vmem:[#allocation5 + $0xda8] sm:$0xff]
    %v567 = vld [vmem:[#allocation5 + $0xdb0] sm:$0xff]
    %v568 = vld [vmem:[#allocation5 + $0xdb8] sm:$0xff]
    %v569 = vld [vmem:[#allocation5 + $0xdc0] sm:$0xff]
    %v570 = vld [vmem:[#allocation5 + $0xdc8] sm:$0xff]
    %v571 = vld [vmem:[#allocation5 + $0xdd0] sm:$0xff]
    %v572 = vld [vmem:[#allocation5 + $0xdd8] sm:$0xff]
    %v573 = vld [vmem:[#allocation5 + $0xde0] sm:$0xff]
    %v574 = vld [vmem:[#allocation5 + $0xde8] sm:$0xff]
    %v575 = vld [vmem:[#allocation5 + $0xdf0] sm:$0xff]
    %v576 = vld [vmem:[#allocation5 + $0xdf8] sm:$0xff]
    %v577 = vld [vmem:[#allocation5 + $0xe00] sm:$0xff]
    %v578 = vld [vmem:[#allocation5 + $0xe08] sm:$0xff]
    %v579 = vld [vmem:[#allocation5 + $0xe10] sm:$0xff]
    %v580 = vld [vmem:[#allocation5 + $0xe18] sm:$0xff]
    %v581 = vld [vmem:[#allocation5 + $0xe20] sm:$0xff]
    %v582 = vld [vmem:[#allocation5 + $0xe28] sm:$0xff]
    %v583 = vld [vmem:[#allocation5 + $0xe30] sm:$0xff]
    %v584 = vld [vmem:[#allocation5 + $0xe38] sm:$0xff]
    %v585 = vld [vmem:[#allocation5 + $0xe40] sm:$0xff]
    %v586 = vld [vmem:[#allocation5 + $0xe48] sm:$0xff]
    %v587 = vld [vmem:[#allocation5 + $0xe50] sm:$0xff]
    %v588 = vld [vmem:[#allocation5 + $0xe58] sm:$0xff]
    %v589 = vld [vmem:[#allocation5 + $0xe60] sm:$0xff]
    %v590 = vld [vmem:[#allocation5 + $0xe68] sm:$0xff]
    %v591 = vld [vmem:[#allocation5 + $0xe70] sm:$0xff]
    %v592 = vld [vmem:[#allocation5 + $0xe78] sm:$0xff]
    %v593 = vld [vmem:[#allocation5 + $0xe80] sm:$0xff]
    %v594 = vld [vmem:[#allocation5 + $0xe88] sm:$0xff]
    %v595 = vld [vmem:[#allocation5 + $0xe90] sm:$0xff]
    %v596 = vld [vmem:[#allocation5 + $0xe98] sm:$0xff]
    %v597 = vld [vmem:[#allocation5 + $0xea0] sm:$0xff]
    %v598 = vld [vmem:[#allocation5 + $0xea8] sm:$0xff]
    %v599 = vld [vmem:[#allocation5 + $0xeb0] sm:$0xff]
    %v600 = vld [vmem:[#allocation5 + $0xeb8] sm:$0xff]
    %v601 = vld [vmem:[#allocation5 + $0xec0] sm:$0xff]
    %v602 = vld [vmem:[#allocation5 + $0xec8] sm:$0xff]
    %v603 = vld [vmem:[#allocation5 + $0xed0] sm:$0xff]
    %v604 = vld [vmem:[#allocation5 + $0xed8] sm:$0xff]
    %v605 = vld [vmem:[#allocation5 + $0xee0] sm:$0xff]
    %v606 = vld [vmem:[#allocation5 + $0xee8] sm:$0xff]
    %v607 = vld [vmem:[#allocation5 + $0xef0] sm:$0xff]
    %v608 = vld [vmem:[#allocation5 + $0xef8] sm:$0xff]
    %v609 = vld [vmem:[#allocation5 + $0xf00] sm:$0xff]
    %v610 = vld [vmem:[#allocation5 + $0xf08] sm:$0xff]
    %v611 = vld [vmem:[#allocation5 + $0xf10] sm:$0xff]
    %v612 = vld [vmem:[#allocation5 + $0xf18] sm:$0xff]
    %v613 = vld [vmem:[#allocation5 + $0xf20] sm:$0xff]
    %v614 = vld [vmem:[#allocation5 + $0xf28] sm:$0xff]
    %v615 = vld [vmem:[#allocation5 + $0xf30] sm:$0xff]
    %v616 = vld [vmem:[#allocation5 + $0xf38] sm:$0xff]
    %v617 = vld [vmem:[#allocation5 + $0xf40] sm:$0xff]
    %v618 = vld [vmem:[#allocation5 + $0xf48] sm:$0xff]
    %v619 = vld [vmem:[#allocation5 + $0xf50] sm:$0xff]
    %v620 = vld [vmem:[#allocation5 + $0xf58] sm:$0xff]
    %v621 = vld [vmem:[#allocation5 + $0xf60] sm:$0xff]
    %v622 = vld [vmem:[#allocation5 + $0xf68] sm:$0xff]
    %v623 = vld [vmem:[#allocation5 + $0xf70] sm:$0xff]
    %v624 = vld [vmem:[#allocation5 + $0xf78] sm:$0xff]
    %v625 = vld [vmem:[#allocation5 + $0xf80] sm:$0xff]
    %v626 = vld [vmem:[#allocation5 + $0xf88] sm:$0xff]
    %v627 = vld [vmem:[#allocation5 + $0xf90] sm:$0xff]
    %v628 = vld [vmem:[#allocation5 + $0xf98] sm:$0xff]
    %v629 = vld [vmem:[#allocation5 + $0xfa0] sm:$0xff]
    %v630 = vld [vmem:[#allocation5 + $0xfa8] sm:$0xff]
    %v631 = vld [vmem:[#allocation5 + $0xfb0] sm:$0xff]
    %v632 = vld [vmem:[#allocation5 + $0xfb8] sm:$0xff]
    %v633 = vld [vmem:[#allocation5 + $0xfc0] sm:$0xff]
    %v634 = vld [vmem:[#allocation5 + $0xfc8] sm:$0xff]
    %v635 = vld [vmem:[#allocation5 + $0xfd0] sm:$0xff]
    %v636 = vld [vmem:[#allocation5 + $0xfd8] sm:$0xff]
    %v637 = vld [vmem:[#allocation5 + $0xfe0] sm:$0xff]
    %v638 = vld [vmem:[#allocation5 + $0xfe8] sm:$0xff]
    %v639 = vld [vmem:[#allocation5 + $0xff0] sm:$0xff]
    %v640 = vld [vmem:[#allocation5 + $0xff8] sm:$0xff]
    %v641 = vld [vmem:[#allocation7] sm:$0xff]
    %v643 = vperm.slane %v641, 0
    %v644 = vperm.slane %v641, 1
    %v645 = vperm.slane %v641, 2
    %v646 = vperm.slane %v641, 3
    %v647 = vperm.slane %v641, 4
    %v648 = vperm.slane %v641, 5
    %v649 = vperm.slane %v641, 6
    %v650 = vperm.slane %v641, 7
    %660 = vst [vmem:[#allocation1] ss:$9 sm:$0xff] %v128
    %v661 = vld [vmem:[#allocation1] sm:$0xff]
    %v662 = vld [vmem:[#allocation1 + $0x9] sm:$0xff]
    %v663 = vld [vmem:[#allocation1 + $0x12] sm:$0xff]
    %v664 = vld [vmem:[#allocation1 + $0x1b] sm:$0xff]
    %v665 = vld [vmem:[#allocation1 + $0x24] sm:$0xff]
    %v666 = vld [vmem:[#allocation1 + $0x2d] sm:$0xff]
    %v667 = vld [vmem:[#allocation1 + $0x36] sm:$0xff]
    %v668 = vld [vmem:[#allocation1 + $0x3f] sm:$0xff]
    %v1189 = vunpack.c.l.b16 %v129
    %v1190 = vunpack.c.h.b16 %v129
    %v1191 = vunpack.c.l.b16 %v130
    %v1192 = vunpack.c.h.b16 %v130
    %v1193 = vunpack.c.l.b16 %v131
    %v1194 = vunpack.c.h.b16 %v131
    %v1195 = vunpack.c.l.b16 %v132
    %v1196 = vunpack.c.h.b16 %v132
    %v1197 = vunpack.c.l.b16 %v133
    %v1198 = vunpack.c.h.b16 %v133
    %v1199 = vunpack.c.l.b16 %v134
    %v1200 = vunpack.c.h.b16 %v134
    %v1201 = vunpack.c.l.b16 %v135
    %v1202 = vunpack.c.h.b16 %v135
    %v1203 = vunpack.c.l.b16 %v136
    %v1204 = vunpack.c.h.b16 %v136
    %v1205 = vunpack.c.l.b16 %v137
    %v1206 = vunpack.c.h.b16 %v137
    %v1207 = vunpack.c.l.b16 %v138
    %v1208 = vunpack.c.h.b16 %v138
    %v1209 = vunpack.c.l.b16 %v139
    %v1210 = vunpack.c.h.b16 %v139
    %v1211 = vunpack.c.l.b16 %v140
    %v1212 = vunpack.c.h.b16 %v140
    %v1213 = vunpack.c.l.b16 %v141
    %v1214 = vunpack.c.h.b16 %v141
    %v1215 = vunpack.c.l.b16 %v142
    %v1216 = vunpack.c.h.b16 %v142
    %v1217 = vunpack.c.l.b16 %v143
    %v1218 = vunpack.c.h.b16 %v143
    %v1219 = vunpack.c.l.b16 %v144
    %v1220 = vunpack.c.h.b16 %v144
    %v1221 = vunpack.c.l.b16 %v145
    %v1222 = vunpack.c.h.b16 %v145
    %v1223 = vunpack.c.l.b16 %v146
    %v1224 = vunpack.c.h.b16 %v146
    %v1225 = vunpack.c.l.b16 %v147
    %v1226 = vunpack.c.h.b16 %v147
    %v1227 = vunpack.c.l.b16 %v148
    %v1228 = vunpack.c.h.b16 %v148
    %v1229 = vunpack.c.l.b16 %v149
    %v1230 = vunpack.c.h.b16 %v149
    %v1231 = vunpack.c.l.b16 %v150
    %v1232 = vunpack.c.h.b16 %v150
    %v1233 = vunpack.c.l.b16 %v151
    %v1234 = vunpack.c.h.b16 %v151
    %v1235 = vunpack.c.l.b16 %v152
    %v1236 = vunpack.c.h.b16 %v152
    %v1237 = vunpack.c.l.b16 %v153
    %v1238 = vunpack.c.h.b16 %v153
    %v1239 = vunpack.c.l.b16 %v154
    %v1240 = vunpack.c.h.b16 %v154
    %v1241 = vunpack.c.l.b16 %v155
    %v1242 = vunpack.c.h.b16 %v155
    %v1243 = vunpack.c.l.b16 %v156
    %v1244 = vunpack.c.h.b16 %v156
    %v1245 = vunpack.c.l.b16 %v157
    %v1246 = vunpack.c.h.b16 %v157
    %v1247 = vunpack.c.l.b16 %v158
    %v1248 = vunpack.c.h.b16 %v158
    %v1249 = vunpack.c.l.b16 %v159
    %v1250 = vunpack.c.h.b16 %v159
    %v1251 = vunpack.c.l.b16 %v160
    %v1252 = vunpack.c.h.b16 %v160
    %v1253 = vunpack.c.l.b16 %v161
    %v1254 = vunpack.c.h.b16 %v161
    %v1255 = vunpack.c.l.b16 %v162
    %v1256 = vunpack.c.h.b16 %v162
    %v1257 = vunpack.c.l.b16 %v163
    %v1258 = vunpack.c.h.b16 %v163
    %v1259 = vunpack.c.l.b16 %v164
    %v1260 = vunpack.c.h.b16 %v164
    %v1261 = vunpack.c.l.b16 %v165
    %v1262 = vunpack.c.h.b16 %v165
    %v1263 = vunpack.c.l.b16 %v166
    %v1264 = vunpack.c.h.b16 %v166
    %v1265 = vunpack.c.l.b16 %v167
    %v1266 = vunpack.c.h.b16 %v167
    %v1267 = vunpack.c.l.b16 %v168
    %v1268 = vunpack.c.h.b16 %v168
    %v1269 = vunpack.c.l.b16 %v169
    %v1270 = vunpack.c.h.b16 %v169
    %v1271 = vunpack.c.l.b16 %v170
    %v1272 = vunpack.c.h.b16 %v170
    %v1273 = vunpack.c.l.b16 %v171
    %v1274 = vunpack.c.h.b16 %v171
    %v1275 = vunpack.c.l.b16 %v172
    %v1276 = vunpack.c.h.b16 %v172
    %v1277 = vunpack.c.l.b16 %v173
    %v1278 = vunpack.c.h.b16 %v173
    %v1279 = vunpack.c.l.b16 %v174
    %v1280 = vunpack.c.h.b16 %v174
    %v1281 = vunpack.c.l.b16 %v175
    %v1282 = vunpack.c.h.b16 %v175
    %v1283 = vunpack.c.l.b16 %v176
    %v1284 = vunpack.c.h.b16 %v176
    %v1285 = vunpack.c.l.b16 %v177
    %v1286 = vunpack.c.h.b16 %v177
    %v1287 = vunpack.c.l.b16 %v178
    %v1288 = vunpack.c.h.b16 %v178
    %v1289 = vunpack.c.l.b16 %v179
    %v1290 = vunpack.c.h.b16 %v179
    %v1291 = vunpack.c.l.b16 %v180
    %v1292 = vunpack.c.h.b16 %v180
    %v1293 = vunpack.c.l.b16 %v181
    %v1294 = vunpack.c.h.b16 %v181
    %v1295 = vunpack.c.l.b16 %v182
    %v1296 = vunpack.c.h.b16 %v182
    %v1297 = vunpack.c.l.b16 %v183
    %v1298 = vunpack.c.h.b16 %v183
    %v1299 = vunpack.c.l.b16 %v184
    %v1300 = vunpack.c.h.b16 %v184
    %v1301 = vunpack.c.l.b16 %v185
    %v1302 = vunpack.c.h.b16 %v185
    %v1303 = vunpack.c.l.b16 %v186
    %v1304 = vunpack.c.h.b16 %v186
    %v1305 = vunpack.c.l.b16 %v187
    %v1306 = vunpack.c.h.b16 %v187
    %v1307 = vunpack.c.l.b16 %v188
    %v1308 = vunpack.c.h.b16 %v188
    %v1309 = vunpack.c.l.b16 %v189
    %v1310 = vunpack.c.h.b16 %v189
    %v1311 = vunpack.c.l.b16 %v190
    %v1312 = vunpack.c.h.b16 %v190
    %v1313 = vunpack.c.l.b16 %v191
    %v1314 = vunpack.c.h.b16 %v191
    %v1315 = vunpack.c.l.b16 %v192
    %v1316 = vunpack.c.h.b16 %v192
    %v1317 = vunpack.c.l.b16 %v193
    %v1318 = vunpack.c.h.b16 %v193
    %v1319 = vunpack.c.l.b16 %v194
    %v1320 = vunpack.c.h.b16 %v194
    %v1321 = vunpack.c.l.b16 %v195
    %v1322 = vunpack.c.h.b16 %v195
    %v1323 = vunpack.c.l.b16 %v196
    %v1324 = vunpack.c.h.b16 %v196
    %v1325 = vunpack.c.l.b16 %v197
    %v1326 = vunpack.c.h.b16 %v197
    %v1327 = vunpack.c.l.b16 %v198
    %v1328 = vunpack.c.h.b16 %v198
    %v1329 = vunpack.c.l.b16 %v199
    %v1330 = vunpack.c.h.b16 %v199
    %v1331 = vunpack.c.l.b16 %v200
    %v1332 = vunpack.c.h.b16 %v200
    %v1333 = vunpack.c.l.b16 %v201
    %v1334 = vunpack.c.h.b16 %v201
    %v1335 = vunpack.c.l.b16 %v202
    %v1336 = vunpack.c.h.b16 %v202
    %v1337 = vunpack.c.l.b16 %v203
    %v1338 = vunpack.c.h.b16 %v203
    %v1339 = vunpack.c.l.b16 %v204
    %v1340 = vunpack.c.h.b16 %v204
    %v1341 = vunpack.c.l.b16 %v205
    %v1342 = vunpack.c.h.b16 %v205
    %v1343 = vunpack.c.l.b16 %v206
    %v1344 = vunpack.c.h.b16 %v206
    %v1345 = vunpack.c.l.b16 %v207
    %v1346 = vunpack.c.h.b16 %v207
    %v1347 = vunpack.c.l.b16 %v208
    %v1348 = vunpack.c.h.b16 %v208
    %v1349 = vunpack.c.l.b16 %v209
    %v1350 = vunpack.c.h.b16 %v209
    %v1351 = vunpack.c.l.b16 %v210
    %v1352 = vunpack.c.h.b16 %v210
    %v1353 = vunpack.c.l.b16 %v211
    %v1354 = vunpack.c.h.b16 %v211
    %v1355 = vunpack.c.l.b16 %v212
    %v1356 = vunpack.c.h.b16 %v212
    %v1357 = vunpack.c.l.b16 %v213
    %v1358 = vunpack.c.h.b16 %v213
    %v1359 = vunpack.c.l.b16 %v214
    %v1360 = vunpack.c.h.b16 %v214
    %v1361 = vunpack.c.l.b16 %v215
    %v1362 = vunpack.c.h.b16 %v215
    %v1363 = vunpack.c.l.b16 %v216
    %v1364 = vunpack.c.h.b16 %v216
    %v1365 = vunpack.c.l.b16 %v217
    %v1366 = vunpack.c.h.b16 %v217
    %v1367 = vunpack.c.l.b16 %v218
    %v1368 = vunpack.c.h.b16 %v218
    %v1369 = vunpack.c.l.b16 %v219
    %v1370 = vunpack.c.h.b16 %v219
    %v1371 = vunpack.c.l.b16 %v220
    %v1372 = vunpack.c.h.b16 %v220
    %v1373 = vunpack.c.l.b16 %v221
    %v1374 = vunpack.c.h.b16 %v221
    %v1375 = vunpack.c.l.b16 %v222
    %v1376 = vunpack.c.h.b16 %v222
    %v1377 = vunpack.c.l.b16 %v223
    %v1378 = vunpack.c.h.b16 %v223
    %v1379 = vunpack.c.l.b16 %v224
    %v1380 = vunpack.c.h.b16 %v224
    %v1381 = vunpack.c.l.b16 %v225
    %v1382 = vunpack.c.h.b16 %v225
    %v1383 = vunpack.c.l.b16 %v226
    %v1384 = vunpack.c.h.b16 %v226
    %v1385 = vunpack.c.l.b16 %v227
    %v1386 = vunpack.c.h.b16 %v227
    %v1387 = vunpack.c.l.b16 %v228
    %v1388 = vunpack.c.h.b16 %v228
    %v1389 = vunpack.c.l.b16 %v229
    %v1390 = vunpack.c.h.b16 %v229
    %v1391 = vunpack.c.l.b16 %v230
    %v1392 = vunpack.c.h.b16 %v230
    %v1393 = vunpack.c.l.b16 %v231
    %v1394 = vunpack.c.h.b16 %v231
    %v1395 = vunpack.c.l.b16 %v232
    %v1396 = vunpack.c.h.b16 %v232
    %v1397 = vunpack.c.l.b16 %v233
    %v1398 = vunpack.c.h.b16 %v233
    %v1399 = vunpack.c.l.b16 %v234
    %v1400 = vunpack.c.h.b16 %v234
    %v1401 = vunpack.c.l.b16 %v235
    %v1402 = vunpack.c.h.b16 %v235
    %v1403 = vunpack.c.l.b16 %v236
    %v1404 = vunpack.c.h.b16 %v236
    %v1405 = vunpack.c.l.b16 %v237
    %v1406 = vunpack.c.h.b16 %v237
    %v1407 = vunpack.c.l.b16 %v238
    %v1408 = vunpack.c.h.b16 %v238
    %v1409 = vunpack.c.l.b16 %v239
    %v1410 = vunpack.c.h.b16 %v239
    %v1411 = vunpack.c.l.b16 %v240
    %v1412 = vunpack.c.h.b16 %v240
    %v1413 = vunpack.c.l.b16 %v241
    %v1414 = vunpack.c.h.b16 %v241
    %v1415 = vunpack.c.l.b16 %v242
    %v1416 = vunpack.c.h.b16 %v242
    %v1417 = vunpack.c.l.b16 %v243
    %v1418 = vunpack.c.h.b16 %v243
    %v1419 = vunpack.c.l.b16 %v244
    %v1420 = vunpack.c.h.b16 %v244
    %v1421 = vunpack.c.l.b16 %v245
    %v1422 = vunpack.c.h.b16 %v245
    %v1423 = vunpack.c.l.b16 %v246
    %v1424 = vunpack.c.h.b16 %v246
    %v1425 = vunpack.c.l.b16 %v247
    %v1426 = vunpack.c.h.b16 %v247
    %v1427 = vunpack.c.l.b16 %v248
    %v1428 = vunpack.c.h.b16 %v248
    %v1429 = vunpack.c.l.b16 %v249
    %v1430 = vunpack.c.h.b16 %v249
    %v1431 = vunpack.c.l.b16 %v250
    %v1432 = vunpack.c.h.b16 %v250
    %v1433 = vunpack.c.l.b16 %v251
    %v1434 = vunpack.c.h.b16 %v251
    %v1435 = vunpack.c.l.b16 %v252
    %v1436 = vunpack.c.h.b16 %v252
    %v1437 = vunpack.c.l.b16 %v253
    %v1438 = vunpack.c.h.b16 %v253
    %v1439 = vunpack.c.l.b16 %v254
    %v1440 = vunpack.c.h.b16 %v254
    %v1441 = vunpack.c.l.b16 %v255
    %v1442 = vunpack.c.h.b16 %v255
    %v1443 = vunpack.c.l.b16 %v256
    %v1444 = vunpack.c.h.b16 %v256
    %v1445 = vunpack.c.l.b16 %v257
    %v1446 = vunpack.c.h.b16 %v257
    %v1447 = vunpack.c.l.b16 %v258
    %v1448 = vunpack.c.h.b16 %v258
    %v1449 = vunpack.c.l.b16 %v259
    %v1450 = vunpack.c.h.b16 %v259
    %v1451 = vunpack.c.l.b16 %v260
    %v1452 = vunpack.c.h.b16 %v260
    %v1453 = vunpack.c.l.b16 %v261
    %v1454 = vunpack.c.h.b16 %v261
    %v1455 = vunpack.c.l.b16 %v262
    %v1456 = vunpack.c.h.b16 %v262
    %v1457 = vunpack.c.l.b16 %v263
    %v1458 = vunpack.c.h.b16 %v263
    %v1459 = vunpack.c.l.b16 %v264
    %v1460 = vunpack.c.h.b16 %v264
    %v1461 = vunpack.c.l.b16 %v265
    %v1462 = vunpack.c.h.b16 %v265
    %v1463 = vunpack.c.l.b16 %v266
    %v1464 = vunpack.c.h.b16 %v266
    %v1465 = vunpack.c.l.b16 %v267
    %v1466 = vunpack.c.h.b16 %v267
    %v1467 = vunpack.c.l.b16 %v268
    %v1468 = vunpack.c.h.b16 %v268
    %v1469 = vunpack.c.l.b16 %v269
    %v1470 = vunpack.c.h.b16 %v269
    %v1471 = vunpack.c.l.b16 %v270
    %v1472 = vunpack.c.h.b16 %v270
    %v1473 = vunpack.c.l.b16 %v271
    %v1474 = vunpack.c.h.b16 %v271
    %v1475 = vunpack.c.l.b16 %v272
    %v1476 = vunpack.c.h.b16 %v272
    %v1477 = vunpack.c.l.b16 %v273
    %v1478 = vunpack.c.h.b16 %v273
    %v1479 = vunpack.c.l.b16 %v274
    %v1480 = vunpack.c.h.b16 %v274
    %v1481 = vunpack.c.l.b16 %v275
    %v1482 = vunpack.c.h.b16 %v275
    %v1483 = vunpack.c.l.b16 %v276
    %v1484 = vunpack.c.h.b16 %v276
    %v1485 = vunpack.c.l.b16 %v277
    %v1486 = vunpack.c.h.b16 %v277
    %v1487 = vunpack.c.l.b16 %v278
    %v1488 = vunpack.c.h.b16 %v278
    %v1489 = vunpack.c.l.b16 %v279
    %v1490 = vunpack.c.h.b16 %v279
    %v1491 = vunpack.c.l.b16 %v280
    %v1492 = vunpack.c.h.b16 %v280
    %v1493 = vunpack.c.l.b16 %v281
    %v1494 = vunpack.c.h.b16 %v281
    %v1495 = vunpack.c.l.b16 %v282
    %v1496 = vunpack.c.h.b16 %v282
    %v1497 = vunpack.c.l.b16 %v283
    %v1498 = vunpack.c.h.b16 %v283
    %v1499 = vunpack.c.l.b16 %v284
    %v1500 = vunpack.c.h.b16 %v284
    %v1501 = vunpack.c.l.b16 %v285
    %v1502 = vunpack.c.h.b16 %v285
    %v1503 = vunpack.c.l.b16 %v286
    %v1504 = vunpack.c.h.b16 %v286
    %v1505 = vunpack.c.l.b16 %v287
    %v1506 = vunpack.c.h.b16 %v287
    %v1507 = vunpack.c.l.b16 %v288
    %v1508 = vunpack.c.h.b16 %v288
    %v1509 = vunpack.c.l.b16 %v289
    %v1510 = vunpack.c.h.b16 %v289
    %v1511 = vunpack.c.l.b16 %v290
    %v1512 = vunpack.c.h.b16 %v290
    %v1513 = vunpack.c.l.b16 %v291
    %v1514 = vunpack.c.h.b16 %v291
    %v1515 = vunpack.c.l.b16 %v292
    %v1516 = vunpack.c.h.b16 %v292
    %v1517 = vunpack.c.l.b16 %v293
    %v1518 = vunpack.c.h.b16 %v293
    %v1519 = vunpack.c.l.b16 %v294
    %v1520 = vunpack.c.h.b16 %v294
    %v1521 = vunpack.c.l.b16 %v295
    %v1522 = vunpack.c.h.b16 %v295
    %v1523 = vunpack.c.l.b16 %v296
    %v1524 = vunpack.c.h.b16 %v296
    %v1525 = vunpack.c.l.b16 %v297
    %v1526 = vunpack.c.h.b16 %v297
    %v1527 = vunpack.c.l.b16 %v298
    %v1528 = vunpack.c.h.b16 %v298
    %v1529 = vunpack.c.l.b16 %v299
    %v1530 = vunpack.c.h.b16 %v299
    %v1531 = vunpack.c.l.b16 %v300
    %v1532 = vunpack.c.h.b16 %v300
    %v1533 = vunpack.c.l.b16 %v301
    %v1534 = vunpack.c.h.b16 %v301
    %v1535 = vunpack.c.l.b16 %v302
    %v1536 = vunpack.c.h.b16 %v302
    %v1537 = vunpack.c.l.b16 %v303
    %v1538 = vunpack.c.h.b16 %v303
    %v1539 = vunpack.c.l.b16 %v304
    %v1540 = vunpack.c.h.b16 %v304
    %v1541 = vunpack.c.l.b16 %v305
    %v1542 = vunpack.c.h.b16 %v305
    %v1543 = vunpack.c.l.b16 %v306
    %v1544 = vunpack.c.h.b16 %v306
    %v1545 = vunpack.c.l.b16 %v307
    %v1546 = vunpack.c.h.b16 %v307
    %v1547 = vunpack.c.l.b16 %v308
    %v1548 = vunpack.c.h.b16 %v308
    %v1549 = vunpack.c.l.b16 %v309
    %v1550 = vunpack.c.h.b16 %v309
    %v1551 = vunpack.c.l.b16 %v310
    %v1552 = vunpack.c.h.b16 %v310
    %v1553 = vunpack.c.l.b16 %v311
    %v1554 = vunpack.c.h.b16 %v311
    %v1555 = vunpack.c.l.b16 %v312
    %v1556 = vunpack.c.h.b16 %v312
    %v1557 = vunpack.c.l.b16 %v313
    %v1558 = vunpack.c.h.b16 %v313
    %v1559 = vunpack.c.l.b16 %v314
    %v1560 = vunpack.c.h.b16 %v314
    %v1561 = vunpack.c.l.b16 %v315
    %v1562 = vunpack.c.h.b16 %v315
    %v1563 = vunpack.c.l.b16 %v316
    %v1564 = vunpack.c.h.b16 %v316
    %v1565 = vunpack.c.l.b16 %v317
    %v1566 = vunpack.c.h.b16 %v317
    %v1567 = vunpack.c.l.b16 %v318
    %v1568 = vunpack.c.h.b16 %v318
    %v1569 = vunpack.c.l.b16 %v319
    %v1570 = vunpack.c.h.b16 %v319
    %v1571 = vunpack.c.l.b16 %v320
    %v1572 = vunpack.c.h.b16 %v320
    %v1573 = vunpack.c.l.b16 %v321
    %v1574 = vunpack.c.h.b16 %v321
    %v1575 = vunpack.c.l.b16 %v322
    %v1576 = vunpack.c.h.b16 %v322
    %v1577 = vunpack.c.l.b16 %v323
    %v1578 = vunpack.c.h.b16 %v323
    %v1579 = vunpack.c.l.b16 %v324
    %v1580 = vunpack.c.h.b16 %v324
    %v1581 = vunpack.c.l.b16 %v325
    %v1582 = vunpack.c.h.b16 %v325
    %v1583 = vunpack.c.l.b16 %v326
    %v1584 = vunpack.c.h.b16 %v326
    %v1585 = vunpack.c.l.b16 %v327
    %v1586 = vunpack.c.h.b16 %v327
    %v1587 = vunpack.c.l.b16 %v328
    %v1588 = vunpack.c.h.b16 %v328
    %v1589 = vunpack.c.l.b16 %v329
    %v1590 = vunpack.c.h.b16 %v329
    %v1591 = vunpack.c.l.b16 %v330
    %v1592 = vunpack.c.h.b16 %v330
    %v1593 = vunpack.c.l.b16 %v331
    %v1594 = vunpack.c.h.b16 %v331
    %v1595 = vunpack.c.l.b16 %v332
    %v1596 = vunpack.c.h.b16 %v332
    %v1597 = vunpack.c.l.b16 %v333
    %v1598 = vunpack.c.h.b16 %v333
    %v1599 = vunpack.c.l.b16 %v334
    %v1600 = vunpack.c.h.b16 %v334
    %v1601 = vunpack.c.l.b16 %v335
    %v1602 = vunpack.c.h.b16 %v335
    %v1603 = vunpack.c.l.b16 %v336
    %v1604 = vunpack.c.h.b16 %v336
    %v1605 = vunpack.c.l.b16 %v337
    %v1606 = vunpack.c.h.b16 %v337
    %v1607 = vunpack.c.l.b16 %v338
    %v1608 = vunpack.c.h.b16 %v338
    %v1609 = vunpack.c.l.b16 %v339
    %v1610 = vunpack.c.h.b16 %v339
    %v1611 = vunpack.c.l.b16 %v340
    %v1612 = vunpack.c.h.b16 %v340
    %v1613 = vunpack.c.l.b16 %v341
    %v1614 = vunpack.c.h.b16 %v341
    %v1615 = vunpack.c.l.b16 %v342
    %v1616 = vunpack.c.h.b16 %v342
    %v1617 = vunpack.c.l.b16 %v343
    %v1618 = vunpack.c.h.b16 %v343
    %v1619 = vunpack.c.l.b16 %v344
    %v1620 = vunpack.c.h.b16 %v344
    %v1621 = vunpack.c.l.b16 %v345
    %v1622 = vunpack.c.h.b16 %v345
    %v1623 = vunpack.c.l.b16 %v346
    %v1624 = vunpack.c.h.b16 %v346
    %v1625 = vunpack.c.l.b16 %v347
    %v1626 = vunpack.c.h.b16 %v347
    %v1627 = vunpack.c.l.b16 %v348
    %v1628 = vunpack.c.h.b16 %v348
    %v1629 = vunpack.c.l.b16 %v349
    %v1630 = vunpack.c.h.b16 %v349
    %v1631 = vunpack.c.l.b16 %v350
    %v1632 = vunpack.c.h.b16 %v350
    %v1633 = vunpack.c.l.b16 %v351
    %v1634 = vunpack.c.h.b16 %v351
    %v1635 = vunpack.c.l.b16 %v352
    %v1636 = vunpack.c.h.b16 %v352
    %v1637 = vunpack.c.l.b16 %v353
    %v1638 = vunpack.c.h.b16 %v353
    %v1639 = vunpack.c.l.b16 %v354
    %v1640 = vunpack.c.h.b16 %v354
    %v1641 = vunpack.c.l.b16 %v355
    %v1642 = vunpack.c.h.b16 %v355
    %v1643 = vunpack.c.l.b16 %v356
    %v1644 = vunpack.c.h.b16 %v356
    %v1645 = vunpack.c.l.b16 %v357
    %v1646 = vunpack.c.h.b16 %v357
    %v1647 = vunpack.c.l.b16 %v358
    %v1648 = vunpack.c.h.b16 %v358
    %v1649 = vunpack.c.l.b16 %v359
    %v1650 = vunpack.c.h.b16 %v359
    %v1651 = vunpack.c.l.b16 %v360
    %v1652 = vunpack.c.h.b16 %v360
    %v1653 = vunpack.c.l.b16 %v361
    %v1654 = vunpack.c.h.b16 %v361
    %v1655 = vunpack.c.l.b16 %v362
    %v1656 = vunpack.c.h.b16 %v362
    %v1657 = vunpack.c.l.b16 %v363
    %v1658 = vunpack.c.h.b16 %v363
    %v1659 = vunpack.c.l.b16 %v364
    %v1660 = vunpack.c.h.b16 %v364
    %v1661 = vunpack.c.l.b16 %v365
    %v1662 = vunpack.c.h.b16 %v365
    %v1663 = vunpack.c.l.b16 %v366
    %v1664 = vunpack.c.h.b16 %v366
    %v1665 = vunpack.c.l.b16 %v367
    %v1666 = vunpack.c.h.b16 %v367
    %v1667 = vunpack.c.l.b16 %v368
    %v1668 = vunpack.c.h.b16 %v368
    %v1669 = vunpack.c.l.b16 %v369
    %v1670 = vunpack.c.h.b16 %v369
    %v1671 = vunpack.c.l.b16 %v370
    %v1672 = vunpack.c.h.b16 %v370
    %v1673 = vunpack.c.l.b16 %v371
    %v1674 = vunpack.c.h.b16 %v371
    %v1675 = vunpack.c.l.b16 %v372
    %v1676 = vunpack.c.h.b16 %v372
    %v1677 = vunpack.c.l.b16 %v373
    %v1678 = vunpack.c.h.b16 %v373
    %v1679 = vunpack.c.l.b16 %v374
    %v1680 = vunpack.c.h.b16 %v374
    %v1681 = vunpack.c.l.b16 %v375
    %v1682 = vunpack.c.h.b16 %v375
    %v1683 = vunpack.c.l.b16 %v376
    %v1684 = vunpack.c.h.b16 %v376
    %v1685 = vunpack.c.l.b16 %v377
    %v1686 = vunpack.c.h.b16 %v377
    %v1687 = vunpack.c.l.b16 %v378
    %v1688 = vunpack.c.h.b16 %v378
    %v1689 = vunpack.c.l.b16 %v379
    %v1690 = vunpack.c.h.b16 %v379
    %v1691 = vunpack.c.l.b16 %v380
    %v1692 = vunpack.c.h.b16 %v380
    %v1693 = vunpack.c.l.b16 %v381
    %v1694 = vunpack.c.h.b16 %v381
    %v1695 = vunpack.c.l.b16 %v382
    %v1696 = vunpack.c.h.b16 %v382
    %v1697 = vunpack.c.l.b16 %v383
    %v1698 = vunpack.c.h.b16 %v383
    %v1699 = vunpack.c.l.b16 %v384
    %v1700 = vunpack.c.h.b16 %v384
    %v1701 = vunpack.c.l.b16 %v385
    %v1702 = vunpack.c.h.b16 %v385
    %v1703 = vunpack.c.l.b16 %v386
    %v1704 = vunpack.c.h.b16 %v386
    %v1705 = vunpack.c.l.b16 %v387
    %v1706 = vunpack.c.h.b16 %v387
    %v1707 = vunpack.c.l.b16 %v388
    %v1708 = vunpack.c.h.b16 %v388
    %v1709 = vunpack.c.l.b16 %v389
    %v1710 = vunpack.c.h.b16 %v389
    %v1711 = vunpack.c.l.b16 %v390
    %v1712 = vunpack.c.h.b16 %v390
    %v1713 = vunpack.c.l.b16 %v391
    %v1714 = vunpack.c.h.b16 %v391
    %v1715 = vunpack.c.l.b16 %v392
    %v1716 = vunpack.c.h.b16 %v392
    %v1717 = vunpack.c.l.b16 %v393
    %v1718 = vunpack.c.h.b16 %v393
    %v1719 = vunpack.c.l.b16 %v394
    %v1720 = vunpack.c.h.b16 %v394
    %v1721 = vunpack.c.l.b16 %v395
    %v1722 = vunpack.c.h.b16 %v395
    %v1723 = vunpack.c.l.b16 %v396
    %v1724 = vunpack.c.h.b16 %v396
    %v1725 = vunpack.c.l.b16 %v397
    %v1726 = vunpack.c.h.b16 %v397
    %v1727 = vunpack.c.l.b16 %v398
    %v1728 = vunpack.c.h.b16 %v398
    %v1729 = vunpack.c.l.b16 %v399
    %v1730 = vunpack.c.h.b16 %v399
    %v1731 = vunpack.c.l.b16 %v400
    %v1732 = vunpack.c.h.b16 %v400
    %v1733 = vunpack.c.l.b16 %v401
    %v1734 = vunpack.c.h.b16 %v401
    %v1735 = vunpack.c.l.b16 %v402
    %v1736 = vunpack.c.h.b16 %v402
    %v1737 = vunpack.c.l.b16 %v403
    %v1738 = vunpack.c.h.b16 %v403
    %v1739 = vunpack.c.l.b16 %v404
    %v1740 = vunpack.c.h.b16 %v404
    %v1741 = vunpack.c.l.b16 %v405
    %v1742 = vunpack.c.h.b16 %v405
    %v1743 = vunpack.c.l.b16 %v406
    %v1744 = vunpack.c.h.b16 %v406
    %v1745 = vunpack.c.l.b16 %v407
    %v1746 = vunpack.c.h.b16 %v407
    %v1747 = vunpack.c.l.b16 %v408
    %v1748 = vunpack.c.h.b16 %v408
    %v1749 = vunpack.c.l.b16 %v409
    %v1750 = vunpack.c.h.b16 %v409
    %v1751 = vunpack.c.l.b16 %v410
    %v1752 = vunpack.c.h.b16 %v410
    %v1753 = vunpack.c.l.b16 %v411
    %v1754 = vunpack.c.h.b16 %v411
    %v1755 = vunpack.c.l.b16 %v412
    %v1756 = vunpack.c.h.b16 %v412
    %v1757 = vunpack.c.l.b16 %v413
    %v1758 = vunpack.c.h.b16 %v413
    %v1759 = vunpack.c.l.b16 %v414
    %v1760 = vunpack.c.h.b16 %v414
    %v1761 = vunpack.c.l.b16 %v415
    %v1762 = vunpack.c.h.b16 %v415
    %v1763 = vunpack.c.l.b16 %v416
    %v1764 = vunpack.c.h.b16 %v416
    %v1765 = vunpack.c.l.b16 %v417
    %v1766 = vunpack.c.h.b16 %v417
    %v1767 = vunpack.c.l.b16 %v418
    %v1768 = vunpack.c.h.b16 %v418
    %v1769 = vunpack.c.l.b16 %v419
    %v1770 = vunpack.c.h.b16 %v419
    %v1771 = vunpack.c.l.b16 %v420
    %v1772 = vunpack.c.h.b16 %v420
    %v1773 = vunpack.c.l.b16 %v421
    %v1774 = vunpack.c.h.b16 %v421
    %v1775 = vunpack.c.l.b16 %v422
    %v1776 = vunpack.c.h.b16 %v422
    %v1777 = vunpack.c.l.b16 %v423
    %v1778 = vunpack.c.h.b16 %v423
    %v1779 = vunpack.c.l.b16 %v424
    %v1780 = vunpack.c.h.b16 %v424
    %v1781 = vunpack.c.l.b16 %v425
    %v1782 = vunpack.c.h.b16 %v425
    %v1783 = vunpack.c.l.b16 %v426
    %v1784 = vunpack.c.h.b16 %v426
    %v1785 = vunpack.c.l.b16 %v427
    %v1786 = vunpack.c.h.b16 %v427
    %v1787 = vunpack.c.l.b16 %v428
    %v1788 = vunpack.c.h.b16 %v428
    %v1789 = vunpack.c.l.b16 %v429
    %v1790 = vunpack.c.h.b16 %v429
    %v1791 = vunpack.c.l.b16 %v430
    %v1792 = vunpack.c.h.b16 %v430
    %v1793 = vunpack.c.l.b16 %v431
    %v1794 = vunpack.c.h.b16 %v431
    %v1795 = vunpack.c.l.b16 %v432
    %v1796 = vunpack.c.h.b16 %v432
    %v1797 = vunpack.c.l.b16 %v433
    %v1798 = vunpack.c.h.b16 %v433
    %v1799 = vunpack.c.l.b16 %v434
    %v1800 = vunpack.c.h.b16 %v434
    %v1801 = vunpack.c.l.b16 %v435
    %v1802 = vunpack.c.h.b16 %v435
    %v1803 = vunpack.c.l.b16 %v436
    %v1804 = vunpack.c.h.b16 %v436
    %v1805 = vunpack.c.l.b16 %v437
    %v1806 = vunpack.c.h.b16 %v437
    %v1807 = vunpack.c.l.b16 %v438
    %v1808 = vunpack.c.h.b16 %v438
    %v1809 = vunpack.c.l.b16 %v439
    %v1810 = vunpack.c.h.b16 %v439
    %v1811 = vunpack.c.l.b16 %v440
    %v1812 = vunpack.c.h.b16 %v440
    %v1813 = vunpack.c.l.b16 %v441
    %v1814 = vunpack.c.h.b16 %v441
    %v1815 = vunpack.c.l.b16 %v442
    %v1816 = vunpack.c.h.b16 %v442
    %v1817 = vunpack.c.l.b16 %v443
    %v1818 = vunpack.c.h.b16 %v443
    %v1819 = vunpack.c.l.b16 %v444
    %v1820 = vunpack.c.h.b16 %v444
    %v1821 = vunpack.c.l.b16 %v445
    %v1822 = vunpack.c.h.b16 %v445
    %v1823 = vunpack.c.l.b16 %v446
    %v1824 = vunpack.c.h.b16 %v446
    %v1825 = vunpack.c.l.b16 %v447
    %v1826 = vunpack.c.h.b16 %v447
    %v1827 = vunpack.c.l.b16 %v448
    %v1828 = vunpack.c.h.b16 %v448
    %v1829 = vunpack.c.l.b16 %v449
    %v1830 = vunpack.c.h.b16 %v449
    %v1831 = vunpack.c.l.b16 %v450
    %v1832 = vunpack.c.h.b16 %v450
    %v1833 = vunpack.c.l.b16 %v451
    %v1834 = vunpack.c.h.b16 %v451
    %v1835 = vunpack.c.l.b16 %v452
    %v1836 = vunpack.c.h.b16 %v452
    %v1837 = vunpack.c.l.b16 %v453
    %v1838 = vunpack.c.h.b16 %v453
    %v1839 = vunpack.c.l.b16 %v454
    %v1840 = vunpack.c.h.b16 %v454
    %v1841 = vunpack.c.l.b16 %v455
    %v1842 = vunpack.c.h.b16 %v455
    %v1843 = vunpack.c.l.b16 %v456
    %v1844 = vunpack.c.h.b16 %v456
    %v1845 = vunpack.c.l.b16 %v457
    %v1846 = vunpack.c.h.b16 %v457
    %v1847 = vunpack.c.l.b16 %v458
    %v1848 = vunpack.c.h.b16 %v458
    %v1849 = vunpack.c.l.b16 %v459
    %v1850 = vunpack.c.h.b16 %v459
    %v1851 = vunpack.c.l.b16 %v460
    %v1852 = vunpack.c.h.b16 %v460
    %v1853 = vunpack.c.l.b16 %v461
    %v1854 = vunpack.c.h.b16 %v461
    %v1855 = vunpack.c.l.b16 %v462
    %v1856 = vunpack.c.h.b16 %v462
    %v1857 = vunpack.c.l.b16 %v463
    %v1858 = vunpack.c.h.b16 %v463
    %v1859 = vunpack.c.l.b16 %v464
    %v1860 = vunpack.c.h.b16 %v464
    %v1861 = vunpack.c.l.b16 %v465
    %v1862 = vunpack.c.h.b16 %v465
    %v1863 = vunpack.c.l.b16 %v466
    %v1864 = vunpack.c.h.b16 %v466
    %v1865 = vunpack.c.l.b16 %v467
    %v1866 = vunpack.c.h.b16 %v467
    %v1867 = vunpack.c.l.b16 %v468
    %v1868 = vunpack.c.h.b16 %v468
    %v1869 = vunpack.c.l.b16 %v469
    %v1870 = vunpack.c.h.b16 %v469
    %v1871 = vunpack.c.l.b16 %v470
    %v1872 = vunpack.c.h.b16 %v470
    %v1873 = vunpack.c.l.b16 %v471
    %v1874 = vunpack.c.h.b16 %v471
    %v1875 = vunpack.c.l.b16 %v472
    %v1876 = vunpack.c.h.b16 %v472
    %v1877 = vunpack.c.l.b16 %v473
    %v1878 = vunpack.c.h.b16 %v473
    %v1879 = vunpack.c.l.b16 %v474
    %v1880 = vunpack.c.h.b16 %v474
    %v1881 = vunpack.c.l.b16 %v475
    %v1882 = vunpack.c.h.b16 %v475
    %v1883 = vunpack.c.l.b16 %v476
    %v1884 = vunpack.c.h.b16 %v476
    %v1885 = vunpack.c.l.b16 %v477
    %v1886 = vunpack.c.h.b16 %v477
    %v1887 = vunpack.c.l.b16 %v478
    %v1888 = vunpack.c.h.b16 %v478
    %v1889 = vunpack.c.l.b16 %v479
    %v1890 = vunpack.c.h.b16 %v479
    %v1891 = vunpack.c.l.b16 %v480
    %v1892 = vunpack.c.h.b16 %v480
    %v1893 = vunpack.c.l.b16 %v481
    %v1894 = vunpack.c.h.b16 %v481
    %v1895 = vunpack.c.l.b16 %v482
    %v1896 = vunpack.c.h.b16 %v482
    %v1897 = vunpack.c.l.b16 %v483
    %v1898 = vunpack.c.h.b16 %v483
    %v1899 = vunpack.c.l.b16 %v484
    %v1900 = vunpack.c.h.b16 %v484
    %v1901 = vunpack.c.l.b16 %v485
    %v1902 = vunpack.c.h.b16 %v485
    %v1903 = vunpack.c.l.b16 %v486
    %v1904 = vunpack.c.h.b16 %v486
    %v1905 = vunpack.c.l.b16 %v487
    %v1906 = vunpack.c.h.b16 %v487
    %v1907 = vunpack.c.l.b16 %v488
    %v1908 = vunpack.c.h.b16 %v488
    %v1909 = vunpack.c.l.b16 %v489
    %v1910 = vunpack.c.h.b16 %v489
    %v1911 = vunpack.c.l.b16 %v490
    %v1912 = vunpack.c.h.b16 %v490
    %v1913 = vunpack.c.l.b16 %v491
    %v1914 = vunpack.c.h.b16 %v491
    %v1915 = vunpack.c.l.b16 %v492
    %v1916 = vunpack.c.h.b16 %v492
    %v1917 = vunpack.c.l.b16 %v493
    %v1918 = vunpack.c.h.b16 %v493
    %v1919 = vunpack.c.l.b16 %v494
    %v1920 = vunpack.c.h.b16 %v494
    %v1921 = vunpack.c.l.b16 %v495
    %v1922 = vunpack.c.h.b16 %v495
    %v1923 = vunpack.c.l.b16 %v496
    %v1924 = vunpack.c.h.b16 %v496
    %v1925 = vunpack.c.l.b16 %v497
    %v1926 = vunpack.c.h.b16 %v497
    %v1927 = vunpack.c.l.b16 %v498
    %v1928 = vunpack.c.h.b16 %v498
    %v1929 = vunpack.c.l.b16 %v499
    %v1930 = vunpack.c.h.b16 %v499
    %v1931 = vunpack.c.l.b16 %v500
    %v1932 = vunpack.c.h.b16 %v500
    %v1933 = vunpack.c.l.b16 %v501
    %v1934 = vunpack.c.h.b16 %v501
    %v1935 = vunpack.c.l.b16 %v502
    %v1936 = vunpack.c.h.b16 %v502
    %v1937 = vunpack.c.l.b16 %v503
    %v1938 = vunpack.c.h.b16 %v503
    %v1939 = vunpack.c.l.b16 %v504
    %v1940 = vunpack.c.h.b16 %v504
    %v1941 = vunpack.c.l.b16 %v505
    %v1942 = vunpack.c.h.b16 %v505
    %v1943 = vunpack.c.l.b16 %v506
    %v1944 = vunpack.c.h.b16 %v506
    %v1945 = vunpack.c.l.b16 %v507
    %v1946 = vunpack.c.h.b16 %v507
    %v1947 = vunpack.c.l.b16 %v508
    %v1948 = vunpack.c.h.b16 %v508
    %v1949 = vunpack.c.l.b16 %v509
    %v1950 = vunpack.c.h.b16 %v509
    %v1951 = vunpack.c.l.b16 %v510
    %v1952 = vunpack.c.h.b16 %v510
    %v1953 = vunpack.c.l.b16 %v511
    %v1954 = vunpack.c.h.b16 %v511
    %v1955 = vunpack.c.l.b16 %v512
    %v1956 = vunpack.c.h.b16 %v512
    %v1957 = vunpack.c.l.b16 %v513
    %v1958 = vunpack.c.h.b16 %v513
    %v1959 = vunpack.c.l.b16 %v514
    %v1960 = vunpack.c.h.b16 %v514
    %v1961 = vunpack.c.l.b16 %v515
    %v1962 = vunpack.c.h.b16 %v515
    %v1963 = vunpack.c.l.b16 %v516
    %v1964 = vunpack.c.h.b16 %v516
    %v1965 = vunpack.c.l.b16 %v517
    %v1966 = vunpack.c.h.b16 %v517
    %v1967 = vunpack.c.l.b16 %v518
    %v1968 = vunpack.c.h.b16 %v518
    %v1969 = vunpack.c.l.b16 %v519
    %v1970 = vunpack.c.h.b16 %v519
    %v1971 = vunpack.c.l.b16 %v520
    %v1972 = vunpack.c.h.b16 %v520
    %v1973 = vunpack.c.l.b16 %v521
    %v1974 = vunpack.c.h.b16 %v521
    %v1975 = vunpack.c.l.b16 %v522
    %v1976 = vunpack.c.h.b16 %v522
    %v1977 = vunpack.c.l.b16 %v523
    %v1978 = vunpack.c.h.b16 %v523
    %v1979 = vunpack.c.l.b16 %v524
    %v1980 = vunpack.c.h.b16 %v524
    %v1981 = vunpack.c.l.b16 %v525
    %v1982 = vunpack.c.h.b16 %v525
    %v1983 = vunpack.c.l.b16 %v526
    %v1984 = vunpack.c.h.b16 %v526
    %v1985 = vunpack.c.l.b16 %v527
    %v1986 = vunpack.c.h.b16 %v527
    %v1987 = vunpack.c.l.b16 %v528
    %v1988 = vunpack.c.h.b16 %v528
    %v1989 = vunpack.c.l.b16 %v529
    %v1990 = vunpack.c.h.b16 %v529
    %v1991 = vunpack.c.l.b16 %v530
    %v1992 = vunpack.c.h.b16 %v530
    %v1993 = vunpack.c.l.b16 %v531
    %v1994 = vunpack.c.h.b16 %v531
    %v1995 = vunpack.c.l.b16 %v532
    %v1996 = vunpack.c.h.b16 %v532
    %v1997 = vunpack.c.l.b16 %v533
    %v1998 = vunpack.c.h.b16 %v533
    %v1999 = vunpack.c.l.b16 %v534
    %v2000 = vunpack.c.h.b16 %v534
    %v2001 = vunpack.c.l.b16 %v535
    %v2002 = vunpack.c.h.b16 %v535
    %v2003 = vunpack.c.l.b16 %v536
    %v2004 = vunpack.c.h.b16 %v536
    %v2005 = vunpack.c.l.b16 %v537
    %v2006 = vunpack.c.h.b16 %v537
    %v2007 = vunpack.c.l.b16 %v538
    %v2008 = vunpack.c.h.b16 %v538
    %v2009 = vunpack.c.l.b16 %v539
    %v2010 = vunpack.c.h.b16 %v539
    %v2011 = vunpack.c.l.b16 %v540
    %v2012 = vunpack.c.h.b16 %v540
    %v2013 = vunpack.c.l.b16 %v541
    %v2014 = vunpack.c.h.b16 %v541
    %v2015 = vunpack.c.l.b16 %v542
    %v2016 = vunpack.c.h.b16 %v542
    %v2017 = vunpack.c.l.b16 %v543
    %v2018 = vunpack.c.h.b16 %v543
    %v2019 = vunpack.c.l.b16 %v544
    %v2020 = vunpack.c.h.b16 %v544
    %v2021 = vunpack.c.l.b16 %v545
    %v2022 = vunpack.c.h.b16 %v545
    %v2023 = vunpack.c.l.b16 %v546
    %v2024 = vunpack.c.h.b16 %v546
    %v2025 = vunpack.c.l.b16 %v547
    %v2026 = vunpack.c.h.b16 %v547
    %v2027 = vunpack.c.l.b16 %v548
    %v2028 = vunpack.c.h.b16 %v548
    %v2029 = vunpack.c.l.b16 %v549
    %v2030 = vunpack.c.h.b16 %v549
    %v2031 = vunpack.c.l.b16 %v550
    %v2032 = vunpack.c.h.b16 %v550
    %v2033 = vunpack.c.l.b16 %v551
    %v2034 = vunpack.c.h.b16 %v551
    %v2035 = vunpack.c.l.b16 %v552
    %v2036 = vunpack.c.h.b16 %v552
    %v2037 = vunpack.c.l.b16 %v553
    %v2038 = vunpack.c.h.b16 %v553
    %v2039 = vunpack.c.l.b16 %v554
    %v2040 = vunpack.c.h.b16 %v554
    %v2041 = vunpack.c.l.b16 %v555
    %v2042 = vunpack.c.h.b16 %v555
    %v2043 = vunpack.c.l.b16 %v556
    %v2044 = vunpack.c.h.b16 %v556
    %v2045 = vunpack.c.l.b16 %v557
    %v2046 = vunpack.c.h.b16 %v557
    %v2047 = vunpack.c.l.b16 %v558
    %v2048 = vunpack.c.h.b16 %v558
    %v2049 = vunpack.c.l.b16 %v559
    %v2050 = vunpack.c.h.b16 %v559
    %v2051 = vunpack.c.l.b16 %v560
    %v2052 = vunpack.c.h.b16 %v560
    %v2053 = vunpack.c.l.b16 %v561
    %v2054 = vunpack.c.h.b16 %v561
    %v2055 = vunpack.c.l.b16 %v562
    %v2056 = vunpack.c.h.b16 %v562
    %v2057 = vunpack.c.l.b16 %v563
    %v2058 = vunpack.c.h.b16 %v563
    %v2059 = vunpack.c.l.b16 %v564
    %v2060 = vunpack.c.h.b16 %v564
    %v2061 = vunpack.c.l.b16 %v565
    %v2062 = vunpack.c.h.b16 %v565
    %v2063 = vunpack.c.l.b16 %v566
    %v2064 = vunpack.c.h.b16 %v566
    %v2065 = vunpack.c.l.b16 %v567
    %v2066 = vunpack.c.h.b16 %v567
    %v2067 = vunpack.c.l.b16 %v568
    %v2068 = vunpack.c.h.b16 %v568
    %v2069 = vunpack.c.l.b16 %v569
    %v2070 = vunpack.c.h.b16 %v569
    %v2071 = vunpack.c.l.b16 %v570
    %v2072 = vunpack.c.h.b16 %v570
    %v2073 = vunpack.c.l.b16 %v571
    %v2074 = vunpack.c.h.b16 %v571
    %v2075 = vunpack.c.l.b16 %v572
    %v2076 = vunpack.c.h.b16 %v572
    %v2077 = vunpack.c.l.b16 %v573
    %v2078 = vunpack.c.h.b16 %v573
    %v2079 = vunpack.c.l.b16 %v574
    %v2080 = vunpack.c.h.b16 %v574
    %v2081 = vunpack.c.l.b16 %v575
    %v2082 = vunpack.c.h.b16 %v575
    %v2083 = vunpack.c.l.b16 %v576
    %v2084 = vunpack.c.h.b16 %v576
    %v2085 = vunpack.c.l.b16 %v577
    %v2086 = vunpack.c.h.b16 %v577
    %v2087 = vunpack.c.l.b16 %v578
    %v2088 = vunpack.c.h.b16 %v578
    %v2089 = vunpack.c.l.b16 %v579
    %v2090 = vunpack.c.h.b16 %v579
    %v2091 = vunpack.c.l.b16 %v580
    %v2092 = vunpack.c.h.b16 %v580
    %v2093 = vunpack.c.l.b16 %v581
    %v2094 = vunpack.c.h.b16 %v581
    %v2095 = vunpack.c.l.b16 %v582
    %v2096 = vunpack.c.h.b16 %v582
    %v2097 = vunpack.c.l.b16 %v583
    %v2098 = vunpack.c.h.b16 %v583
    %v2099 = vunpack.c.l.b16 %v584
    %v2100 = vunpack.c.h.b16 %v584
    %v2101 = vunpack.c.l.b16 %v585
    %v2102 = vunpack.c.h.b16 %v585
    %v2103 = vunpack.c.l.b16 %v586
    %v2104 = vunpack.c.h.b16 %v586
    %v2105 = vunpack.c.l.b16 %v587
    %v2106 = vunpack.c.h.b16 %v587
    %v2107 = vunpack.c.l.b16 %v588
    %v2108 = vunpack.c.h.b16 %v588
    %v2109 = vunpack.c.l.b16 %v589
    %v2110 = vunpack.c.h.b16 %v589
    %v2111 = vunpack.c.l.b16 %v590
    %v2112 = vunpack.c.h.b16 %v590
    %v2113 = vunpack.c.l.b16 %v591
    %v2114 = vunpack.c.h.b16 %v591
    %v2115 = vunpack.c.l.b16 %v592
    %v2116 = vunpack.c.h.b16 %v592
    %v2117 = vunpack.c.l.b16 %v593
    %v2118 = vunpack.c.h.b16 %v593
    %v2119 = vunpack.c.l.b16 %v594
    %v2120 = vunpack.c.h.b16 %v594
    %v2121 = vunpack.c.l.b16 %v595
    %v2122 = vunpack.c.h.b16 %v595
    %v2123 = vunpack.c.l.b16 %v596
    %v2124 = vunpack.c.h.b16 %v596
    %v2125 = vunpack.c.l.b16 %v597
    %v2126 = vunpack.c.h.b16 %v597
    %v2127 = vunpack.c.l.b16 %v598
    %v2128 = vunpack.c.h.b16 %v598
    %v2129 = vunpack.c.l.b16 %v599
    %v2130 = vunpack.c.h.b16 %v599
    %v2131 = vunpack.c.l.b16 %v600
    %v2132 = vunpack.c.h.b16 %v600
    %v2133 = vunpack.c.l.b16 %v601
    %v2134 = vunpack.c.h.b16 %v601
    %v2135 = vunpack.c.l.b16 %v602
    %v2136 = vunpack.c.h.b16 %v602
    %v2137 = vunpack.c.l.b16 %v603
    %v2138 = vunpack.c.h.b16 %v603
    %v2139 = vunpack.c.l.b16 %v604
    %v2140 = vunpack.c.h.b16 %v604
    %v2141 = vunpack.c.l.b16 %v605
    %v2142 = vunpack.c.h.b16 %v605
    %v2143 = vunpack.c.l.b16 %v606
    %v2144 = vunpack.c.h.b16 %v606
    %v2145 = vunpack.c.l.b16 %v607
    %v2146 = vunpack.c.h.b16 %v607
    %v2147 = vunpack.c.l.b16 %v608
    %v2148 = vunpack.c.h.b16 %v608
    %v2149 = vunpack.c.l.b16 %v609
    %v2150 = vunpack.c.h.b16 %v609
    %v2151 = vunpack.c.l.b16 %v610
    %v2152 = vunpack.c.h.b16 %v610
    %v2153 = vunpack.c.l.b16 %v611
    %v2154 = vunpack.c.h.b16 %v611
    %v2155 = vunpack.c.l.b16 %v612
    %v2156 = vunpack.c.h.b16 %v612
    %v2157 = vunpack.c.l.b16 %v613
    %v2158 = vunpack.c.h.b16 %v613
    %v2159 = vunpack.c.l.b16 %v614
    %v2160 = vunpack.c.h.b16 %v614
    %v2161 = vunpack.c.l.b16 %v615
    %v2162 = vunpack.c.h.b16 %v615
    %v2163 = vunpack.c.l.b16 %v616
    %v2164 = vunpack.c.h.b16 %v616
    %v2165 = vunpack.c.l.b16 %v617
    %v2166 = vunpack.c.h.b16 %v617
    %v2167 = vunpack.c.l.b16 %v618
    %v2168 = vunpack.c.h.b16 %v618
    %v2169 = vunpack.c.l.b16 %v619
    %v2170 = vunpack.c.h.b16 %v619
    %v2171 = vunpack.c.l.b16 %v620
    %v2172 = vunpack.c.h.b16 %v620
    %v2173 = vunpack.c.l.b16 %v621
    %v2174 = vunpack.c.h.b16 %v621
    %v2175 = vunpack.c.l.b16 %v622
    %v2176 = vunpack.c.h.b16 %v622
    %v2177 = vunpack.c.l.b16 %v623
    %v2178 = vunpack.c.h.b16 %v623
    %v2179 = vunpack.c.l.b16 %v624
    %v2180 = vunpack.c.h.b16 %v624
    %v2181 = vunpack.c.l.b16 %v625
    %v2182 = vunpack.c.h.b16 %v625
    %v2183 = vunpack.c.l.b16 %v626
    %v2184 = vunpack.c.h.b16 %v626
    %v2185 = vunpack.c.l.b16 %v627
    %v2186 = vunpack.c.h.b16 %v627
    %v2187 = vunpack.c.l.b16 %v628
    %v2188 = vunpack.c.h.b16 %v628
    %v2189 = vunpack.c.l.b16 %v629
    %v2190 = vunpack.c.h.b16 %v629
    %v2191 = vunpack.c.l.b16 %v630
    %v2192 = vunpack.c.h.b16 %v630
    %v2193 = vunpack.c.l.b16 %v631
    %v2194 = vunpack.c.h.b16 %v631
    %v2195 = vunpack.c.l.b16 %v632
    %v2196 = vunpack.c.h.b16 %v632
    %v2197 = vunpack.c.l.b16 %v633
    %v2198 = vunpack.c.h.b16 %v633
    %v2199 = vunpack.c.l.b16 %v634
    %v2200 = vunpack.c.h.b16 %v634
    %v2201 = vunpack.c.l.b16 %v635
    %v2202 = vunpack.c.h.b16 %v635
    %v2203 = vunpack.c.l.b16 %v636
    %v2204 = vunpack.c.h.b16 %v636
    %v2205 = vunpack.c.l.b16 %v637
    %v2206 = vunpack.c.h.b16 %v637
    %v2207 = vunpack.c.l.b16 %v638
    %v2208 = vunpack.c.h.b16 %v638
    %v2209 = vunpack.c.l.b16 %v639
    %v2210 = vunpack.c.h.b16 %v639
    %v2211 = vunpack.c.l.b16 %v640
    %v2212 = vunpack.c.h.b16 %v640
    %v2213 = vpack.c.b16 %v1197, %v1189
    %v2214 = vpack.c.b16 %v1198, %v1190
    %v2215 = vpack.c.b16 %v1199, %v1191
    %v2216 = vpack.c.b16 %v1200, %v1192
    %v2217 = vpack.c.b16 %v1201, %v1193
    %v2218 = vpack.c.b16 %v1202, %v1194
    %v2219 = vpack.c.b16 %v1203, %v1195
    %v2220 = vpack.c.b16 %v1204, %v1196
    %v2221 = vpack.c.b16 %v1213, %v1205
    %v2222 = vpack.c.b16 %v1214, %v1206
    %v2223 = vpack.c.b16 %v1215, %v1207
    %v2224 = vpack.c.b16 %v1216, %v1208
    %v2225 = vpack.c.b16 %v1217, %v1209
    %v2226 = vpack.c.b16 %v1218, %v1210
    %v2227 = vpack.c.b16 %v1219, %v1211
    %v2228 = vpack.c.b16 %v1220, %v1212
    %v2229 = vpack.c.b16 %v1229, %v1221
    %v2230 = vpack.c.b16 %v1230, %v1222
    %v2231 = vpack.c.b16 %v1231, %v1223
    %v2232 = vpack.c.b16 %v1232, %v1224
    %v2233 = vpack.c.b16 %v1233, %v1225
    %v2234 = vpack.c.b16 %v1234, %v1226
    %v2235 = vpack.c.b16 %v1235, %v1227
    %v2236 = vpack.c.b16 %v1236, %v1228
    %v2237 = vpack.c.b16 %v1245, %v1237
    %v2238 = vpack.c.b16 %v1246, %v1238
    %v2239 = vpack.c.b16 %v1247, %v1239
    %v2240 = vpack.c.b16 %v1248, %v1240
    %v2241 = vpack.c.b16 %v1249, %v1241
    %v2242 = vpack.c.b16 %v1250, %v1242
    %v2243 = vpack.c.b16 %v1251, %v1243
    %v2244 = vpack.c.b16 %v1252, %v1244
    %v2245 = vpack.c.b16 %v1261, %v1253
    %v2246 = vpack.c.b16 %v1262, %v1254
    %v2247 = vpack.c.b16 %v1263, %v1255
    %v2248 = vpack.c.b16 %v1264, %v1256
    %v2249 = vpack.c.b16 %v1265, %v1257
    %v2250 = vpack.c.b16 %v1266, %v1258
    %v2251 = vpack.c.b16 %v1267, %v1259
    %v2252 = vpack.c.b16 %v1268, %v1260
    %v2253 = vpack.c.b16 %v1277, %v1269
    %v2254 = vpack.c.b16 %v1278, %v1270
    %v2255 = vpack.c.b16 %v1279, %v1271
    %v2256 = vpack.c.b16 %v1280, %v1272
    %v2257 = vpack.c.b16 %v1281, %v1273
    %v2258 = vpack.c.b16 %v1282, %v1274
    %v2259 = vpack.c.b16 %v1283, %v1275
    %v2260 = vpack.c.b16 %v1284, %v1276
    %v2261 = vpack.c.b16 %v1293, %v1285
    %v2262 = vpack.c.b16 %v1294, %v1286
    %v2263 = vpack.c.b16 %v1295, %v1287
    %v2264 = vpack.c.b16 %v1296, %v1288
    %v2265 = vpack.c.b16 %v1297, %v1289
    %v2266 = vpack.c.b16 %v1298, %v1290
    %v2267 = vpack.c.b16 %v1299, %v1291
    %v2268 = vpack.c.b16 %v1300, %v1292
    %v2269 = vpack.c.b16 %v1309, %v1301
    %v2270 = vpack.c.b16 %v1310, %v1302
    %v2271 = vpack.c.b16 %v1311, %v1303
    %v2272 = vpack.c.b16 %v1312, %v1304
    %v2273 = vpack.c.b16 %v1313, %v1305
    %v2274 = vpack.c.b16 %v1314, %v1306
    %v2275 = vpack.c.b16 %v1315, %v1307
    %v2276 = vpack.c.b16 %v1316, %v1308
    %v2277 = vpack.c.b16 %v1325, %v1317
    %v2278 = vpack.c.b16 %v1326, %v1318
    %v2279 = vpack.c.b16 %v1327, %v1319
    %v2280 = vpack.c.b16 %v1328, %v1320
    %v2281 = vpack.c.b16 %v1329, %v1321
    %v2282 = vpack.c.b16 %v1330, %v1322
    %v2283 = vpack.c.b16 %v1331, %v1323
    %v2284 = vpack.c.b16 %v1332, %v1324
    %v2285 = vpack.c.b16 %v1341, %v1333
    %v2286 = vpack.c.b16 %v1342, %v1334
    %v2287 = vpack.c.b16 %v1343, %v1335
    %v2288 = vpack.c.b16 %v1344, %v1336
    %v2289 = vpack.c.b16 %v1345, %v1337
    %v2290 = vpack.c.b16 %v1346, %v1338
    %v2291 = vpack.c.b16 %v1347, %v1339
    %v2292 = vpack.c.b16 %v1348, %v1340
    %v2293 = vpack.c.b16 %v1357, %v1349
    %v2294 = vpack.c.b16 %v1358, %v1350
    %v2295 = vpack.c.b16 %v1359, %v1351
    %v2296 = vpack.c.b16 %v1360, %v1352
    %v2297 = vpack.c.b16 %v1361, %v1353
    %v2298 = vpack.c.b16 %v1362, %v1354
    %v2299 = vpack.c.b16 %v1363, %v1355
    %v2300 = vpack.c.b16 %v1364, %v1356
    %v2301 = vpack.c.b16 %v1373, %v1365
    %v2302 = vpack.c.b16 %v1374, %v1366
    %v2303 = vpack.c.b16 %v1375, %v1367
    %v2304 = vpack.c.b16 %v1376, %v1368
    %v2305 = vpack.c.b16 %v1377, %v1369
    %v2306 = vpack.c.b16 %v1378, %v1370
    %v2307 = vpack.c.b16 %v1379, %v1371
    %v2308 = vpack.c.b16 %v1380, %v1372
    %v2309 = vpack.c.b16 %v1389, %v1381
    %v2310 = vpack.c.b16 %v1390, %v1382
    %v2311 = vpack.c.b16 %v1391, %v1383
    %v2312 = vpack.c.b16 %v1392, %v1384
    %v2313 = vpack.c.b16 %v1393, %v1385
    %v2314 = vpack.c.b16 %v1394, %v1386
    %v2315 = vpack.c.b16 %v1395, %v1387
    %v2316 = vpack.c.b16 %v1396, %v1388
    %v2317 = vpack.c.b16 %v1405, %v1397
    %v2318 = vpack.c.b16 %v1406, %v1398
    %v2319 = vpack.c.b16 %v1407, %v1399
    %v2320 = vpack.c.b16 %v1408, %v1400
    %v2321 = vpack.c.b16 %v1409, %v1401
    %v2322 = vpack.c.b16 %v1410, %v1402
    %v2323 = vpack.c.b16 %v1411, %v1403
    %v2324 = vpack.c.b16 %v1412, %v1404
    %v2325 = vpack.c.b16 %v1421, %v1413
    %v2326 = vpack.c.b16 %v1422, %v1414
    %v2327 = vpack.c.b16 %v1423, %v1415
    %v2328 = vpack.c.b16 %v1424, %v1416
    %v2329 = vpack.c.b16 %v1425, %v1417
    %v2330 = vpack.c.b16 %v1426, %v1418
    %v2331 = vpack.c.b16 %v1427, %v1419
    %v2332 = vpack.c.b16 %v1428, %v1420
    %v2333 = vpack.c.b16 %v1437, %v1429
    %v2334 = vpack.c.b16 %v1438, %v1430
    %v2335 = vpack.c.b16 %v1439, %v1431
    %v2336 = vpack.c.b16 %v1440, %v1432
    %v2337 = vpack.c.b16 %v1441, %v1433
    %v2338 = vpack.c.b16 %v1442, %v1434
    %v2339 = vpack.c.b16 %v1443, %v1435
    %v2340 = vpack.c.b16 %v1444, %v1436
    %v2341 = vpack.c.b16 %v1453, %v1445
    %v2342 = vpack.c.b16 %v1454, %v1446
    %v2343 = vpack.c.b16 %v1455, %v1447
    %v2344 = vpack.c.b16 %v1456, %v1448
    %v2345 = vpack.c.b16 %v1457, %v1449
    %v2346 = vpack.c.b16 %v1458, %v1450
    %v2347 = vpack.c.b16 %v1459, %v1451
    %v2348 = vpack.c.b16 %v1460, %v1452
    %v2349 = vpack.c.b16 %v1469, %v1461
    %v2350 = vpack.c.b16 %v1470, %v1462
    %v2351 = vpack.c.b16 %v1471, %v1463
    %v2352 = vpack.c.b16 %v1472, %v1464
    %v2353 = vpack.c.b16 %v1473, %v1465
    %v2354 = vpack.c.b16 %v1474, %v1466
    %v2355 = vpack.c.b16 %v1475, %v1467
    %v2356 = vpack.c.b16 %v1476, %v1468
    %v2357 = vpack.c.b16 %v1485, %v1477
    %v2358 = vpack.c.b16 %v1486, %v1478
    %v2359 = vpack.c.b16 %v1487, %v1479
    %v2360 = vpack.c.b16 %v1488, %v1480
    %v2361 = vpack.c.b16 %v1489, %v1481
    %v2362 = vpack.c.b16 %v1490, %v1482
    %v2363 = vpack.c.b16 %v1491, %v1483
    %v2364 = vpack.c.b16 %v1492, %v1484
    %v2365 = vpack.c.b16 %v1501, %v1493
    %v2366 = vpack.c.b16 %v1502, %v1494
    %v2367 = vpack.c.b16 %v1503, %v1495
    %v2368 = vpack.c.b16 %v1504, %v1496
    %v2369 = vpack.c.b16 %v1505, %v1497
    %v2370 = vpack.c.b16 %v1506, %v1498
    %v2371 = vpack.c.b16 %v1507, %v1499
    %v2372 = vpack.c.b16 %v1508, %v1500
    %v2373 = vpack.c.b16 %v1517, %v1509
    %v2374 = vpack.c.b16 %v1518, %v1510
    %v2375 = vpack.c.b16 %v1519, %v1511
    %v2376 = vpack.c.b16 %v1520, %v1512
    %v2377 = vpack.c.b16 %v1521, %v1513
    %v2378 = vpack.c.b16 %v1522, %v1514
    %v2379 = vpack.c.b16 %v1523, %v1515
    %v2380 = vpack.c.b16 %v1524, %v1516
    %v2381 = vpack.c.b16 %v1533, %v1525
    %v2382 = vpack.c.b16 %v1534, %v1526
    %v2383 = vpack.c.b16 %v1535, %v1527
    %v2384 = vpack.c.b16 %v1536, %v1528
    %v2385 = vpack.c.b16 %v1537, %v1529
    %v2386 = vpack.c.b16 %v1538, %v1530
    %v2387 = vpack.c.b16 %v1539, %v1531
    %v2388 = vpack.c.b16 %v1540, %v1532
    %v2389 = vpack.c.b16 %v1549, %v1541
    %v2390 = vpack.c.b16 %v1550, %v1542
    %v2391 = vpack.c.b16 %v1551, %v1543
    %v2392 = vpack.c.b16 %v1552, %v1544
    %v2393 = vpack.c.b16 %v1553, %v1545
    %v2394 = vpack.c.b16 %v1554, %v1546
    %v2395 = vpack.c.b16 %v1555, %v1547
    %v2396 = vpack.c.b16 %v1556, %v1548
    %v2397 = vpack.c.b16 %v1565, %v1557
    %v2398 = vpack.c.b16 %v1566, %v1558
    %v2399 = vpack.c.b16 %v1567, %v1559
    %v2400 = vpack.c.b16 %v1568, %v1560
    %v2401 = vpack.c.b16 %v1569, %v1561
    %v2402 = vpack.c.b16 %v1570, %v1562
    %v2403 = vpack.c.b16 %v1571, %v1563
    %v2404 = vpack.c.b16 %v1572, %v1564
    %v2405 = vpack.c.b16 %v1581, %v1573
    %v2406 = vpack.c.b16 %v1582, %v1574
    %v2407 = vpack.c.b16 %v1583, %v1575
    %v2408 = vpack.c.b16 %v1584, %v1576
    %v2409 = vpack.c.b16 %v1585, %v1577
    %v2410 = vpack.c.b16 %v1586, %v1578
    %v2411 = vpack.c.b16 %v1587, %v1579
    %v2412 = vpack.c.b16 %v1588, %v1580
    %v2413 = vpack.c.b16 %v1597, %v1589
    %v2414 = vpack.c.b16 %v1598, %v1590
    %v2415 = vpack.c.b16 %v1599, %v1591
    %v2416 = vpack.c.b16 %v1600, %v1592
    %v2417 = vpack.c.b16 %v1601, %v1593
    %v2418 = vpack.c.b16 %v1602, %v1594
    %v2419 = vpack.c.b16 %v1603, %v1595
    %v2420 = vpack.c.b16 %v1604, %v1596
    %v2421 = vpack.c.b16 %v1613, %v1605
    %v2422 = vpack.c.b16 %v1614, %v1606
    %v2423 = vpack.c.b16 %v1615, %v1607
    %v2424 = vpack.c.b16 %v1616, %v1608
    %v2425 = vpack.c.b16 %v1617, %v1609
    %v2426 = vpack.c.b16 %v1618, %v1610
    %v2427 = vpack.c.b16 %v1619, %v1611
    %v2428 = vpack.c.b16 %v1620, %v1612
    %v2429 = vpack.c.b16 %v1629, %v1621
    %v2430 = vpack.c.b16 %v1630, %v1622
    %v2431 = vpack.c.b16 %v1631, %v1623
    %v2432 = vpack.c.b16 %v1632, %v1624
    %v2433 = vpack.c.b16 %v1633, %v1625
    %v2434 = vpack.c.b16 %v1634, %v1626
    %v2435 = vpack.c.b16 %v1635, %v1627
    %v2436 = vpack.c.b16 %v1636, %v1628
    %v2437 = vpack.c.b16 %v1645, %v1637
    %v2438 = vpack.c.b16 %v1646, %v1638
    %v2439 = vpack.c.b16 %v1647, %v1639
    %v2440 = vpack.c.b16 %v1648, %v1640
    %v2441 = vpack.c.b16 %v1649, %v1641
    %v2442 = vpack.c.b16 %v1650, %v1642
    %v2443 = vpack.c.b16 %v1651, %v1643
    %v2444 = vpack.c.b16 %v1652, %v1644
    %v2445 = vpack.c.b16 %v1661, %v1653
    %v2446 = vpack.c.b16 %v1662, %v1654
    %v2447 = vpack.c.b16 %v1663, %v1655
    %v2448 = vpack.c.b16 %v1664, %v1656
    %v2449 = vpack.c.b16 %v1665, %v1657
    %v2450 = vpack.c.b16 %v1666, %v1658
    %v2451 = vpack.c.b16 %v1667, %v1659
    %v2452 = vpack.c.b16 %v1668, %v1660
    %v2453 = vpack.c.b16 %v1677, %v1669
    %v2454 = vpack.c.b16 %v1678, %v1670
    %v2455 = vpack.c.b16 %v1679, %v1671
    %v2456 = vpack.c.b16 %v1680, %v1672
    %v2457 = vpack.c.b16 %v1681, %v1673
    %v2458 = vpack.c.b16 %v1682, %v1674
    %v2459 = vpack.c.b16 %v1683, %v1675
    %v2460 = vpack.c.b16 %v1684, %v1676
    %v2461 = vpack.c.b16 %v1693, %v1685
    %v2462 = vpack.c.b16 %v1694, %v1686
    %v2463 = vpack.c.b16 %v1695, %v1687
    %v2464 = vpack.c.b16 %v1696, %v1688
    %v2465 = vpack.c.b16 %v1697, %v1689
    %v2466 = vpack.c.b16 %v1698, %v1690
    %v2467 = vpack.c.b16 %v1699, %v1691
    %v2468 = vpack.c.b16 %v1700, %v1692
    %v2469 = vpack.c.b16 %v1709, %v1701
    %v2470 = vpack.c.b16 %v1710, %v1702
    %v2471 = vpack.c.b16 %v1711, %v1703
    %v2472 = vpack.c.b16 %v1712, %v1704
    %v2473 = vpack.c.b16 %v1713, %v1705
    %v2474 = vpack.c.b16 %v1714, %v1706
    %v2475 = vpack.c.b16 %v1715, %v1707
    %v2476 = vpack.c.b16 %v1716, %v1708
    %v2477 = vpack.c.b16 %v1725, %v1717
    %v2478 = vpack.c.b16 %v1726, %v1718
    %v2479 = vpack.c.b16 %v1727, %v1719
    %v2480 = vpack.c.b16 %v1728, %v1720
    %v2481 = vpack.c.b16 %v1729, %v1721
    %v2482 = vpack.c.b16 %v1730, %v1722
    %v2483 = vpack.c.b16 %v1731, %v1723
    %v2484 = vpack.c.b16 %v1732, %v1724
    %v2485 = vpack.c.b16 %v1741, %v1733
    %v2486 = vpack.c.b16 %v1742, %v1734
    %v2487 = vpack.c.b16 %v1743, %v1735
    %v2488 = vpack.c.b16 %v1744, %v1736
    %v2489 = vpack.c.b16 %v1745, %v1737
    %v2490 = vpack.c.b16 %v1746, %v1738
    %v2491 = vpack.c.b16 %v1747, %v1739
    %v2492 = vpack.c.b16 %v1748, %v1740
    %v2493 = vpack.c.b16 %v1757, %v1749
    %v2494 = vpack.c.b16 %v1758, %v1750
    %v2495 = vpack.c.b16 %v1759, %v1751
    %v2496 = vpack.c.b16 %v1760, %v1752
    %v2497 = vpack.c.b16 %v1761, %v1753
    %v2498 = vpack.c.b16 %v1762, %v1754
    %v2499 = vpack.c.b16 %v1763, %v1755
    %v2500 = vpack.c.b16 %v1764, %v1756
    %v2501 = vpack.c.b16 %v1773, %v1765
    %v2502 = vpack.c.b16 %v1774, %v1766
    %v2503 = vpack.c.b16 %v1775, %v1767
    %v2504 = vpack.c.b16 %v1776, %v1768
    %v2505 = vpack.c.b16 %v1777, %v1769
    %v2506 = vpack.c.b16 %v1778, %v1770
    %v2507 = vpack.c.b16 %v1779, %v1771
    %v2508 = vpack.c.b16 %v1780, %v1772
    %v2509 = vpack.c.b16 %v1789, %v1781
    %v2510 = vpack.c.b16 %v1790, %v1782
    %v2511 = vpack.c.b16 %v1791, %v1783
    %v2512 = vpack.c.b16 %v1792, %v1784
    %v2513 = vpack.c.b16 %v1793, %v1785
    %v2514 = vpack.c.b16 %v1794, %v1786
    %v2515 = vpack.c.b16 %v1795, %v1787
    %v2516 = vpack.c.b16 %v1796, %v1788
    %v2517 = vpack.c.b16 %v1805, %v1797
    %v2518 = vpack.c.b16 %v1806, %v1798
    %v2519 = vpack.c.b16 %v1807, %v1799
    %v2520 = vpack.c.b16 %v1808, %v1800
    %v2521 = vpack.c.b16 %v1809, %v1801
    %v2522 = vpack.c.b16 %v1810, %v1802
    %v2523 = vpack.c.b16 %v1811, %v1803
    %v2524 = vpack.c.b16 %v1812, %v1804
    %v2525 = vpack.c.b16 %v1821, %v1813
    %v2526 = vpack.c.b16 %v1822, %v1814
    %v2527 = vpack.c.b16 %v1823, %v1815
    %v2528 = vpack.c.b16 %v1824, %v1816
    %v2529 = vpack.c.b16 %v1825, %v1817
    %v2530 = vpack.c.b16 %v1826, %v1818
    %v2531 = vpack.c.b16 %v1827, %v1819
    %v2532 = vpack.c.b16 %v1828, %v1820
    %v2533 = vpack.c.b16 %v1837, %v1829
    %v2534 = vpack.c.b16 %v1838, %v1830
    %v2535 = vpack.c.b16 %v1839, %v1831
    %v2536 = vpack.c.b16 %v1840, %v1832
    %v2537 = vpack.c.b16 %v1841, %v1833
    %v2538 = vpack.c.b16 %v1842, %v1834
    %v2539 = vpack.c.b16 %v1843, %v1835
    %v2540 = vpack.c.b16 %v1844, %v1836
    %v2541 = vpack.c.b16 %v1853, %v1845
    %v2542 = vpack.c.b16 %v1854, %v1846
    %v2543 = vpack.c.b16 %v1855, %v1847
    %v2544 = vpack.c.b16 %v1856, %v1848
    %v2545 = vpack.c.b16 %v1857, %v1849
    %v2546 = vpack.c.b16 %v1858, %v1850
    %v2547 = vpack.c.b16 %v1859, %v1851
    %v2548 = vpack.c.b16 %v1860, %v1852
    %v2549 = vpack.c.b16 %v1869, %v1861
    %v2550 = vpack.c.b16 %v1870, %v1862
    %v2551 = vpack.c.b16 %v1871, %v1863
    %v2552 = vpack.c.b16 %v1872, %v1864
    %v2553 = vpack.c.b16 %v1873, %v1865
    %v2554 = vpack.c.b16 %v1874, %v1866
    %v2555 = vpack.c.b16 %v1875, %v1867
    %v2556 = vpack.c.b16 %v1876, %v1868
    %v2557 = vpack.c.b16 %v1885, %v1877
    %v2558 = vpack.c.b16 %v1886, %v1878
    %v2559 = vpack.c.b16 %v1887, %v1879
    %v2560 = vpack.c.b16 %v1888, %v1880
    %v2561 = vpack.c.b16 %v1889, %v1881
    %v2562 = vpack.c.b16 %v1890, %v1882
    %v2563 = vpack.c.b16 %v1891, %v1883
    %v2564 = vpack.c.b16 %v1892, %v1884
    %v2565 = vpack.c.b16 %v1901, %v1893
    %v2566 = vpack.c.b16 %v1902, %v1894
    %v2567 = vpack.c.b16 %v1903, %v1895
    %v2568 = vpack.c.b16 %v1904, %v1896
    %v2569 = vpack.c.b16 %v1905, %v1897
    %v2570 = vpack.c.b16 %v1906, %v1898
    %v2571 = vpack.c.b16 %v1907, %v1899
    %v2572 = vpack.c.b16 %v1908, %v1900
    %v2573 = vpack.c.b16 %v1917, %v1909
    %v2574 = vpack.c.b16 %v1918, %v1910
    %v2575 = vpack.c.b16 %v1919, %v1911
    %v2576 = vpack.c.b16 %v1920, %v1912
    %v2577 = vpack.c.b16 %v1921, %v1913
    %v2578 = vpack.c.b16 %v1922, %v1914
    %v2579 = vpack.c.b16 %v1923, %v1915
    %v2580 = vpack.c.b16 %v1924, %v1916
    %v2581 = vpack.c.b16 %v1933, %v1925
    %v2582 = vpack.c.b16 %v1934, %v1926
    %v2583 = vpack.c.b16 %v1935, %v1927
    %v2584 = vpack.c.b16 %v1936, %v1928
    %v2585 = vpack.c.b16 %v1937, %v1929
    %v2586 = vpack.c.b16 %v1938, %v1930
    %v2587 = vpack.c.b16 %v1939, %v1931
    %v2588 = vpack.c.b16 %v1940, %v1932
    %v2589 = vpack.c.b16 %v1949, %v1941
    %v2590 = vpack.c.b16 %v1950, %v1942
    %v2591 = vpack.c.b16 %v1951, %v1943
    %v2592 = vpack.c.b16 %v1952, %v1944
    %v2593 = vpack.c.b16 %v1953, %v1945
    %v2594 = vpack.c.b16 %v1954, %v1946
    %v2595 = vpack.c.b16 %v1955, %v1947
    %v2596 = vpack.c.b16 %v1956, %v1948
    %v2597 = vpack.c.b16 %v1965, %v1957
    %v2598 = vpack.c.b16 %v1966, %v1958
    %v2599 = vpack.c.b16 %v1967, %v1959
    %v2600 = vpack.c.b16 %v1968, %v1960
    %v2601 = vpack.c.b16 %v1969, %v1961
    %v2602 = vpack.c.b16 %v1970, %v1962
    %v2603 = vpack.c.b16 %v1971, %v1963
    %v2604 = vpack.c.b16 %v1972, %v1964
    %v2605 = vpack.c.b16 %v1981, %v1973
    %v2606 = vpack.c.b16 %v1982, %v1974
    %v2607 = vpack.c.b16 %v1983, %v1975
    %v2608 = vpack.c.b16 %v1984, %v1976
    %v2609 = vpack.c.b16 %v1985, %v1977
    %v2610 = vpack.c.b16 %v1986, %v1978
    %v2611 = vpack.c.b16 %v1987, %v1979
    %v2612 = vpack.c.b16 %v1988, %v1980
    %v2613 = vpack.c.b16 %v1997, %v1989
    %v2614 = vpack.c.b16 %v1998, %v1990
    %v2615 = vpack.c.b16 %v1999, %v1991
    %v2616 = vpack.c.b16 %v2000, %v1992
    %v2617 = vpack.c.b16 %v2001, %v1993
    %v2618 = vpack.c.b16 %v2002, %v1994
    %v2619 = vpack.c.b16 %v2003, %v1995
    %v2620 = vpack.c.b16 %v2004, %v1996
    %v2621 = vpack.c.b16 %v2013, %v2005
    %v2622 = vpack.c.b16 %v2014, %v2006
    %v2623 = vpack.c.b16 %v2015, %v2007
    %v2624 = vpack.c.b16 %v2016, %v2008
    %v2625 = vpack.c.b16 %v2017, %v2009
    %v2626 = vpack.c.b16 %v2018, %v2010
    %v2627 = vpack.c.b16 %v2019, %v2011
    %v2628 = vpack.c.b16 %v2020, %v2012
    %v2629 = vpack.c.b16 %v2029, %v2021
    %v2630 = vpack.c.b16 %v2030, %v2022
    %v2631 = vpack.c.b16 %v2031, %v2023
    %v2632 = vpack.c.b16 %v2032, %v2024
    %v2633 = vpack.c.b16 %v2033, %v2025
    %v2634 = vpack.c.b16 %v2034, %v2026
    %v2635 = vpack.c.b16 %v2035, %v2027
    %v2636 = vpack.c.b16 %v2036, %v2028
    %v2637 = vpack.c.b16 %v2045, %v2037
    %v2638 = vpack.c.b16 %v2046, %v2038
    %v2639 = vpack.c.b16 %v2047, %v2039
    %v2640 = vpack.c.b16 %v2048, %v2040
    %v2641 = vpack.c.b16 %v2049, %v2041
    %v2642 = vpack.c.b16 %v2050, %v2042
    %v2643 = vpack.c.b16 %v2051, %v2043
    %v2644 = vpack.c.b16 %v2052, %v2044
    %v2645 = vpack.c.b16 %v2061, %v2053
    %v2646 = vpack.c.b16 %v2062, %v2054
    %v2647 = vpack.c.b16 %v2063, %v2055
    %v2648 = vpack.c.b16 %v2064, %v2056
    %v2649 = vpack.c.b16 %v2065, %v2057
    %v2650 = vpack.c.b16 %v2066, %v2058
    %v2651 = vpack.c.b16 %v2067, %v2059
    %v2652 = vpack.c.b16 %v2068, %v2060
    %v2653 = vpack.c.b16 %v2077, %v2069
    %v2654 = vpack.c.b16 %v2078, %v2070
    %v2655 = vpack.c.b16 %v2079, %v2071
    %v2656 = vpack.c.b16 %v2080, %v2072
    %v2657 = vpack.c.b16 %v2081, %v2073
    %v2658 = vpack.c.b16 %v2082, %v2074
    %v2659 = vpack.c.b16 %v2083, %v2075
    %v2660 = vpack.c.b16 %v2084, %v2076
    %v2661 = vpack.c.b16 %v2093, %v2085
    %v2662 = vpack.c.b16 %v2094, %v2086
    %v2663 = vpack.c.b16 %v2095, %v2087
    %v2664 = vpack.c.b16 %v2096, %v2088
    %v2665 = vpack.c.b16 %v2097, %v2089
    %v2666 = vpack.c.b16 %v2098, %v2090
    %v2667 = vpack.c.b16 %v2099, %v2091
    %v2668 = vpack.c.b16 %v2100, %v2092
    %v2669 = vpack.c.b16 %v2109, %v2101
    %v2670 = vpack.c.b16 %v2110, %v2102
    %v2671 = vpack.c.b16 %v2111, %v2103
    %v2672 = vpack.c.b16 %v2112, %v2104
    %v2673 = vpack.c.b16 %v2113, %v2105
    %v2674 = vpack.c.b16 %v2114, %v2106
    %v2675 = vpack.c.b16 %v2115, %v2107
    %v2676 = vpack.c.b16 %v2116, %v2108
    %v2677 = vpack.c.b16 %v2125, %v2117
    %v2678 = vpack.c.b16 %v2126, %v2118
    %v2679 = vpack.c.b16 %v2127, %v2119
    %v2680 = vpack.c.b16 %v2128, %v2120
    %v2681 = vpack.c.b16 %v2129, %v2121
    %v2682 = vpack.c.b16 %v2130, %v2122
    %v2683 = vpack.c.b16 %v2131, %v2123
    %v2684 = vpack.c.b16 %v2132, %v2124
    %v2685 = vpack.c.b16 %v2141, %v2133
    %v2686 = vpack.c.b16 %v2142, %v2134
    %v2687 = vpack.c.b16 %v2143, %v2135
    %v2688 = vpack.c.b16 %v2144, %v2136
    %v2689 = vpack.c.b16 %v2145, %v2137
    %v2690 = vpack.c.b16 %v2146, %v2138
    %v2691 = vpack.c.b16 %v2147, %v2139
    %v2692 = vpack.c.b16 %v2148, %v2140
    %v2693 = vpack.c.b16 %v2157, %v2149
    %v2694 = vpack.c.b16 %v2158, %v2150
    %v2695 = vpack.c.b16 %v2159, %v2151
    %v2696 = vpack.c.b16 %v2160, %v2152
    %v2697 = vpack.c.b16 %v2161, %v2153
    %v2698 = vpack.c.b16 %v2162, %v2154
    %v2699 = vpack.c.b16 %v2163, %v2155
    %v2700 = vpack.c.b16 %v2164, %v2156
    %v2701 = vpack.c.b16 %v2173, %v2165
    %v2702 = vpack.c.b16 %v2174, %v2166
    %v2703 = vpack.c.b16 %v2175, %v2167
    %v2704 = vpack.c.b16 %v2176, %v2168
    %v2705 = vpack.c.b16 %v2177, %v2169
    %v2706 = vpack.c.b16 %v2178, %v2170
    %v2707 = vpack.c.b16 %v2179, %v2171
    %v2708 = vpack.c.b16 %v2180, %v2172
    %v2709 = vpack.c.b16 %v2189, %v2181
    %v2710 = vpack.c.b16 %v2190, %v2182
    %v2711 = vpack.c.b16 %v2191, %v2183
    %v2712 = vpack.c.b16 %v2192, %v2184
    %v2713 = vpack.c.b16 %v2193, %v2185
    %v2714 = vpack.c.b16 %v2194, %v2186
    %v2715 = vpack.c.b16 %v2195, %v2187
    %v2716 = vpack.c.b16 %v2196, %v2188
    %v2717 = vpack.c.b16 %v2205, %v2197
    %v2718 = vpack.c.b16 %v2206, %v2198
    %v2719 = vpack.c.b16 %v2207, %v2199
    %v2720 = vpack.c.b16 %v2208, %v2200
    %v2721 = vpack.c.b16 %v2209, %v2201
    %v2722 = vpack.c.b16 %v2210, %v2202
    %v2723 = vpack.c.b16 %v2211, %v2203
    %v2724 = vpack.c.b16 %v2212, %v2204
    %3237 = vmatpush.bf16.msra.mxu0 %v2269
    %3238 = vmatpush.bf16.msra.mxu0 %v2261
    %3239 = vmatpush.bf16.msra.mxu0 %v2253
    %3240 = vmatpush.bf16.msra.mxu0 %v2245
    %3241 = vmatpush.bf16.msra.mxu0 %v2237
    %3242 = vmatpush.bf16.msra.mxu0 %v2229
    %3243 = vmatpush.bf16.msra.mxu0 %v2221
    %3244 = vmatpush.bf16.msra.mxu0 %v2213
    %3245 = vmatmul.bf16.gmra.mxu0 %v661
    %v3246 = vpop.f32.mrf.mxu0
    %v3247 = vadd.f32 %v643, %v3246
    %v3248 = vpop.f32.mrf.mxu0
    %3249 = vdwg.mxu0
    %3250 = vmatpush.bf16.msra.mxu0 %v2333
    %3251 = vmatpush.bf16.msra.mxu0 %v2325
    %3252 = vmatpush.bf16.msra.mxu0 %v2317
    %3253 = vmatpush.bf16.msra.mxu0 %v2309
    %3254 = vmatpush.bf16.msra.mxu0 %v2301
    %3255 = vmatpush.bf16.msra.mxu0 %v2293
    %3256 = vmatpush.bf16.msra.mxu0 %v2285
    %3257 = vmatpush.bf16.msra.mxu0 %v2277
    %3258 = vmatmul.bf16.gmra.mxu0 %v662
    %v3259 = vpop.f32.mrf.mxu0
    %v3260 = vadd.f32 %v3247, %v3259
    %v3261 = vpop.f32.mrf.mxu0
    %3262 = vdwg.mxu0
    %3263 = vmatpush.bf16.msra.mxu0 %v2397
    %3264 = vmatpush.bf16.msra.mxu0 %v2389
    %3265 = vmatpush.bf16.msra.mxu0 %v2381
    %3266 = vmatpush.bf16.msra.mxu0 %v2373
    %3267 = vmatpush.bf16.msra.mxu0 %v2365
    %3268 = vmatpush.bf16.msra.mxu0 %v2357
    %3269 = vmatpush.bf16.msra.mxu0 %v2349
    %3270 = vmatpush.bf16.msra.mxu0 %v2341
    %3271 = vmatmul.bf16.gmra.mxu0 %v663
    %v3272 = vpop.f32.mrf.mxu0
    %v3273 = vadd.f32 %v3260, %v3272
    %v3274 = vpop.f32.mrf.mxu0
    %3275 = vdwg.mxu0
    %3276 = vmatpush.bf16.msra.mxu0 %v2461
    %3277 = vmatpush.bf16.msra.mxu0 %v2453
    %3278 = vmatpush.bf16.msra.mxu0 %v2445
    %3279 = vmatpush.bf16.msra.mxu0 %v2437
    %3280 = vmatpush.bf16.msra.mxu0 %v2429
    %3281 = vmatpush.bf16.msra.mxu0 %v2421
    %3282 = vmatpush.bf16.msra.mxu0 %v2413
    %3283 = vmatpush.bf16.msra.mxu0 %v2405
    %3284 = vmatmul.bf16.gmra.mxu0 %v664
    %v3285 = vpop.f32.mrf.mxu0
    %v3286 = vadd.f32 %v3273, %v3285
    %v3287 = vpop.f32.mrf.mxu0
    %3288 = vdwg.mxu0
    %3289 = vmatpush.bf16.msra.mxu0 %v2525
    %3290 = vmatpush.bf16.msra.mxu0 %v2517
    %3291 = vmatpush.bf16.msra.mxu0 %v2509
    %3292 = vmatpush.bf16.msra.mxu0 %v2501
    %3293 = vmatpush.bf16.msra.mxu0 %v2493
    %3294 = vmatpush.bf16.msra.mxu0 %v2485
    %3295 = vmatpush.bf16.msra.mxu0 %v2477
    %3296 = vmatpush.bf16.msra.mxu0 %v2469
    %3297 = vmatmul.bf16.gmra.mxu0 %v665
    %v3298 = vpop.f32.mrf.mxu0
    %v3299 = vadd.f32 %v3286, %v3298
    %v3300 = vpop.f32.mrf.mxu0
    %3301 = vdwg.mxu0
    %3302 = vmatpush.bf16.msra.mxu0 %v2589
    %3303 = vmatpush.bf16.msra.mxu0 %v2581
    %3304 = vmatpush.bf16.msra.mxu0 %v2573
    %3305 = vmatpush.bf16.msra.mxu0 %v2565
    %3306 = vmatpush.bf16.msra.mxu0 %v2557
    %3307 = vmatpush.bf16.msra.mxu0 %v2549
    %3308 = vmatpush.bf16.msra.mxu0 %v2541
    %3309 = vmatpush.bf16.msra.mxu0 %v2533
    %3310 = vmatmul.bf16.gmra.mxu0 %v666
    %v3311 = vpop.f32.mrf.mxu0
    %v3312 = vadd.f32 %v3299, %v3311
    %v3313 = vpop.f32.mrf.mxu0
    %3314 = vdwg.mxu0
    %3315 = vmatpush.bf16.msra.mxu0 %v2653
    %3316 = vmatpush.bf16.msra.mxu0 %v2645
    %3317 = vmatpush.bf16.msra.mxu0 %v2637
    %3318 = vmatpush.bf16.msra.mxu0 %v2629
    %3319 = vmatpush.bf16.msra.mxu0 %v2621
    %3320 = vmatpush.bf16.msra.mxu0 %v2613
    %3321 = vmatpush.bf16.msra.mxu0 %v2605
    %3322 = vmatpush.bf16.msra.mxu0 %v2597
    %3323 = vmatmul.bf16.gmra.mxu0 %v667
    %v3324 = vpop.f32.mrf.mxu0
    %v3325 = vadd.f32 %v3312, %v3324
    %v3326 = vpop.f32.mrf.mxu0
    %3327 = vdwg.mxu0
    %3328 = vmatpush.bf16.msra.mxu0 %v2717
    %3329 = vmatpush.bf16.msra.mxu0 %v2709
    %3330 = vmatpush.bf16.msra.mxu0 %v2701
    %3331 = vmatpush.bf16.msra.mxu0 %v2693
    %3332 = vmatpush.bf16.msra.mxu0 %v2685
    %3333 = vmatpush.bf16.msra.mxu0 %v2677
    %3334 = vmatpush.bf16.msra.mxu0 %v2669
    %3335 = vmatpush.bf16.msra.mxu0 %v2661
    %3336 = vmatmul.bf16.gmra.mxu0 %v668
    %v3337 = vpop.f32.mrf.mxu0
    %v3338 = vadd.f32 %v3325, %v3337
    %v3339 = vpop.f32.mrf.mxu0
    %3340 = vdwg.mxu0
    %3341 = vmatpush.bf16.msra.mxu0 %v2270
    %3342 = vmatpush.bf16.msra.mxu0 %v2262
    %3343 = vmatpush.bf16.msra.mxu0 %v2254
    %3344 = vmatpush.bf16.msra.mxu0 %v2246
    %3345 = vmatpush.bf16.msra.mxu0 %v2238
    %3346 = vmatpush.bf16.msra.mxu0 %v2230
    %3347 = vmatpush.bf16.msra.mxu0 %v2222
    %3348 = vmatpush.bf16.msra.mxu0 %v2214
    %3349 = vmatmul.bf16.gmra.mxu0 %v661
    %v3350 = vpop.f32.mrf.mxu0
    %v3351 = vadd.f32 %v644, %v3350
    %v3352 = vpop.f32.mrf.mxu0
    %3353 = vdwg.mxu0
    %3354 = vmatpush.bf16.msra.mxu0 %v2334
    %3355 = vmatpush.bf16.msra.mxu0 %v2326
    %3356 = vmatpush.bf16.msra.mxu0 %v2318
    %3357 = vmatpush.bf16.msra.mxu0 %v2310
    %3358 = vmatpush.bf16.msra.mxu0 %v2302
    %3359 = vmatpush.bf16.msra.mxu0 %v2294
    %3360 = vmatpush.bf16.msra.mxu0 %v2286
    %3361 = vmatpush.bf16.msra.mxu0 %v2278
    %3362 = vmatmul.bf16.gmra.mxu0 %v662
    %v3363 = vpop.f32.mrf.mxu0
    %v3364 = vadd.f32 %v3351, %v3363
    %v3365 = vpop.f32.mrf.mxu0
    %3366 = vdwg.mxu0
    %3367 = vmatpush.bf16.msra.mxu0 %v2398
    %3368 = vmatpush.bf16.msra.mxu0 %v2390
    %3369 = vmatpush.bf16.msra.mxu0 %v2382
    %3370 = vmatpush.bf16.msra.mxu0 %v2374
    %3371 = vmatpush.bf16.msra.mxu0 %v2366
    %3372 = vmatpush.bf16.msra.mxu0 %v2358
    %3373 = vmatpush.bf16.msra.mxu0 %v2350
    %3374 = vmatpush.bf16.msra.mxu0 %v2342
    %3375 = vmatmul.bf16.gmra.mxu0 %v663
    %v3376 = vpop.f32.mrf.mxu0
    %v3377 = vadd.f32 %v3364, %v3376
    %v3378 = vpop.f32.mrf.mxu0
    %3379 = vdwg.mxu0
    %3380 = vmatpush.bf16.msra.mxu0 %v2462
    %3381 = vmatpush.bf16.msra.mxu0 %v2454
    %3382 = vmatpush.bf16.msra.mxu0 %v2446
    %3383 = vmatpush.bf16.msra.mxu0 %v2438
    %3384 = vmatpush.bf16.msra.mxu0 %v2430
    %3385 = vmatpush.bf16.msra.mxu0 %v2422
    %3386 = vmatpush.bf16.msra.mxu0 %v2414
    %3387 = vmatpush.bf16.msra.mxu0 %v2406
    %3388 = vmatmul.bf16.gmra.mxu0 %v664
    %v3389 = vpop.f32.mrf.mxu0
    %v3390 = vadd.f32 %v3377, %v3389
    %v3391 = vpop.f32.mrf.mxu0
    %3392 = vdwg.mxu0
    %3393 = vmatpush.bf16.msra.mxu0 %v2526
    %3394 = vmatpush.bf16.msra.mxu0 %v2518
    %3395 = vmatpush.bf16.msra.mxu0 %v2510
    %3396 = vmatpush.bf16.msra.mxu0 %v2502
    %3397 = vmatpush.bf16.msra.mxu0 %v2494
    %3398 = vmatpush.bf16.msra.mxu0 %v2486
    %3399 = vmatpush.bf16.msra.mxu0 %v2478
    %3400 = vmatpush.bf16.msra.mxu0 %v2470
    %3401 = vmatmul.bf16.gmra.mxu0 %v665
    %v3402 = vpop.f32.mrf.mxu0
    %v3403 = vadd.f32 %v3390, %v3402
    %v3404 = vpop.f32.mrf.mxu0
    %3405 = vdwg.mxu0
    %3406 = vmatpush.bf16.msra.mxu0 %v2590
    %3407 = vmatpush.bf16.msra.mxu0 %v2582
    %3408 = vmatpush.bf16.msra.mxu0 %v2574
    %3409 = vmatpush.bf16.msra.mxu0 %v2566
    %3410 = vmatpush.bf16.msra.mxu0 %v2558
    %3411 = vmatpush.bf16.msra.mxu0 %v2550
    %3412 = vmatpush.bf16.msra.mxu0 %v2542
    %3413 = vmatpush.bf16.msra.mxu0 %v2534
    %3414 = vmatmul.bf16.gmra.mxu0 %v666
    %v3415 = vpop.f32.mrf.mxu0
    %v3416 = vadd.f32 %v3403, %v3415
    %v3417 = vpop.f32.mrf.mxu0
    %3418 = vdwg.mxu0
    %3419 = vmatpush.bf16.msra.mxu0 %v2654
    %3420 = vmatpush.bf16.msra.mxu0 %v2646
    %3421 = vmatpush.bf16.msra.mxu0 %v2638
    %3422 = vmatpush.bf16.msra.mxu0 %v2630
    %3423 = vmatpush.bf16.msra.mxu0 %v2622
    %3424 = vmatpush.bf16.msra.mxu0 %v2614
    %3425 = vmatpush.bf16.msra.mxu0 %v2606
    %3426 = vmatpush.bf16.msra.mxu0 %v2598
    %3427 = vmatmul.bf16.gmra.mxu0 %v667
    %v3428 = vpop.f32.mrf.mxu0
    %v3429 = vadd.f32 %v3416, %v3428
    %v3430 = vpop.f32.mrf.mxu0
    %3431 = vdwg.mxu0
    %3432 = vmatpush.bf16.msra.mxu0 %v2718
    %3433 = vmatpush.bf16.msra.mxu0 %v2710
    %3434 = vmatpush.bf16.msra.mxu0 %v2702
    %3435 = vmatpush.bf16.msra.mxu0 %v2694
    %3436 = vmatpush.bf16.msra.mxu0 %v2686
    %3437 = vmatpush.bf16.msra.mxu0 %v2678
    %3438 = vmatpush.bf16.msra.mxu0 %v2670
    %3439 = vmatpush.bf16.msra.mxu0 %v2662
    %3440 = vmatmul.bf16.gmra.mxu0 %v668
    %v3441 = vpop.f32.mrf.mxu0
    %v3442 = vadd.f32 %v3429, %v3441
    %v3443 = vpop.f32.mrf.mxu0
    %3444 = vdwg.mxu0
    %3445 = vmatpush.bf16.msra.mxu0 %v2271
    %3446 = vmatpush.bf16.msra.mxu0 %v2263
    %3447 = vmatpush.bf16.msra.mxu0 %v2255
    %3448 = vmatpush.bf16.msra.mxu0 %v2247
    %3449 = vmatpush.bf16.msra.mxu0 %v2239
    %3450 = vmatpush.bf16.msra.mxu0 %v2231
    %3451 = vmatpush.bf16.msra.mxu0 %v2223
    %3452 = vmatpush.bf16.msra.mxu0 %v2215
    %3453 = vmatmul.bf16.gmra.mxu0 %v661
    %v3454 = vpop.f32.mrf.mxu0
    %v3455 = vadd.f32 %v645, %v3454
    %v3456 = vpop.f32.mrf.mxu0
    %3457 = vdwg.mxu0
    %3458 = vmatpush.bf16.msra.mxu0 %v2335
    %3459 = vmatpush.bf16.msra.mxu0 %v2327
    %3460 = vmatpush.bf16.msra.mxu0 %v2319
    %3461 = vmatpush.bf16.msra.mxu0 %v2311
    %3462 = vmatpush.bf16.msra.mxu0 %v2303
    %3463 = vmatpush.bf16.msra.mxu0 %v2295
    %3464 = vmatpush.bf16.msra.mxu0 %v2287
    %3465 = vmatpush.bf16.msra.mxu0 %v2279
    %3466 = vmatmul.bf16.gmra.mxu0 %v662
    %v3467 = vpop.f32.mrf.mxu0
    %v3468 = vadd.f32 %v3455, %v3467
    %v3469 = vpop.f32.mrf.mxu0
    %3470 = vdwg.mxu0
    %3471 = vmatpush.bf16.msra.mxu0 %v2399
    %3472 = vmatpush.bf16.msra.mxu0 %v2391
    %3473 = vmatpush.bf16.msra.mxu0 %v2383
    %3474 = vmatpush.bf16.msra.mxu0 %v2375
    %3475 = vmatpush.bf16.msra.mxu0 %v2367
    %3476 = vmatpush.bf16.msra.mxu0 %v2359
    %3477 = vmatpush.bf16.msra.mxu0 %v2351
    %3478 = vmatpush.bf16.msra.mxu0 %v2343
    %3479 = vmatmul.bf16.gmra.mxu0 %v663
    %v3480 = vpop.f32.mrf.mxu0
    %v3481 = vadd.f32 %v3468, %v3480
    %v3482 = vpop.f32.mrf.mxu0
    %3483 = vdwg.mxu0
    %3484 = vmatpush.bf16.msra.mxu0 %v2463
    %3485 = vmatpush.bf16.msra.mxu0 %v2455
    %3486 = vmatpush.bf16.msra.mxu0 %v2447
    %3487 = vmatpush.bf16.msra.mxu0 %v2439
    %3488 = vmatpush.bf16.msra.mxu0 %v2431
    %3489 = vmatpush.bf16.msra.mxu0 %v2423
    %3490 = vmatpush.bf16.msra.mxu0 %v2415
    %3491 = vmatpush.bf16.msra.mxu0 %v2407
    %3492 = vmatmul.bf16.gmra.mxu0 %v664
    %v3493 = vpop.f32.mrf.mxu0
    %v3494 = vadd.f32 %v3481, %v3493
    %v3495 = vpop.f32.mrf.mxu0
    %3496 = vdwg.mxu0
    %3497 = vmatpush.bf16.msra.mxu0 %v2527
    %3498 = vmatpush.bf16.msra.mxu0 %v2519
    %3499 = vmatpush.bf16.msra.mxu0 %v2511
    %3500 = vmatpush.bf16.msra.mxu0 %v2503
    %3501 = vmatpush.bf16.msra.mxu0 %v2495
    %3502 = vmatpush.bf16.msra.mxu0 %v2487
    %3503 = vmatpush.bf16.msra.mxu0 %v2479
    %3504 = vmatpush.bf16.msra.mxu0 %v2471
    %3505 = vmatmul.bf16.gmra.mxu0 %v665
    %v3506 = vpop.f32.mrf.mxu0
    %v3507 = vadd.f32 %v3494, %v3506
    %v3508 = vpop.f32.mrf.mxu0
    %3509 = vdwg.mxu0
    %3510 = vmatpush.bf16.msra.mxu0 %v2591
    %3511 = vmatpush.bf16.msra.mxu0 %v2583
    %3512 = vmatpush.bf16.msra.mxu0 %v2575
    %3513 = vmatpush.bf16.msra.mxu0 %v2567
    %3514 = vmatpush.bf16.msra.mxu0 %v2559
    %3515 = vmatpush.bf16.msra.mxu0 %v2551
    %3516 = vmatpush.bf16.msra.mxu0 %v2543
    %3517 = vmatpush.bf16.msra.mxu0 %v2535
    %3518 = vmatmul.bf16.gmra.mxu0 %v666
    %v3519 = vpop.f32.mrf.mxu0
    %v3520 = vadd.f32 %v3507, %v3519
    %v3521 = vpop.f32.mrf.mxu0
    %3522 = vdwg.mxu0
    %3523 = vmatpush.bf16.msra.mxu0 %v2655
    %3524 = vmatpush.bf16.msra.mxu0 %v2647
    %3525 = vmatpush.bf16.msra.mxu0 %v2639
    %3526 = vmatpush.bf16.msra.mxu0 %v2631
    %3527 = vmatpush.bf16.msra.mxu0 %v2623
    %3528 = vmatpush.bf16.msra.mxu0 %v2615
    %3529 = vmatpush.bf16.msra.mxu0 %v2607
    %3530 = vmatpush.bf16.msra.mxu0 %v2599
    %3531 = vmatmul.bf16.gmra.mxu0 %v667
    %v3532 = vpop.f32.mrf.mxu0
    %v3533 = vadd.f32 %v3520, %v3532
    %v3534 = vpop.f32.mrf.mxu0
    %3535 = vdwg.mxu0
    %3536 = vmatpush.bf16.msra.mxu0 %v2719
    %3537 = vmatpush.bf16.msra.mxu0 %v2711
    %3538 = vmatpush.bf16.msra.mxu0 %v2703
    %3539 = vmatpush.bf16.msra.mxu0 %v2695
    %3540 = vmatpush.bf16.msra.mxu0 %v2687
    %3541 = vmatpush.bf16.msra.mxu0 %v2679
    %3542 = vmatpush.bf16.msra.mxu0 %v2671
    %3543 = vmatpush.bf16.msra.mxu0 %v2663
    %3544 = vmatmul.bf16.gmra.mxu0 %v668
    %v3545 = vpop.f32.mrf.mxu0
    %v3546 = vadd.f32 %v3533, %v3545
    %v3547 = vpop.f32.mrf.mxu0
    %3548 = vdwg.mxu0
    %3549 = vmatpush.bf16.msra.mxu0 %v2272
    %3550 = vmatpush.bf16.msra.mxu0 %v2264
    %3551 = vmatpush.bf16.msra.mxu0 %v2256
    %3552 = vmatpush.bf16.msra.mxu0 %v2248
    %3553 = vmatpush.bf16.msra.mxu0 %v2240
    %3554 = vmatpush.bf16.msra.mxu0 %v2232
    %3555 = vmatpush.bf16.msra.mxu0 %v2224
    %3556 = vmatpush.bf16.msra.mxu0 %v2216
    %3557 = vmatmul.bf16.gmra.mxu0 %v661
    %v3558 = vpop.f32.mrf.mxu0
    %v3559 = vadd.f32 %v646, %v3558
    %v3560 = vpop.f32.mrf.mxu0
    %3561 = vdwg.mxu0
    %3562 = vmatpush.bf16.msra.mxu0 %v2336
    %3563 = vmatpush.bf16.msra.mxu0 %v2328
    %3564 = vmatpush.bf16.msra.mxu0 %v2320
    %3565 = vmatpush.bf16.msra.mxu0 %v2312
    %3566 = vmatpush.bf16.msra.mxu0 %v2304
    %3567 = vmatpush.bf16.msra.mxu0 %v2296
    %3568 = vmatpush.bf16.msra.mxu0 %v2288
    %3569 = vmatpush.bf16.msra.mxu0 %v2280
    %3570 = vmatmul.bf16.gmra.mxu0 %v662
    %v3571 = vpop.f32.mrf.mxu0
    %v3572 = vadd.f32 %v3559, %v3571
    %v3573 = vpop.f32.mrf.mxu0
    %3574 = vdwg.mxu0
    %3575 = vmatpush.bf16.msra.mxu0 %v2400
    %3576 = vmatpush.bf16.msra.mxu0 %v2392
    %3577 = vmatpush.bf16.msra.mxu0 %v2384
    %3578 = vmatpush.bf16.msra.mxu0 %v2376
    %3579 = vmatpush.bf16.msra.mxu0 %v2368
    %3580 = vmatpush.bf16.msra.mxu0 %v2360
    %3581 = vmatpush.bf16.msra.mxu0 %v2352
    %3582 = vmatpush.bf16.msra.mxu0 %v2344
    %3583 = vmatmul.bf16.gmra.mxu0 %v663
    %v3584 = vpop.f32.mrf.mxu0
    %v3585 = vadd.f32 %v3572, %v3584
    %v3586 = vpop.f32.mrf.mxu0
    %3587 = vdwg.mxu0
    %3588 = vmatpush.bf16.msra.mxu0 %v2464
    %3589 = vmatpush.bf16.msra.mxu0 %v2456
    %3590 = vmatpush.bf16.msra.mxu0 %v2448
    %3591 = vmatpush.bf16.msra.mxu0 %v2440
    %3592 = vmatpush.bf16.msra.mxu0 %v2432
    %3593 = vmatpush.bf16.msra.mxu0 %v2424
    %3594 = vmatpush.bf16.msra.mxu0 %v2416
    %3595 = vmatpush.bf16.msra.mxu0 %v2408
    %3596 = vmatmul.bf16.gmra.mxu0 %v664
    %v3597 = vpop.f32.mrf.mxu0
    %v3598 = vadd.f32 %v3585, %v3597
    %v3599 = vpop.f32.mrf.mxu0
    %3600 = vdwg.mxu0
    %3601 = vmatpush.bf16.msra.mxu0 %v2528
    %3602 = vmatpush.bf16.msra.mxu0 %v2520
    %3603 = vmatpush.bf16.msra.mxu0 %v2512
    %3604 = vmatpush.bf16.msra.mxu0 %v2504
    %3605 = vmatpush.bf16.msra.mxu0 %v2496
    %3606 = vmatpush.bf16.msra.mxu0 %v2488
    %3607 = vmatpush.bf16.msra.mxu0 %v2480
    %3608 = vmatpush.bf16.msra.mxu0 %v2472
    %3609 = vmatmul.bf16.gmra.mxu0 %v665
    %v3610 = vpop.f32.mrf.mxu0
    %v3611 = vadd.f32 %v3598, %v3610
    %v3612 = vpop.f32.mrf.mxu0
    %3613 = vdwg.mxu0
    %3614 = vmatpush.bf16.msra.mxu0 %v2592
    %3615 = vmatpush.bf16.msra.mxu0 %v2584
    %3616 = vmatpush.bf16.msra.mxu0 %v2576
    %3617 = vmatpush.bf16.msra.mxu0 %v2568
    %3618 = vmatpush.bf16.msra.mxu0 %v2560
    %3619 = vmatpush.bf16.msra.mxu0 %v2552
    %3620 = vmatpush.bf16.msra.mxu0 %v2544
    %3621 = vmatpush.bf16.msra.mxu0 %v2536
    %3622 = vmatmul.bf16.gmra.mxu0 %v666
    %v3623 = vpop.f32.mrf.mxu0
    %v3624 = vadd.f32 %v3611, %v3623
    %v3625 = vpop.f32.mrf.mxu0
    %3626 = vdwg.mxu0
    %3627 = vmatpush.bf16.msra.mxu0 %v2656
    %3628 = vmatpush.bf16.msra.mxu0 %v2648
    %3629 = vmatpush.bf16.msra.mxu0 %v2640
    %3630 = vmatpush.bf16.msra.mxu0 %v2632
    %3631 = vmatpush.bf16.msra.mxu0 %v2624
    %3632 = vmatpush.bf16.msra.mxu0 %v2616
    %3633 = vmatpush.bf16.msra.mxu0 %v2608
    %3634 = vmatpush.bf16.msra.mxu0 %v2600
    %3635 = vmatmul.bf16.gmra.mxu0 %v667
    %v3636 = vpop.f32.mrf.mxu0
    %v3637 = vadd.f32 %v3624, %v3636
    %v3638 = vpop.f32.mrf.mxu0
    %3639 = vdwg.mxu0
    %3640 = vmatpush.bf16.msra.mxu0 %v2720
    %3641 = vmatpush.bf16.msra.mxu0 %v2712
    %3642 = vmatpush.bf16.msra.mxu0 %v2704
    %3643 = vmatpush.bf16.msra.mxu0 %v2696
    %3644 = vmatpush.bf16.msra.mxu0 %v2688
    %3645 = vmatpush.bf16.msra.mxu0 %v2680
    %3646 = vmatpush.bf16.msra.mxu0 %v2672
    %3647 = vmatpush.bf16.msra.mxu0 %v2664
    %3648 = vmatmul.bf16.gmra.mxu0 %v668
    %v3649 = vpop.f32.mrf.mxu0
    %v3650 = vadd.f32 %v3637, %v3649
    %v3651 = vpop.f32.mrf.mxu0
    %3652 = vdwg.mxu0
    %3653 = vmatpush.bf16.msra.mxu0 %v2273
    %3654 = vmatpush.bf16.msra.mxu0 %v2265
    %3655 = vmatpush.bf16.msra.mxu0 %v2257
    %3656 = vmatpush.bf16.msra.mxu0 %v2249
    %3657 = vmatpush.bf16.msra.mxu0 %v2241
    %3658 = vmatpush.bf16.msra.mxu0 %v2233
    %3659 = vmatpush.bf16.msra.mxu0 %v2225
    %3660 = vmatpush.bf16.msra.mxu0 %v2217
    %3661 = vmatmul.bf16.gmra.mxu0 %v661
    %v3662 = vpop.f32.mrf.mxu0
    %v3663 = vadd.f32 %v647, %v3662
    %v3664 = vpop.f32.mrf.mxu0
    %3665 = vdwg.mxu0
    %3666 = vmatpush.bf16.msra.mxu0 %v2337
    %3667 = vmatpush.bf16.msra.mxu0 %v2329
    %3668 = vmatpush.bf16.msra.mxu0 %v2321
    %3669 = vmatpush.bf16.msra.mxu0 %v2313
    %3670 = vmatpush.bf16.msra.mxu0 %v2305
    %3671 = vmatpush.bf16.msra.mxu0 %v2297
    %3672 = vmatpush.bf16.msra.mxu0 %v2289
    %3673 = vmatpush.bf16.msra.mxu0 %v2281
    %3674 = vmatmul.bf16.gmra.mxu0 %v662
    %v3675 = vpop.f32.mrf.mxu0
    %v3676 = vadd.f32 %v3663, %v3675
    %v3677 = vpop.f32.mrf.mxu0
    %3678 = vdwg.mxu0
    %3679 = vmatpush.bf16.msra.mxu0 %v2401
    %3680 = vmatpush.bf16.msra.mxu0 %v2393
    %3681 = vmatpush.bf16.msra.mxu0 %v2385
    %3682 = vmatpush.bf16.msra.mxu0 %v2377
    %3683 = vmatpush.bf16.msra.mxu0 %v2369
    %3684 = vmatpush.bf16.msra.mxu0 %v2361
    %3685 = vmatpush.bf16.msra.mxu0 %v2353
    %3686 = vmatpush.bf16.msra.mxu0 %v2345
    %3687 = vmatmul.bf16.gmra.mxu0 %v663
    %v3688 = vpop.f32.mrf.mxu0
    %v3689 = vadd.f32 %v3676, %v3688
    %v3690 = vpop.f32.mrf.mxu0
    %3691 = vdwg.mxu0
    %3692 = vmatpush.bf16.msra.mxu0 %v2465
    %3693 = vmatpush.bf16.msra.mxu0 %v2457
    %3694 = vmatpush.bf16.msra.mxu0 %v2449
    %3695 = vmatpush.bf16.msra.mxu0 %v2441
    %3696 = vmatpush.bf16.msra.mxu0 %v2433
    %3697 = vmatpush.bf16.msra.mxu0 %v2425
    %3698 = vmatpush.bf16.msra.mxu0 %v2417
    %3699 = vmatpush.bf16.msra.mxu0 %v2409
    %3700 = vmatmul.bf16.gmra.mxu0 %v664
    %v3701 = vpop.f32.mrf.mxu0
    %v3702 = vadd.f32 %v3689, %v3701
    %v3703 = vpop.f32.mrf.mxu0
    %3704 = vdwg.mxu0
    %3705 = vmatpush.bf16.msra.mxu0 %v2529
    %3706 = vmatpush.bf16.msra.mxu0 %v2521
    %3707 = vmatpush.bf16.msra.mxu0 %v2513
    %3708 = vmatpush.bf16.msra.mxu0 %v2505
    %3709 = vmatpush.bf16.msra.mxu0 %v2497
    %3710 = vmatpush.bf16.msra.mxu0 %v2489
    %3711 = vmatpush.bf16.msra.mxu0 %v2481
    %3712 = vmatpush.bf16.msra.mxu0 %v2473
    %3713 = vmatmul.bf16.gmra.mxu0 %v665
    %v3714 = vpop.f32.mrf.mxu0
    %v3715 = vadd.f32 %v3702, %v3714
    %v3716 = vpop.f32.mrf.mxu0
    %3717 = vdwg.mxu0
    %3718 = vmatpush.bf16.msra.mxu0 %v2593
    %3719 = vmatpush.bf16.msra.mxu0 %v2585
    %3720 = vmatpush.bf16.msra.mxu0 %v2577
    %3721 = vmatpush.bf16.msra.mxu0 %v2569
    %3722 = vmatpush.bf16.msra.mxu0 %v2561
    %3723 = vmatpush.bf16.msra.mxu0 %v2553
    %3724 = vmatpush.bf16.msra.mxu0 %v2545
    %3725 = vmatpush.bf16.msra.mxu0 %v2537
    %3726 = vmatmul.bf16.gmra.mxu0 %v666
    %v3727 = vpop.f32.mrf.mxu0
    %v3728 = vadd.f32 %v3715, %v3727
    %v3729 = vpop.f32.mrf.mxu0
    %3730 = vdwg.mxu0
    %3731 = vmatpush.bf16.msra.mxu0 %v2657
    %3732 = vmatpush.bf16.msra.mxu0 %v2649
    %3733 = vmatpush.bf16.msra.mxu0 %v2641
    %3734 = vmatpush.bf16.msra.mxu0 %v2633
    %3735 = vmatpush.bf16.msra.mxu0 %v2625
    %3736 = vmatpush.bf16.msra.mxu0 %v2617
    %3737 = vmatpush.bf16.msra.mxu0 %v2609
    %3738 = vmatpush.bf16.msra.mxu0 %v2601
    %3739 = vmatmul.bf16.gmra.mxu0 %v667
    %v3740 = vpop.f32.mrf.mxu0
    %v3741 = vadd.f32 %v3728, %v3740
    %v3742 = vpop.f32.mrf.mxu0
    %3743 = vdwg.mxu0
    %3744 = vmatpush.bf16.msra.mxu0 %v2721
    %3745 = vmatpush.bf16.msra.mxu0 %v2713
    %3746 = vmatpush.bf16.msra.mxu0 %v2705
    %3747 = vmatpush.bf16.msra.mxu0 %v2697
    %3748 = vmatpush.bf16.msra.mxu0 %v2689
    %3749 = vmatpush.bf16.msra.mxu0 %v2681
    %3750 = vmatpush.bf16.msra.mxu0 %v2673
    %3751 = vmatpush.bf16.msra.mxu0 %v2665
    %3752 = vmatmul.bf16.gmra.mxu0 %v668
    %v3753 = vpop.f32.mrf.mxu0
    %v3754 = vadd.f32 %v3741, %v3753
    %v3755 = vpop.f32.mrf.mxu0
    %3756 = vdwg.mxu0
    %3757 = vmatpush.bf16.msra.mxu0 %v2274
    %3758 = vmatpush.bf16.msra.mxu0 %v2266
    %3759 = vmatpush.bf16.msra.mxu0 %v2258
    %3760 = vmatpush.bf16.msra.mxu0 %v2250
    %3761 = vmatpush.bf16.msra.mxu0 %v2242
    %3762 = vmatpush.bf16.msra.mxu0 %v2234
    %3763 = vmatpush.bf16.msra.mxu0 %v2226
    %3764 = vmatpush.bf16.msra.mxu0 %v2218
    %3765 = vmatmul.bf16.gmra.mxu0 %v661
    %v3766 = vpop.f32.mrf.mxu0
    %v3767 = vadd.f32 %v648, %v3766
    %v3768 = vpop.f32.mrf.mxu0
    %3769 = vdwg.mxu0
    %3770 = vmatpush.bf16.msra.mxu0 %v2338
    %3771 = vmatpush.bf16.msra.mxu0 %v2330
    %3772 = vmatpush.bf16.msra.mxu0 %v2322
    %3773 = vmatpush.bf16.msra.mxu0 %v2314
    %3774 = vmatpush.bf16.msra.mxu0 %v2306
    %3775 = vmatpush.bf16.msra.mxu0 %v2298
    %3776 = vmatpush.bf16.msra.mxu0 %v2290
    %3777 = vmatpush.bf16.msra.mxu0 %v2282
    %3778 = vmatmul.bf16.gmra.mxu0 %v662
    %v3779 = vpop.f32.mrf.mxu0
    %v3780 = vadd.f32 %v3767, %v3779
    %v3781 = vpop.f32.mrf.mxu0
    %3782 = vdwg.mxu0
    %3783 = vmatpush.bf16.msra.mxu0 %v2402
    %3784 = vmatpush.bf16.msra.mxu0 %v2394
    %3785 = vmatpush.bf16.msra.mxu0 %v2386
    %3786 = vmatpush.bf16.msra.mxu0 %v2378
    %3787 = vmatpush.bf16.msra.mxu0 %v2370
    %3788 = vmatpush.bf16.msra.mxu0 %v2362
    %3789 = vmatpush.bf16.msra.mxu0 %v2354
    %3790 = vmatpush.bf16.msra.mxu0 %v2346
    %3791 = vmatmul.bf16.gmra.mxu0 %v663
    %v3792 = vpop.f32.mrf.mxu0
    %v3793 = vadd.f32 %v3780, %v3792
    %v3794 = vpop.f32.mrf.mxu0
    %3795 = vdwg.mxu0
    %3796 = vmatpush.bf16.msra.mxu0 %v2466
    %3797 = vmatpush.bf16.msra.mxu0 %v2458
    %3798 = vmatpush.bf16.msra.mxu0 %v2450
    %3799 = vmatpush.bf16.msra.mxu0 %v2442
    %3800 = vmatpush.bf16.msra.mxu0 %v2434
    %3801 = vmatpush.bf16.msra.mxu0 %v2426
    %3802 = vmatpush.bf16.msra.mxu0 %v2418
    %3803 = vmatpush.bf16.msra.mxu0 %v2410
    %3804 = vmatmul.bf16.gmra.mxu0 %v664
    %v3805 = vpop.f32.mrf.mxu0
    %v3806 = vadd.f32 %v3793, %v3805
    %v3807 = vpop.f32.mrf.mxu0
    %3808 = vdwg.mxu0
    %3809 = vmatpush.bf16.msra.mxu0 %v2530
    %3810 = vmatpush.bf16.msra.mxu0 %v2522
    %3811 = vmatpush.bf16.msra.mxu0 %v2514
    %3812 = vmatpush.bf16.msra.mxu0 %v2506
    %3813 = vmatpush.bf16.msra.mxu0 %v2498
    %3814 = vmatpush.bf16.msra.mxu0 %v2490
    %3815 = vmatpush.bf16.msra.mxu0 %v2482
    %3816 = vmatpush.bf16.msra.mxu0 %v2474
    %3817 = vmatmul.bf16.gmra.mxu0 %v665
    %v3818 = vpop.f32.mrf.mxu0
    %v3819 = vadd.f32 %v3806, %v3818
    %v3820 = vpop.f32.mrf.mxu0
    %3821 = vdwg.mxu0
    %3822 = vmatpush.bf16.msra.mxu0 %v2594
    %3823 = vmatpush.bf16.msra.mxu0 %v2586
    %3824 = vmatpush.bf16.msra.mxu0 %v2578
    %3825 = vmatpush.bf16.msra.mxu0 %v2570
    %3826 = vmatpush.bf16.msra.mxu0 %v2562
    %3827 = vmatpush.bf16.msra.mxu0 %v2554
    %3828 = vmatpush.bf16.msra.mxu0 %v2546
    %3829 = vmatpush.bf16.msra.mxu0 %v2538
    %3830 = vmatmul.bf16.gmra.mxu0 %v666
    %v3831 = vpop.f32.mrf.mxu0
    %v3832 = vadd.f32 %v3819, %v3831
    %v3833 = vpop.f32.mrf.mxu0
    %3834 = vdwg.mxu0
    %3835 = vmatpush.bf16.msra.mxu0 %v2658
    %3836 = vmatpush.bf16.msra.mxu0 %v2650
    %3837 = vmatpush.bf16.msra.mxu0 %v2642
    %3838 = vmatpush.bf16.msra.mxu0 %v2634
    %3839 = vmatpush.bf16.msra.mxu0 %v2626
    %3840 = vmatpush.bf16.msra.mxu0 %v2618
    %3841 = vmatpush.bf16.msra.mxu0 %v2610
    %3842 = vmatpush.bf16.msra.mxu0 %v2602
    %3843 = vmatmul.bf16.gmra.mxu0 %v667
    %v3844 = vpop.f32.mrf.mxu0
    %v3845 = vadd.f32 %v3832, %v3844
    %v3846 = vpop.f32.mrf.mxu0
    %3847 = vdwg.mxu0
    %3848 = vmatpush.bf16.msra.mxu0 %v2722
    %3849 = vmatpush.bf16.msra.mxu0 %v2714
    %3850 = vmatpush.bf16.msra.mxu0 %v2706
    %3851 = vmatpush.bf16.msra.mxu0 %v2698
    %3852 = vmatpush.bf16.msra.mxu0 %v2690
    %3853 = vmatpush.bf16.msra.mxu0 %v2682
    %3854 = vmatpush.bf16.msra.mxu0 %v2674
    %3855 = vmatpush.bf16.msra.mxu0 %v2666
    %3856 = vmatmul.bf16.gmra.mxu0 %v668
    %v3857 = vpop.f32.mrf.mxu0
    %v3858 = vadd.f32 %v3845, %v3857
    %v3859 = vpop.f32.mrf.mxu0
    %3860 = vdwg.mxu0
    %3861 = vmatpush.bf16.msra.mxu0 %v2275
    %3862 = vmatpush.bf16.msra.mxu0 %v2267
    %3863 = vmatpush.bf16.msra.mxu0 %v2259
    %3864 = vmatpush.bf16.msra.mxu0 %v2251
    %3865 = vmatpush.bf16.msra.mxu0 %v2243
    %3866 = vmatpush.bf16.msra.mxu0 %v2235
    %3867 = vmatpush.bf16.msra.mxu0 %v2227
    %3868 = vmatpush.bf16.msra.mxu0 %v2219
    %3869 = vmatmul.bf16.gmra.mxu0 %v661
    %v3870 = vpop.f32.mrf.mxu0
    %v3871 = vadd.f32 %v649, %v3870
    %v3872 = vpop.f32.mrf.mxu0
    %3873 = vdwg.mxu0
    %3874 = vmatpush.bf16.msra.mxu0 %v2339
    %3875 = vmatpush.bf16.msra.mxu0 %v2331
    %3876 = vmatpush.bf16.msra.mxu0 %v2323
    %3877 = vmatpush.bf16.msra.mxu0 %v2315
    %3878 = vmatpush.bf16.msra.mxu0 %v2307
    %3879 = vmatpush.bf16.msra.mxu0 %v2299
    %3880 = vmatpush.bf16.msra.mxu0 %v2291
    %3881 = vmatpush.bf16.msra.mxu0 %v2283
    %3882 = vmatmul.bf16.gmra.mxu0 %v662
    %v3883 = vpop.f32.mrf.mxu0
    %v3884 = vadd.f32 %v3871, %v3883
    %v3885 = vpop.f32.mrf.mxu0
    %3886 = vdwg.mxu0
    %3887 = vmatpush.bf16.msra.mxu0 %v2403
    %3888 = vmatpush.bf16.msra.mxu0 %v2395
    %3889 = vmatpush.bf16.msra.mxu0 %v2387
    %3890 = vmatpush.bf16.msra.mxu0 %v2379
    %3891 = vmatpush.bf16.msra.mxu0 %v2371
    %3892 = vmatpush.bf16.msra.mxu0 %v2363
    %3893 = vmatpush.bf16.msra.mxu0 %v2355
    %3894 = vmatpush.bf16.msra.mxu0 %v2347
    %3895 = vmatmul.bf16.gmra.mxu0 %v663
    %v3896 = vpop.f32.mrf.mxu0
    %v3897 = vadd.f32 %v3884, %v3896
    %v3898 = vpop.f32.mrf.mxu0
    %3899 = vdwg.mxu0
    %3900 = vmatpush.bf16.msra.mxu0 %v2467
    %3901 = vmatpush.bf16.msra.mxu0 %v2459
    %3902 = vmatpush.bf16.msra.mxu0 %v2451
    %3903 = vmatpush.bf16.msra.mxu0 %v2443
    %3904 = vmatpush.bf16.msra.mxu0 %v2435
    %3905 = vmatpush.bf16.msra.mxu0 %v2427
    %3906 = vmatpush.bf16.msra.mxu0 %v2419
    %3907 = vmatpush.bf16.msra.mxu0 %v2411
    %3908 = vmatmul.bf16.gmra.mxu0 %v664
    %v3909 = vpop.f32.mrf.mxu0
    %v3910 = vadd.f32 %v3897, %v3909
    %v3911 = vpop.f32.mrf.mxu0
    %3912 = vdwg.mxu0
    %3913 = vmatpush.bf16.msra.mxu0 %v2531
    %3914 = vmatpush.bf16.msra.mxu0 %v2523
    %3915 = vmatpush.bf16.msra.mxu0 %v2515
    %3916 = vmatpush.bf16.msra.mxu0 %v2507
    %3917 = vmatpush.bf16.msra.mxu0 %v2499
    %3918 = vmatpush.bf16.msra.mxu0 %v2491
    %3919 = vmatpush.bf16.msra.mxu0 %v2483
    %3920 = vmatpush.bf16.msra.mxu0 %v2475
    %3921 = vmatmul.bf16.gmra.mxu0 %v665
    %v3922 = vpop.f32.mrf.mxu0
    %v3923 = vadd.f32 %v3910, %v3922
    %v3924 = vpop.f32.mrf.mxu0
    %3925 = vdwg.mxu0
    %3926 = vmatpush.bf16.msra.mxu0 %v2595
    %3927 = vmatpush.bf16.msra.mxu0 %v2587
    %3928 = vmatpush.bf16.msra.mxu0 %v2579
    %3929 = vmatpush.bf16.msra.mxu0 %v2571
    %3930 = vmatpush.bf16.msra.mxu0 %v2563
    %3931 = vmatpush.bf16.msra.mxu0 %v2555
    %3932 = vmatpush.bf16.msra.mxu0 %v2547
    %3933 = vmatpush.bf16.msra.mxu0 %v2539
    %3934 = vmatmul.bf16.gmra.mxu0 %v666
    %v3935 = vpop.f32.mrf.mxu0
    %v3936 = vadd.f32 %v3923, %v3935
    %v3937 = vpop.f32.mrf.mxu0
    %3938 = vdwg.mxu0
    %3939 = vmatpush.bf16.msra.mxu0 %v2659
    %3940 = vmatpush.bf16.msra.mxu0 %v2651
    %3941 = vmatpush.bf16.msra.mxu0 %v2643
    %3942 = vmatpush.bf16.msra.mxu0 %v2635
    %3943 = vmatpush.bf16.msra.mxu0 %v2627
    %3944 = vmatpush.bf16.msra.mxu0 %v2619
    %3945 = vmatpush.bf16.msra.mxu0 %v2611
    %3946 = vmatpush.bf16.msra.mxu0 %v2603
    %3947 = vmatmul.bf16.gmra.mxu0 %v667
    %v3948 = vpop.f32.mrf.mxu0
    %v3949 = vadd.f32 %v3936, %v3948
    %v3950 = vpop.f32.mrf.mxu0
    %3951 = vdwg.mxu0
    %3952 = vmatpush.bf16.msra.mxu0 %v2723
    %3953 = vmatpush.bf16.msra.mxu0 %v2715
    %3954 = vmatpush.bf16.msra.mxu0 %v2707
    %3955 = vmatpush.bf16.msra.mxu0 %v2699
    %3956 = vmatpush.bf16.msra.mxu0 %v2691
    %3957 = vmatpush.bf16.msra.mxu0 %v2683
    %3958 = vmatpush.bf16.msra.mxu0 %v2675
    %3959 = vmatpush.bf16.msra.mxu0 %v2667
    %3960 = vmatmul.bf16.gmra.mxu0 %v668
    %v3961 = vpop.f32.mrf.mxu0
    %v3962 = vadd.f32 %v3949, %v3961
    %v3963 = vpop.f32.mrf.mxu0
    %3964 = vdwg.mxu0
    %3965 = vmatpush.bf16.msra.mxu0 %v2276
    %3966 = vmatpush.bf16.msra.mxu0 %v2268
    %3967 = vmatpush.bf16.msra.mxu0 %v2260
    %3968 = vmatpush.bf16.msra.mxu0 %v2252
    %3969 = vmatpush.bf16.msra.mxu0 %v2244
    %3970 = vmatpush.bf16.msra.mxu0 %v2236
    %3971 = vmatpush.bf16.msra.mxu0 %v2228
    %3972 = vmatpush.bf16.msra.mxu0 %v2220
    %3973 = vmatmul.bf16.gmra.mxu0 %v661
    %v3974 = vpop.f32.mrf.mxu0
    %v3975 = vadd.f32 %v650, %v3974
    %v3976 = vpop.f32.mrf.mxu0
    %3977 = vdwg.mxu0
    %3978 = vmatpush.bf16.msra.mxu0 %v2340
    %3979 = vmatpush.bf16.msra.mxu0 %v2332
    %3980 = vmatpush.bf16.msra.mxu0 %v2324
    %3981 = vmatpush.bf16.msra.mxu0 %v2316
    %3982 = vmatpush.bf16.msra.mxu0 %v2308
    %3983 = vmatpush.bf16.msra.mxu0 %v2300
    %3984 = vmatpush.bf16.msra.mxu0 %v2292
    %3985 = vmatpush.bf16.msra.mxu0 %v2284
    %3986 = vmatmul.bf16.gmra.mxu0 %v662
    %v3987 = vpop.f32.mrf.mxu0
    %v3988 = vadd.f32 %v3975, %v3987
    %v3989 = vpop.f32.mrf.mxu0
    %3990 = vdwg.mxu0
    %3991 = vmatpush.bf16.msra.mxu0 %v2404
    %3992 = vmatpush.bf16.msra.mxu0 %v2396
    %3993 = vmatpush.bf16.msra.mxu0 %v2388
    %3994 = vmatpush.bf16.msra.mxu0 %v2380
    %3995 = vmatpush.bf16.msra.mxu0 %v2372
    %3996 = vmatpush.bf16.msra.mxu0 %v2364
    %3997 = vmatpush.bf16.msra.mxu0 %v2356
    %3998 = vmatpush.bf16.msra.mxu0 %v2348
    %3999 = vmatmul.bf16.gmra.mxu0 %v663
    %v4000 = vpop.f32.mrf.mxu0
    %v4001 = vadd.f32 %v3988, %v4000
    %v4002 = vpop.f32.mrf.mxu0
    %4003 = vdwg.mxu0
    %4004 = vmatpush.bf16.msra.mxu0 %v2468
    %4005 = vmatpush.bf16.msra.mxu0 %v2460
    %4006 = vmatpush.bf16.msra.mxu0 %v2452
    %4007 = vmatpush.bf16.msra.mxu0 %v2444
    %4008 = vmatpush.bf16.msra.mxu0 %v2436
    %4009 = vmatpush.bf16.msra.mxu0 %v2428
    %4010 = vmatpush.bf16.msra.mxu0 %v2420
    %4011 = vmatpush.bf16.msra.mxu0 %v2412
    %4012 = vmatmul.bf16.gmra.mxu0 %v664
    %v4013 = vpop.f32.mrf.mxu0
    %v4014 = vadd.f32 %v4001, %v4013
    %v4015 = vpop.f32.mrf.mxu0
    %4016 = vdwg.mxu0
    %4017 = vmatpush.bf16.msra.mxu0 %v2532
    %4018 = vmatpush.bf16.msra.mxu0 %v2524
    %4019 = vmatpush.bf16.msra.mxu0 %v2516
    %4020 = vmatpush.bf16.msra.mxu0 %v2508
    %4021 = vmatpush.bf16.msra.mxu0 %v2500
    %4022 = vmatpush.bf16.msra.mxu0 %v2492
    %4023 = vmatpush.bf16.msra.mxu0 %v2484
    %4024 = vmatpush.bf16.msra.mxu0 %v2476
    %4025 = vmatmul.bf16.gmra.mxu0 %v665
    %v4026 = vpop.f32.mrf.mxu0
    %v4027 = vadd.f32 %v4014, %v4026
    %v4028 = vpop.f32.mrf.mxu0
    %4029 = vdwg.mxu0
    %4030 = vmatpush.bf16.msra.mxu0 %v2596
    %4031 = vmatpush.bf16.msra.mxu0 %v2588
    %4032 = vmatpush.bf16.msra.mxu0 %v2580
    %4033 = vmatpush.bf16.msra.mxu0 %v2572
    %4034 = vmatpush.bf16.msra.mxu0 %v2564
    %4035 = vmatpush.bf16.msra.mxu0 %v2556
    %4036 = vmatpush.bf16.msra.mxu0 %v2548
    %4037 = vmatpush.bf16.msra.mxu0 %v2540
    %4038 = vmatmul.bf16.gmra.mxu0 %v666
    %v4039 = vpop.f32.mrf.mxu0
    %v4040 = vadd.f32 %v4027, %v4039
    %v4041 = vpop.f32.mrf.mxu0
    %4042 = vdwg.mxu0
    %4043 = vmatpush.bf16.msra.mxu0 %v2660
    %4044 = vmatpush.bf16.msra.mxu0 %v2652
    %4045 = vmatpush.bf16.msra.mxu0 %v2644
    %4046 = vmatpush.bf16.msra.mxu0 %v2636
    %4047 = vmatpush.bf16.msra.mxu0 %v2628
    %4048 = vmatpush.bf16.msra.mxu0 %v2620
    %4049 = vmatpush.bf16.msra.mxu0 %v2612
    %4050 = vmatpush.bf16.msra.mxu0 %v2604
    %4051 = vmatmul.bf16.gmra.mxu0 %v667
    %v4052 = vpop.f32.mrf.mxu0
    %v4053 = vadd.f32 %v4040, %v4052
    %v4054 = vpop.f32.mrf.mxu0
    %4055 = vdwg.mxu0
    %4056 = vmatpush.bf16.msra.mxu0 %v2724
    %4057 = vmatpush.bf16.msra.mxu0 %v2716
    %4058 = vmatpush.bf16.msra.mxu0 %v2708
    %4059 = vmatpush.bf16.msra.mxu0 %v2700
    %4060 = vmatpush.bf16.msra.mxu0 %v2692
    %4061 = vmatpush.bf16.msra.mxu0 %v2684
    %4062 = vmatpush.bf16.msra.mxu0 %v2676
    %4063 = vmatpush.bf16.msra.mxu0 %v2668
    %4064 = vmatmul.bf16.gmra.mxu0 %v668
    %v4065 = vpop.f32.mrf.mxu0
    %v4066 = vadd.f32 %v4053, %v4065
    %v4067 = vpop.f32.mrf.mxu0
    %4068 = vdwg.mxu0
    %v4069 = vmax.f32 %v3338, 0.0
    %v4070 = vmax.f32 %v3442, 0.0
    %v4071 = vmax.f32 %v3546, 0.0
    %v4072 = vmax.f32 %v3650, 0.0
    %v4073 = vmax.f32 %v3754, 0.0
    %v4074 = vmax.f32 %v3858, 0.0
    %v4075 = vmax.f32 %v3962, 0.0
    %v4076 = vmax.f32 %v4066, 0.0
    %v4077 = vpack.c.bf16 %v4069, %v4069
    %v4078 = vpack.c.bf16 %v4070, %v4070
    %v4079 = vpack.c.bf16 %v4071, %v4071
    %v4080 = vpack.c.bf16 %v4072, %v4072
    %v4081 = vpack.c.bf16 %v4073, %v4073
    %v4082 = vpack.c.bf16 %v4074, %v4074
    %v4083 = vpack.c.bf16 %v4075, %v4075
    %v4084 = vpack.c.bf16 %v4076, %v4076
    %v4085 = vld [vmem:[#allocation8] sm:$0xff]
    %v4086 = vld [vmem:[#allocation8 + $0x8] sm:$0xff]
    %v4087 = vld [vmem:[#allocation8 + $0x10] sm:$0xff]
    %v4088 = vld [vmem:[#allocation8 + $0x18] sm:$0xff]
    %v4089 = vld [vmem:[#allocation8 + $0x20] sm:$0xff]
    %v4090 = vld [vmem:[#allocation8 + $0x28] sm:$0xff]
    %v4091 = vld [vmem:[#allocation8 + $0x30] sm:$0xff]
    %v4092 = vld [vmem:[#allocation8 + $0x38] sm:$0xff]
    %v4093 = vld [vmem:[#allocation8 + $0x40] sm:$0xff]
    %v4094 = vld [vmem:[#allocation8 + $0x48] sm:$0xff]
    %v4095 = vld [vmem:[#allocation8 + $0x50] sm:$0xff]
    %v4096 = vld [vmem:[#allocation8 + $0x58] sm:$0xff]
    %v4097 = vld [vmem:[#allocation8 + $0x60] sm:$0xff]
    %v4098 = vld [vmem:[#allocation8 + $0x68] sm:$0xff]
    %v4099 = vld [vmem:[#allocation8 + $0x70] sm:$0xff]
    %v4100 = vld [vmem:[#allocation8 + $0x78] sm:$0xff]
    %v4101 = vld [vmem:[#allocation8 + $0x80] sm:$0xff]
    %v4102 = vld [vmem:[#allocation8 + $0x88] sm:$0xff]
    %v4103 = vld [vmem:[#allocation8 + $0x90] sm:$0xff]
    %v4104 = vld [vmem:[#allocation8 + $0x98] sm:$0xff]
    %v4105 = vld [vmem:[#allocation8 + $0xa0] sm:$0xff]
    %v4106 = vld [vmem:[#allocation8 + $0xa8] sm:$0xff]
    %v4107 = vld [vmem:[#allocation8 + $0xb0] sm:$0xff]
    %v4108 = vld [vmem:[#allocation8 + $0xb8] sm:$0xff]
    %v4109 = vld [vmem:[#allocation8 + $0xc0] sm:$0xff]
    %v4110 = vld [vmem:[#allocation8 + $0xc8] sm:$0xff]
    %v4111 = vld [vmem:[#allocation8 + $0xd0] sm:$0xff]
    %v4112 = vld [vmem:[#allocation8 + $0xd8] sm:$0xff]
    %v4113 = vld [vmem:[#allocation8 + $0xe0] sm:$0xff]
    %v4114 = vld [vmem:[#allocation8 + $0xe8] sm:$0xff]
    %v4115 = vld [vmem:[#allocation8 + $0xf0] sm:$0xff]
    %v4116 = vld [vmem:[#allocation8 + $0xf8] sm:$0xff]
    %v4117 = vld [vmem:[#allocation8 + $0x100] sm:$0xff]
    %v4118 = vld [vmem:[#allocation8 + $0x108] sm:$0xff]
    %v4119 = vld [vmem:[#allocation8 + $0x110] sm:$0xff]
    %v4120 = vld [vmem:[#allocation8 + $0x118] sm:$0xff]
    %v4121 = vld [vmem:[#allocation8 + $0x120] sm:$0xff]
    %v4122 = vld [vmem:[#allocation8 + $0x128] sm:$0xff]
    %v4123 = vld [vmem:[#allocation8 + $0x130] sm:$0xff]
    %v4124 = vld [vmem:[#allocation8 + $0x138] sm:$0xff]
    %v4125 = vld [vmem:[#allocation8 + $0x140] sm:$0xff]
    %v4126 = vld [vmem:[#allocation8 + $0x148] sm:$0xff]
    %v4127 = vld [vmem:[#allocation8 + $0x150] sm:$0xff]
    %v4128 = vld [vmem:[#allocation8 + $0x158] sm:$0xff]
    %v4129 = vld [vmem:[#allocation8 + $0x160] sm:$0xff]
    %v4130 = vld [vmem:[#allocation8 + $0x168] sm:$0xff]
    %v4131 = vld [vmem:[#allocation8 + $0x170] sm:$0xff]
    %v4132 = vld [vmem:[#allocation8 + $0x178] sm:$0xff]
    %v4133 = vld [vmem:[#allocation8 + $0x180] sm:$0xff]
    %v4134 = vld [vmem:[#allocation8 + $0x188] sm:$0xff]
    %v4135 = vld [vmem:[#allocation8 + $0x190] sm:$0xff]
    %v4136 = vld [vmem:[#allocation8 + $0x198] sm:$0xff]
    %v4137 = vld [vmem:[#allocation8 + $0x1a0] sm:$0xff]
    %v4138 = vld [vmem:[#allocation8 + $0x1a8] sm:$0xff]
    %v4139 = vld [vmem:[#allocation8 + $0x1b0] sm:$0xff]
    %v4140 = vld [vmem:[#allocation8 + $0x1b8] sm:$0xff]
    %v4141 = vld [vmem:[#allocation8 + $0x1c0] sm:$0xff]
    %v4142 = vld [vmem:[#allocation8 + $0x1c8] sm:$0xff]
    %v4143 = vld [vmem:[#allocation8 + $0x1d0] sm:$0xff]
    %v4144 = vld [vmem:[#allocation8 + $0x1d8] sm:$0xff]
    %v4145 = vld [vmem:[#allocation8 + $0x1e0] sm:$0xff]
    %v4146 = vld [vmem:[#allocation8 + $0x1e8] sm:$0xff]
    %v4147 = vld [vmem:[#allocation8 + $0x1f0] sm:$0xff]
    %v4148 = vld [vmem:[#allocation8 + $0x1f8] sm:$0xff]
    %v4149 = vld [vmem:[#allocation8 + $0x200] sm:$0xff]
    %v4150 = vld [vmem:[#allocation8 + $0x208] sm:$0xff]
    %v4151 = vld [vmem:[#allocation8 + $0x210] sm:$0xff]
    %v4152 = vld [vmem:[#allocation8 + $0x218] sm:$0xff]
    %v4153 = vld [vmem:[#allocation8 + $0x220] sm:$0xff]
    %v4154 = vld [vmem:[#allocation8 + $0x228] sm:$0xff]
    %v4155 = vld [vmem:[#allocation8 + $0x230] sm:$0xff]
    %v4156 = vld [vmem:[#allocation8 + $0x238] sm:$0xff]
    %v4157 = vld [vmem:[#allocation8 + $0x240] sm:$0xff]
    %v4158 = vld [vmem:[#allocation8 + $0x248] sm:$0xff]
    %v4159 = vld [vmem:[#allocation8 + $0x250] sm:$0xff]
    %v4160 = vld [vmem:[#allocation8 + $0x258] sm:$0xff]
    %v4161 = vld [vmem:[#allocation8 + $0x260] sm:$0xff]
    %v4162 = vld [vmem:[#allocation8 + $0x268] sm:$0xff]
    %v4163 = vld [vmem:[#allocation8 + $0x270] sm:$0xff]
    %v4164 = vld [vmem:[#allocation8 + $0x278] sm:$0xff]
    %v4165 = vld [vmem:[#allocation8 + $0x280] sm:$0xff]
    %v4166 = vld [vmem:[#allocation8 + $0x288] sm:$0xff]
    %v4167 = vld [vmem:[#allocation8 + $0x290] sm:$0xff]
    %v4168 = vld [vmem:[#allocation8 + $0x298] sm:$0xff]
    %v4169 = vld [vmem:[#allocation8 + $0x2a0] sm:$0xff]
    %v4170 = vld [vmem:[#allocation8 + $0x2a8] sm:$0xff]
    %v4171 = vld [vmem:[#allocation8 + $0x2b0] sm:$0xff]
    %v4172 = vld [vmem:[#allocation8 + $0x2b8] sm:$0xff]
    %v4173 = vld [vmem:[#allocation8 + $0x2c0] sm:$0xff]
    %v4174 = vld [vmem:[#allocation8 + $0x2c8] sm:$0xff]
    %v4175 = vld [vmem:[#allocation8 + $0x2d0] sm:$0xff]
    %v4176 = vld [vmem:[#allocation8 + $0x2d8] sm:$0xff]
    %v4177 = vld [vmem:[#allocation8 + $0x2e0] sm:$0xff]
    %v4178 = vld [vmem:[#allocation8 + $0x2e8] sm:$0xff]
    %v4179 = vld [vmem:[#allocation8 + $0x2f0] sm:$0xff]
    %v4180 = vld [vmem:[#allocation8 + $0x2f8] sm:$0xff]
    %v4181 = vld [vmem:[#allocation8 + $0x300] sm:$0xff]
    %v4182 = vld [vmem:[#allocation8 + $0x308] sm:$0xff]
    %v4183 = vld [vmem:[#allocation8 + $0x310] sm:$0xff]
    %v4184 = vld [vmem:[#allocation8 + $0x318] sm:$0xff]
    %v4185 = vld [vmem:[#allocation8 + $0x320] sm:$0xff]
    %v4186 = vld [vmem:[#allocation8 + $0x328] sm:$0xff]
    %v4187 = vld [vmem:[#allocation8 + $0x330] sm:$0xff]
    %v4188 = vld [vmem:[#allocation8 + $0x338] sm:$0xff]
    %v4189 = vld [vmem:[#allocation8 + $0x340] sm:$0xff]
    %v4190 = vld [vmem:[#allocation8 + $0x348] sm:$0xff]
    %v4191 = vld [vmem:[#allocation8 + $0x350] sm:$0xff]
    %v4192 = vld [vmem:[#allocation8 + $0x358] sm:$0xff]
    %v4193 = vld [vmem:[#allocation8 + $0x360] sm:$0xff]
    %v4194 = vld [vmem:[#allocation8 + $0x368] sm:$0xff]
    %v4195 = vld [vmem:[#allocation8 + $0x370] sm:$0xff]
    %v4196 = vld [vmem:[#allocation8 + $0x378] sm:$0xff]
    %v4197 = vld [vmem:[#allocation8 + $0x380] sm:$0xff]
    %v4198 = vld [vmem:[#allocation8 + $0x388] sm:$0xff]
    %v4199 = vld [vmem:[#allocation8 + $0x390] sm:$0xff]
    %v4200 = vld [vmem:[#allocation8 + $0x398] sm:$0xff]
    %v4201 = vld [vmem:[#allocation8 + $0x3a0] sm:$0xff]
    %v4202 = vld [vmem:[#allocation8 + $0x3a8] sm:$0xff]
    %v4203 = vld [vmem:[#allocation8 + $0x3b0] sm:$0xff]
    %v4204 = vld [vmem:[#allocation8 + $0x3b8] sm:$0xff]
    %v4205 = vld [vmem:[#allocation8 + $0x3c0] sm:$0xff]
    %v4206 = vld [vmem:[#allocation8 + $0x3c8] sm:$0xff]
    %v4207 = vld [vmem:[#allocation8 + $0x3d0] sm:$0xff]
    %v4208 = vld [vmem:[#allocation8 + $0x3d8] sm:$0xff]
    %v4209 = vld [vmem:[#allocation8 + $0x3e0] sm:$0xff]
    %v4210 = vld [vmem:[#allocation8 + $0x3e8] sm:$0xff]
    %v4211 = vld [vmem:[#allocation8 + $0x3f0] sm:$0xff]
    %v4212 = vld [vmem:[#allocation8 + $0x3f8] sm:$0xff]
    %v4213 = vld [vmem:[#allocation8 + $0x400] sm:$0xff]
    %v4214 = vld [vmem:[#allocation8 + $0x408] sm:$0xff]
    %v4215 = vld [vmem:[#allocation8 + $0x410] sm:$0xff]
    %v4216 = vld [vmem:[#allocation8 + $0x418] sm:$0xff]
    %v4217 = vld [vmem:[#allocation8 + $0x420] sm:$0xff]
    %v4218 = vld [vmem:[#allocation8 + $0x428] sm:$0xff]
    %v4219 = vld [vmem:[#allocation8 + $0x430] sm:$0xff]
    %v4220 = vld [vmem:[#allocation8 + $0x438] sm:$0xff]
    %v4221 = vld [vmem:[#allocation8 + $0x440] sm:$0xff]
    %v4222 = vld [vmem:[#allocation8 + $0x448] sm:$0xff]
    %v4223 = vld [vmem:[#allocation8 + $0x450] sm:$0xff]
    %v4224 = vld [vmem:[#allocation8 + $0x458] sm:$0xff]
    %v4225 = vld [vmem:[#allocation8 + $0x460] sm:$0xff]
    %v4226 = vld [vmem:[#allocation8 + $0x468] sm:$0xff]
    %v4227 = vld [vmem:[#allocation8 + $0x470] sm:$0xff]
    %v4228 = vld [vmem:[#allocation8 + $0x478] sm:$0xff]
    %v4229 = vld [vmem:[#allocation8 + $0x480] sm:$0xff]
    %v4230 = vld [vmem:[#allocation8 + $0x488] sm:$0xff]
    %v4231 = vld [vmem:[#allocation8 + $0x490] sm:$0xff]
    %v4232 = vld [vmem:[#allocation8 + $0x498] sm:$0xff]
    %v4233 = vld [vmem:[#allocation8 + $0x4a0] sm:$0xff]
    %v4234 = vld [vmem:[#allocation8 + $0x4a8] sm:$0xff]
    %v4235 = vld [vmem:[#allocation8 + $0x4b0] sm:$0xff]
    %v4236 = vld [vmem:[#allocation8 + $0x4b8] sm:$0xff]
    %v4237 = vld [vmem:[#allocation8 + $0x4c0] sm:$0xff]
    %v4238 = vld [vmem:[#allocation8 + $0x4c8] sm:$0xff]
    %v4239 = vld [vmem:[#allocation8 + $0x4d0] sm:$0xff]
    %v4240 = vld [vmem:[#allocation8 + $0x4d8] sm:$0xff]
    %v4241 = vld [vmem:[#allocation8 + $0x4e0] sm:$0xff]
    %v4242 = vld [vmem:[#allocation8 + $0x4e8] sm:$0xff]
    %v4243 = vld [vmem:[#allocation8 + $0x4f0] sm:$0xff]
    %v4244 = vld [vmem:[#allocation8 + $0x4f8] sm:$0xff]
    %v4245 = vld [vmem:[#allocation8 + $0x500] sm:$0xff]
    %v4246 = vld [vmem:[#allocation8 + $0x508] sm:$0xff]
    %v4247 = vld [vmem:[#allocation8 + $0x510] sm:$0xff]
    %v4248 = vld [vmem:[#allocation8 + $0x518] sm:$0xff]
    %v4249 = vld [vmem:[#allocation8 + $0x520] sm:$0xff]
    %v4250 = vld [vmem:[#allocation8 + $0x528] sm:$0xff]
    %v4251 = vld [vmem:[#allocation8 + $0x530] sm:$0xff]
    %v4252 = vld [vmem:[#allocation8 + $0x538] sm:$0xff]
    %v4253 = vld [vmem:[#allocation8 + $0x540] sm:$0xff]
    %v4254 = vld [vmem:[#allocation8 + $0x548] sm:$0xff]
    %v4255 = vld [vmem:[#allocation8 + $0x550] sm:$0xff]
    %v4256 = vld [vmem:[#allocation8 + $0x558] sm:$0xff]
    %v4257 = vld [vmem:[#allocation8 + $0x560] sm:$0xff]
    %v4258 = vld [vmem:[#allocation8 + $0x568] sm:$0xff]
    %v4259 = vld [vmem:[#allocation8 + $0x570] sm:$0xff]
    %v4260 = vld [vmem:[#allocation8 + $0x578] sm:$0xff]
    %v4261 = vld [vmem:[#allocation8 + $0x580] sm:$0xff]
    %v4262 = vld [vmem:[#allocation8 + $0x588] sm:$0xff]
    %v4263 = vld [vmem:[#allocation8 + $0x590] sm:$0xff]
    %v4264 = vld [vmem:[#allocation8 + $0x598] sm:$0xff]
    %v4265 = vld [vmem:[#allocation8 + $0x5a0] sm:$0xff]
    %v4266 = vld [vmem:[#allocation8 + $0x5a8] sm:$0xff]
    %v4267 = vld [vmem:[#allocation8 + $0x5b0] sm:$0xff]
    %v4268 = vld [vmem:[#allocation8 + $0x5b8] sm:$0xff]
    %v4269 = vld [vmem:[#allocation8 + $0x5c0] sm:$0xff]
    %v4270 = vld [vmem:[#allocation8 + $0x5c8] sm:$0xff]
    %v4271 = vld [vmem:[#allocation8 + $0x5d0] sm:$0xff]
    %v4272 = vld [vmem:[#allocation8 + $0x5d8] sm:$0xff]
    %v4273 = vld [vmem:[#allocation8 + $0x5e0] sm:$0xff]
    %v4274 = vld [vmem:[#allocation8 + $0x5e8] sm:$0xff]
    %v4275 = vld [vmem:[#allocation8 + $0x5f0] sm:$0xff]
    %v4276 = vld [vmem:[#allocation8 + $0x5f8] sm:$0xff]
    %v4277 = vld [vmem:[#allocation8 + $0x600] sm:$0xff]
    %v4278 = vld [vmem:[#allocation8 + $0x608] sm:$0xff]
    %v4279 = vld [vmem:[#allocation8 + $0x610] sm:$0xff]
    %v4280 = vld [vmem:[#allocation8 + $0x618] sm:$0xff]
    %v4281 = vld [vmem:[#allocation8 + $0x620] sm:$0xff]
    %v4282 = vld [vmem:[#allocation8 + $0x628] sm:$0xff]
    %v4283 = vld [vmem:[#allocation8 + $0x630] sm:$0xff]
    %v4284 = vld [vmem:[#allocation8 + $0x638] sm:$0xff]
    %v4285 = vld [vmem:[#allocation8 + $0x640] sm:$0xff]
    %v4286 = vld [vmem:[#allocation8 + $0x648] sm:$0xff]
    %v4287 = vld [vmem:[#allocation8 + $0x650] sm:$0xff]
    %v4288 = vld [vmem:[#allocation8 + $0x658] sm:$0xff]
    %v4289 = vld [vmem:[#allocation8 + $0x660] sm:$0xff]
    %v4290 = vld [vmem:[#allocation8 + $0x668] sm:$0xff]
    %v4291 = vld [vmem:[#allocation8 + $0x670] sm:$0xff]
    %v4292 = vld [vmem:[#allocation8 + $0x678] sm:$0xff]
    %v4293 = vld [vmem:[#allocation8 + $0x680] sm:$0xff]
    %v4294 = vld [vmem:[#allocation8 + $0x688] sm:$0xff]
    %v4295 = vld [vmem:[#allocation8 + $0x690] sm:$0xff]
    %v4296 = vld [vmem:[#allocation8 + $0x698] sm:$0xff]
    %v4297 = vld [vmem:[#allocation8 + $0x6a0] sm:$0xff]
    %v4298 = vld [vmem:[#allocation8 + $0x6a8] sm:$0xff]
    %v4299 = vld [vmem:[#allocation8 + $0x6b0] sm:$0xff]
    %v4300 = vld [vmem:[#allocation8 + $0x6b8] sm:$0xff]
    %v4301 = vld [vmem:[#allocation8 + $0x6c0] sm:$0xff]
    %v4302 = vld [vmem:[#allocation8 + $0x6c8] sm:$0xff]
    %v4303 = vld [vmem:[#allocation8 + $0x6d0] sm:$0xff]
    %v4304 = vld [vmem:[#allocation8 + $0x6d8] sm:$0xff]
    %v4305 = vld [vmem:[#allocation8 + $0x6e0] sm:$0xff]
    %v4306 = vld [vmem:[#allocation8 + $0x6e8] sm:$0xff]
    %v4307 = vld [vmem:[#allocation8 + $0x6f0] sm:$0xff]
    %v4308 = vld [vmem:[#allocation8 + $0x6f8] sm:$0xff]
    %v4309 = vld [vmem:[#allocation8 + $0x700] sm:$0xff]
    %v4310 = vld [vmem:[#allocation8 + $0x708] sm:$0xff]
    %v4311 = vld [vmem:[#allocation8 + $0x710] sm:$0xff]
    %v4312 = vld [vmem:[#allocation8 + $0x718] sm:$0xff]
    %v4313 = vld [vmem:[#allocation8 + $0x720] sm:$0xff]
    %v4314 = vld [vmem:[#allocation8 + $0x728] sm:$0xff]
    %v4315 = vld [vmem:[#allocation8 + $0x730] sm:$0xff]
    %v4316 = vld [vmem:[#allocation8 + $0x738] sm:$0xff]
    %v4317 = vld [vmem:[#allocation8 + $0x740] sm:$0xff]
    %v4318 = vld [vmem:[#allocation8 + $0x748] sm:$0xff]
    %v4319 = vld [vmem:[#allocation8 + $0x750] sm:$0xff]
    %v4320 = vld [vmem:[#allocation8 + $0x758] sm:$0xff]
    %v4321 = vld [vmem:[#allocation8 + $0x760] sm:$0xff]
    %v4322 = vld [vmem:[#allocation8 + $0x768] sm:$0xff]
    %v4323 = vld [vmem:[#allocation8 + $0x770] sm:$0xff]
    %v4324 = vld [vmem:[#allocation8 + $0x778] sm:$0xff]
    %v4325 = vld [vmem:[#allocation8 + $0x780] sm:$0xff]
    %v4326 = vld [vmem:[#allocation8 + $0x788] sm:$0xff]
    %v4327 = vld [vmem:[#allocation8 + $0x790] sm:$0xff]
    %v4328 = vld [vmem:[#allocation8 + $0x798] sm:$0xff]
    %v4329 = vld [vmem:[#allocation8 + $0x7a0] sm:$0xff]
    %v4330 = vld [vmem:[#allocation8 + $0x7a8] sm:$0xff]
    %v4331 = vld [vmem:[#allocation8 + $0x7b0] sm:$0xff]
    %v4332 = vld [vmem:[#allocation8 + $0x7b8] sm:$0xff]
    %v4333 = vld [vmem:[#allocation8 + $0x7c0] sm:$0xff]
    %v4334 = vld [vmem:[#allocation8 + $0x7c8] sm:$0xff]
    %v4335 = vld [vmem:[#allocation8 + $0x7d0] sm:$0xff]
    %v4336 = vld [vmem:[#allocation8 + $0x7d8] sm:$0xff]
    %v4337 = vld [vmem:[#allocation8 + $0x7e0] sm:$0xff]
    %v4338 = vld [vmem:[#allocation8 + $0x7e8] sm:$0xff]
    %v4339 = vld [vmem:[#allocation8 + $0x7f0] sm:$0xff]
    %v4340 = vld [vmem:[#allocation8 + $0x7f8] sm:$0xff]
    %v4341 = vld [vmem:[#allocation10] sm:$0xf]
    %v4343 = vperm.slane %v4341, 0
    %v4344 = vperm.slane %v4341, 1
    %v4345 = vperm.slane %v4341, 2
    %v4346 = vperm.slane %v4341, 3
    %v4607 = vunpack.c.l.b16 %v4085
    %v4608 = vunpack.c.h.b16 %v4085
    %v4609 = vunpack.c.l.b16 %v4086
    %v4610 = vunpack.c.h.b16 %v4086
    %v4611 = vunpack.c.l.b16 %v4087
    %v4612 = vunpack.c.h.b16 %v4087
    %v4613 = vunpack.c.l.b16 %v4088
    %v4614 = vunpack.c.h.b16 %v4088
    %v4615 = vunpack.c.l.b16 %v4089
    %v4616 = vunpack.c.h.b16 %v4089
    %v4617 = vunpack.c.l.b16 %v4090
    %v4618 = vunpack.c.h.b16 %v4090
    %v4619 = vunpack.c.l.b16 %v4091
    %v4620 = vunpack.c.h.b16 %v4091
    %v4621 = vunpack.c.l.b16 %v4092
    %v4622 = vunpack.c.h.b16 %v4092
    %v4623 = vunpack.c.l.b16 %v4093
    %v4624 = vunpack.c.h.b16 %v4093
    %v4625 = vunpack.c.l.b16 %v4094
    %v4626 = vunpack.c.h.b16 %v4094
    %v4627 = vunpack.c.l.b16 %v4095
    %v4628 = vunpack.c.h.b16 %v4095
    %v4629 = vunpack.c.l.b16 %v4096
    %v4630 = vunpack.c.h.b16 %v4096
    %v4631 = vunpack.c.l.b16 %v4097
    %v4632 = vunpack.c.h.b16 %v4097
    %v4633 = vunpack.c.l.b16 %v4098
    %v4634 = vunpack.c.h.b16 %v4098
    %v4635 = vunpack.c.l.b16 %v4099
    %v4636 = vunpack.c.h.b16 %v4099
    %v4637 = vunpack.c.l.b16 %v4100
    %v4638 = vunpack.c.h.b16 %v4100
    %v4639 = vunpack.c.l.b16 %v4101
    %v4640 = vunpack.c.h.b16 %v4101
    %v4641 = vunpack.c.l.b16 %v4102
    %v4642 = vunpack.c.h.b16 %v4102
    %v4643 = vunpack.c.l.b16 %v4103
    %v4644 = vunpack.c.h.b16 %v4103
    %v4645 = vunpack.c.l.b16 %v4104
    %v4646 = vunpack.c.h.b16 %v4104
    %v4647 = vunpack.c.l.b16 %v4105
    %v4648 = vunpack.c.h.b16 %v4105
    %v4649 = vunpack.c.l.b16 %v4106
    %v4650 = vunpack.c.h.b16 %v4106
    %v4651 = vunpack.c.l.b16 %v4107
    %v4652 = vunpack.c.h.b16 %v4107
    %v4653 = vunpack.c.l.b16 %v4108
    %v4654 = vunpack.c.h.b16 %v4108
    %v4655 = vunpack.c.l.b16 %v4109
    %v4656 = vunpack.c.h.b16 %v4109
    %v4657 = vunpack.c.l.b16 %v4110
    %v4658 = vunpack.c.h.b16 %v4110
    %v4659 = vunpack.c.l.b16 %v4111
    %v4660 = vunpack.c.h.b16 %v4111
    %v4661 = vunpack.c.l.b16 %v4112
    %v4662 = vunpack.c.h.b16 %v4112
    %v4663 = vunpack.c.l.b16 %v4113
    %v4664 = vunpack.c.h.b16 %v4113
    %v4665 = vunpack.c.l.b16 %v4114
    %v4666 = vunpack.c.h.b16 %v4114
    %v4667 = vunpack.c.l.b16 %v4115
    %v4668 = vunpack.c.h.b16 %v4115
    %v4669 = vunpack.c.l.b16 %v4116
    %v4670 = vunpack.c.h.b16 %v4116
    %v4671 = vunpack.c.l.b16 %v4117
    %v4672 = vunpack.c.h.b16 %v4117
    %v4673 = vunpack.c.l.b16 %v4118
    %v4674 = vunpack.c.h.b16 %v4118
    %v4675 = vunpack.c.l.b16 %v4119
    %v4676 = vunpack.c.h.b16 %v4119
    %v4677 = vunpack.c.l.b16 %v4120
    %v4678 = vunpack.c.h.b16 %v4120
    %v4679 = vunpack.c.l.b16 %v4121
    %v4680 = vunpack.c.h.b16 %v4121
    %v4681 = vunpack.c.l.b16 %v4122
    %v4682 = vunpack.c.h.b16 %v4122
    %v4683 = vunpack.c.l.b16 %v4123
    %v4684 = vunpack.c.h.b16 %v4123
    %v4685 = vunpack.c.l.b16 %v4124
    %v4686 = vunpack.c.h.b16 %v4124
    %v4687 = vunpack.c.l.b16 %v4125
    %v4688 = vunpack.c.h.b16 %v4125
    %v4689 = vunpack.c.l.b16 %v4126
    %v4690 = vunpack.c.h.b16 %v4126
    %v4691 = vunpack.c.l.b16 %v4127
    %v4692 = vunpack.c.h.b16 %v4127
    %v4693 = vunpack.c.l.b16 %v4128
    %v4694 = vunpack.c.h.b16 %v4128
    %v4695 = vunpack.c.l.b16 %v4129
    %v4696 = vunpack.c.h.b16 %v4129
    %v4697 = vunpack.c.l.b16 %v4130
    %v4698 = vunpack.c.h.b16 %v4130
    %v4699 = vunpack.c.l.b16 %v4131
    %v4700 = vunpack.c.h.b16 %v4131
    %v4701 = vunpack.c.l.b16 %v4132
    %v4702 = vunpack.c.h.b16 %v4132
    %v4703 = vunpack.c.l.b16 %v4133
    %v4704 = vunpack.c.h.b16 %v4133
    %v4705 = vunpack.c.l.b16 %v4134
    %v4706 = vunpack.c.h.b16 %v4134
    %v4707 = vunpack.c.l.b16 %v4135
    %v4708 = vunpack.c.h.b16 %v4135
    %v4709 = vunpack.c.l.b16 %v4136
    %v4710 = vunpack.c.h.b16 %v4136
    %v4711 = vunpack.c.l.b16 %v4137
    %v4712 = vunpack.c.h.b16 %v4137
    %v4713 = vunpack.c.l.b16 %v4138
    %v4714 = vunpack.c.h.b16 %v4138
    %v4715 = vunpack.c.l.b16 %v4139
    %v4716 = vunpack.c.h.b16 %v4139
    %v4717 = vunpack.c.l.b16 %v4140
    %v4718 = vunpack.c.h.b16 %v4140
    %v4719 = vunpack.c.l.b16 %v4141
    %v4720 = vunpack.c.h.b16 %v4141
    %v4721 = vunpack.c.l.b16 %v4142
    %v4722 = vunpack.c.h.b16 %v4142
    %v4723 = vunpack.c.l.b16 %v4143
    %v4724 = vunpack.c.h.b16 %v4143
    %v4725 = vunpack.c.l.b16 %v4144
    %v4726 = vunpack.c.h.b16 %v4144
    %v4727 = vunpack.c.l.b16 %v4145
    %v4728 = vunpack.c.h.b16 %v4145
    %v4729 = vunpack.c.l.b16 %v4146
    %v4730 = vunpack.c.h.b16 %v4146
    %v4731 = vunpack.c.l.b16 %v4147
    %v4732 = vunpack.c.h.b16 %v4147
    %v4733 = vunpack.c.l.b16 %v4148
    %v4734 = vunpack.c.h.b16 %v4148
    %v4735 = vunpack.c.l.b16 %v4149
    %v4736 = vunpack.c.h.b16 %v4149
    %v4737 = vunpack.c.l.b16 %v4150
    %v4738 = vunpack.c.h.b16 %v4150
    %v4739 = vunpack.c.l.b16 %v4151
    %v4740 = vunpack.c.h.b16 %v4151
    %v4741 = vunpack.c.l.b16 %v4152
    %v4742 = vunpack.c.h.b16 %v4152
    %v4743 = vunpack.c.l.b16 %v4153
    %v4744 = vunpack.c.h.b16 %v4153
    %v4745 = vunpack.c.l.b16 %v4154
    %v4746 = vunpack.c.h.b16 %v4154
    %v4747 = vunpack.c.l.b16 %v4155
    %v4748 = vunpack.c.h.b16 %v4155
    %v4749 = vunpack.c.l.b16 %v4156
    %v4750 = vunpack.c.h.b16 %v4156
    %v4751 = vunpack.c.l.b16 %v4157
    %v4752 = vunpack.c.h.b16 %v4157
    %v4753 = vunpack.c.l.b16 %v4158
    %v4754 = vunpack.c.h.b16 %v4158
    %v4755 = vunpack.c.l.b16 %v4159
    %v4756 = vunpack.c.h.b16 %v4159
    %v4757 = vunpack.c.l.b16 %v4160
    %v4758 = vunpack.c.h.b16 %v4160
    %v4759 = vunpack.c.l.b16 %v4161
    %v4760 = vunpack.c.h.b16 %v4161
    %v4761 = vunpack.c.l.b16 %v4162
    %v4762 = vunpack.c.h.b16 %v4162
    %v4763 = vunpack.c.l.b16 %v4163
    %v4764 = vunpack.c.h.b16 %v4163
    %v4765 = vunpack.c.l.b16 %v4164
    %v4766 = vunpack.c.h.b16 %v4164
    %v4767 = vunpack.c.l.b16 %v4165
    %v4768 = vunpack.c.h.b16 %v4165
    %v4769 = vunpack.c.l.b16 %v4166
    %v4770 = vunpack.c.h.b16 %v4166
    %v4771 = vunpack.c.l.b16 %v4167
    %v4772 = vunpack.c.h.b16 %v4167
    %v4773 = vunpack.c.l.b16 %v4168
    %v4774 = vunpack.c.h.b16 %v4168
    %v4775 = vunpack.c.l.b16 %v4169
    %v4776 = vunpack.c.h.b16 %v4169
    %v4777 = vunpack.c.l.b16 %v4170
    %v4778 = vunpack.c.h.b16 %v4170
    %v4779 = vunpack.c.l.b16 %v4171
    %v4780 = vunpack.c.h.b16 %v4171
    %v4781 = vunpack.c.l.b16 %v4172
    %v4782 = vunpack.c.h.b16 %v4172
    %v4783 = vunpack.c.l.b16 %v4173
    %v4784 = vunpack.c.h.b16 %v4173
    %v4785 = vunpack.c.l.b16 %v4174
    %v4786 = vunpack.c.h.b16 %v4174
    %v4787 = vunpack.c.l.b16 %v4175
    %v4788 = vunpack.c.h.b16 %v4175
    %v4789 = vunpack.c.l.b16 %v4176
    %v4790 = vunpack.c.h.b16 %v4176
    %v4791 = vunpack.c.l.b16 %v4177
    %v4792 = vunpack.c.h.b16 %v4177
    %v4793 = vunpack.c.l.b16 %v4178
    %v4794 = vunpack.c.h.b16 %v4178
    %v4795 = vunpack.c.l.b16 %v4179
    %v4796 = vunpack.c.h.b16 %v4179
    %v4797 = vunpack.c.l.b16 %v4180
    %v4798 = vunpack.c.h.b16 %v4180
    %v4799 = vunpack.c.l.b16 %v4181
    %v4800 = vunpack.c.h.b16 %v4181
    %v4801 = vunpack.c.l.b16 %v4182
    %v4802 = vunpack.c.h.b16 %v4182
    %v4803 = vunpack.c.l.b16 %v4183
    %v4804 = vunpack.c.h.b16 %v4183
    %v4805 = vunpack.c.l.b16 %v4184
    %v4806 = vunpack.c.h.b16 %v4184
    %v4807 = vunpack.c.l.b16 %v4185
    %v4808 = vunpack.c.h.b16 %v4185
    %v4809 = vunpack.c.l.b16 %v4186
    %v4810 = vunpack.c.h.b16 %v4186
    %v4811 = vunpack.c.l.b16 %v4187
    %v4812 = vunpack.c.h.b16 %v4187
    %v4813 = vunpack.c.l.b16 %v4188
    %v4814 = vunpack.c.h.b16 %v4188
    %v4815 = vunpack.c.l.b16 %v4189
    %v4816 = vunpack.c.h.b16 %v4189
    %v4817 = vunpack.c.l.b16 %v4190
    %v4818 = vunpack.c.h.b16 %v4190
    %v4819 = vunpack.c.l.b16 %v4191
    %v4820 = vunpack.c.h.b16 %v4191
    %v4821 = vunpack.c.l.b16 %v4192
    %v4822 = vunpack.c.h.b16 %v4192
    %v4823 = vunpack.c.l.b16 %v4193
    %v4824 = vunpack.c.h.b16 %v4193
    %v4825 = vunpack.c.l.b16 %v4194
    %v4826 = vunpack.c.h.b16 %v4194
    %v4827 = vunpack.c.l.b16 %v4195
    %v4828 = vunpack.c.h.b16 %v4195
    %v4829 = vunpack.c.l.b16 %v4196
    %v4830 = vunpack.c.h.b16 %v4196
    %v4831 = vunpack.c.l.b16 %v4197
    %v4832 = vunpack.c.h.b16 %v4197
    %v4833 = vunpack.c.l.b16 %v4198
    %v4834 = vunpack.c.h.b16 %v4198
    %v4835 = vunpack.c.l.b16 %v4199
    %v4836 = vunpack.c.h.b16 %v4199
    %v4837 = vunpack.c.l.b16 %v4200
    %v4838 = vunpack.c.h.b16 %v4200
    %v4839 = vunpack.c.l.b16 %v4201
    %v4840 = vunpack.c.h.b16 %v4201
    %v4841 = vunpack.c.l.b16 %v4202
    %v4842 = vunpack.c.h.b16 %v4202
    %v4843 = vunpack.c.l.b16 %v4203
    %v4844 = vunpack.c.h.b16 %v4203
    %v4845 = vunpack.c.l.b16 %v4204
    %v4846 = vunpack.c.h.b16 %v4204
    %v4847 = vunpack.c.l.b16 %v4205
    %v4848 = vunpack.c.h.b16 %v4205
    %v4849 = vunpack.c.l.b16 %v4206
    %v4850 = vunpack.c.h.b16 %v4206
    %v4851 = vunpack.c.l.b16 %v4207
    %v4852 = vunpack.c.h.b16 %v4207
    %v4853 = vunpack.c.l.b16 %v4208
    %v4854 = vunpack.c.h.b16 %v4208
    %v4855 = vunpack.c.l.b16 %v4209
    %v4856 = vunpack.c.h.b16 %v4209
    %v4857 = vunpack.c.l.b16 %v4210
    %v4858 = vunpack.c.h.b16 %v4210
    %v4859 = vunpack.c.l.b16 %v4211
    %v4860 = vunpack.c.h.b16 %v4211
    %v4861 = vunpack.c.l.b16 %v4212
    %v4862 = vunpack.c.h.b16 %v4212
    %v4863 = vunpack.c.l.b16 %v4213
    %v4864 = vunpack.c.h.b16 %v4213
    %v4865 = vunpack.c.l.b16 %v4214
    %v4866 = vunpack.c.h.b16 %v4214
    %v4867 = vunpack.c.l.b16 %v4215
    %v4868 = vunpack.c.h.b16 %v4215
    %v4869 = vunpack.c.l.b16 %v4216
    %v4870 = vunpack.c.h.b16 %v4216
    %v4871 = vunpack.c.l.b16 %v4217
    %v4872 = vunpack.c.h.b16 %v4217
    %v4873 = vunpack.c.l.b16 %v4218
    %v4874 = vunpack.c.h.b16 %v4218
    %v4875 = vunpack.c.l.b16 %v4219
    %v4876 = vunpack.c.h.b16 %v4219
    %v4877 = vunpack.c.l.b16 %v4220
    %v4878 = vunpack.c.h.b16 %v4220
    %v4879 = vunpack.c.l.b16 %v4221
    %v4880 = vunpack.c.h.b16 %v4221
    %v4881 = vunpack.c.l.b16 %v4222
    %v4882 = vunpack.c.h.b16 %v4222
    %v4883 = vunpack.c.l.b16 %v4223
    %v4884 = vunpack.c.h.b16 %v4223
    %v4885 = vunpack.c.l.b16 %v4224
    %v4886 = vunpack.c.h.b16 %v4224
    %v4887 = vunpack.c.l.b16 %v4225
    %v4888 = vunpack.c.h.b16 %v4225
    %v4889 = vunpack.c.l.b16 %v4226
    %v4890 = vunpack.c.h.b16 %v4226
    %v4891 = vunpack.c.l.b16 %v4227
    %v4892 = vunpack.c.h.b16 %v4227
    %v4893 = vunpack.c.l.b16 %v4228
    %v4894 = vunpack.c.h.b16 %v4228
    %v4895 = vunpack.c.l.b16 %v4229
    %v4896 = vunpack.c.h.b16 %v4229
    %v4897 = vunpack.c.l.b16 %v4230
    %v4898 = vunpack.c.h.b16 %v4230
    %v4899 = vunpack.c.l.b16 %v4231
    %v4900 = vunpack.c.h.b16 %v4231
    %v4901 = vunpack.c.l.b16 %v4232
    %v4902 = vunpack.c.h.b16 %v4232
    %v4903 = vunpack.c.l.b16 %v4233
    %v4904 = vunpack.c.h.b16 %v4233
    %v4905 = vunpack.c.l.b16 %v4234
    %v4906 = vunpack.c.h.b16 %v4234
    %v4907 = vunpack.c.l.b16 %v4235
    %v4908 = vunpack.c.h.b16 %v4235
    %v4909 = vunpack.c.l.b16 %v4236
    %v4910 = vunpack.c.h.b16 %v4236
    %v4911 = vunpack.c.l.b16 %v4237
    %v4912 = vunpack.c.h.b16 %v4237
    %v4913 = vunpack.c.l.b16 %v4238
    %v4914 = vunpack.c.h.b16 %v4238
    %v4915 = vunpack.c.l.b16 %v4239
    %v4916 = vunpack.c.h.b16 %v4239
    %v4917 = vunpack.c.l.b16 %v4240
    %v4918 = vunpack.c.h.b16 %v4240
    %v4919 = vunpack.c.l.b16 %v4241
    %v4920 = vunpack.c.h.b16 %v4241
    %v4921 = vunpack.c.l.b16 %v4242
    %v4922 = vunpack.c.h.b16 %v4242
    %v4923 = vunpack.c.l.b16 %v4243
    %v4924 = vunpack.c.h.b16 %v4243
    %v4925 = vunpack.c.l.b16 %v4244
    %v4926 = vunpack.c.h.b16 %v4244
    %v4927 = vunpack.c.l.b16 %v4245
    %v4928 = vunpack.c.h.b16 %v4245
    %v4929 = vunpack.c.l.b16 %v4246
    %v4930 = vunpack.c.h.b16 %v4246
    %v4931 = vunpack.c.l.b16 %v4247
    %v4932 = vunpack.c.h.b16 %v4247
    %v4933 = vunpack.c.l.b16 %v4248
    %v4934 = vunpack.c.h.b16 %v4248
    %v4935 = vunpack.c.l.b16 %v4249
    %v4936 = vunpack.c.h.b16 %v4249
    %v4937 = vunpack.c.l.b16 %v4250
    %v4938 = vunpack.c.h.b16 %v4250
    %v4939 = vunpack.c.l.b16 %v4251
    %v4940 = vunpack.c.h.b16 %v4251
    %v4941 = vunpack.c.l.b16 %v4252
    %v4942 = vunpack.c.h.b16 %v4252
    %v4943 = vunpack.c.l.b16 %v4253
    %v4944 = vunpack.c.h.b16 %v4253
    %v4945 = vunpack.c.l.b16 %v4254
    %v4946 = vunpack.c.h.b16 %v4254
    %v4947 = vunpack.c.l.b16 %v4255
    %v4948 = vunpack.c.h.b16 %v4255
    %v4949 = vunpack.c.l.b16 %v4256
    %v4950 = vunpack.c.h.b16 %v4256
    %v4951 = vunpack.c.l.b16 %v4257
    %v4952 = vunpack.c.h.b16 %v4257
    %v4953 = vunpack.c.l.b16 %v4258
    %v4954 = vunpack.c.h.b16 %v4258
    %v4955 = vunpack.c.l.b16 %v4259
    %v4956 = vunpack.c.h.b16 %v4259
    %v4957 = vunpack.c.l.b16 %v4260
    %v4958 = vunpack.c.h.b16 %v4260
    %v4959 = vunpack.c.l.b16 %v4261
    %v4960 = vunpack.c.h.b16 %v4261
    %v4961 = vunpack.c.l.b16 %v4262
    %v4962 = vunpack.c.h.b16 %v4262
    %v4963 = vunpack.c.l.b16 %v4263
    %v4964 = vunpack.c.h.b16 %v4263
    %v4965 = vunpack.c.l.b16 %v4264
    %v4966 = vunpack.c.h.b16 %v4264
    %v4967 = vunpack.c.l.b16 %v4265
    %v4968 = vunpack.c.h.b16 %v4265
    %v4969 = vunpack.c.l.b16 %v4266
    %v4970 = vunpack.c.h.b16 %v4266
    %v4971 = vunpack.c.l.b16 %v4267
    %v4972 = vunpack.c.h.b16 %v4267
    %v4973 = vunpack.c.l.b16 %v4268
    %v4974 = vunpack.c.h.b16 %v4268
    %v4975 = vunpack.c.l.b16 %v4269
    %v4976 = vunpack.c.h.b16 %v4269
    %v4977 = vunpack.c.l.b16 %v4270
    %v4978 = vunpack.c.h.b16 %v4270
    %v4979 = vunpack.c.l.b16 %v4271
    %v4980 = vunpack.c.h.b16 %v4271
    %v4981 = vunpack.c.l.b16 %v4272
    %v4982 = vunpack.c.h.b16 %v4272
    %v4983 = vunpack.c.l.b16 %v4273
    %v4984 = vunpack.c.h.b16 %v4273
    %v4985 = vunpack.c.l.b16 %v4274
    %v4986 = vunpack.c.h.b16 %v4274
    %v4987 = vunpack.c.l.b16 %v4275
    %v4988 = vunpack.c.h.b16 %v4275
    %v4989 = vunpack.c.l.b16 %v4276
    %v4990 = vunpack.c.h.b16 %v4276
    %v4991 = vunpack.c.l.b16 %v4277
    %v4992 = vunpack.c.h.b16 %v4277
    %v4993 = vunpack.c.l.b16 %v4278
    %v4994 = vunpack.c.h.b16 %v4278
    %v4995 = vunpack.c.l.b16 %v4279
    %v4996 = vunpack.c.h.b16 %v4279
    %v4997 = vunpack.c.l.b16 %v4280
    %v4998 = vunpack.c.h.b16 %v4280
    %v4999 = vunpack.c.l.b16 %v4281
    %v5000 = vunpack.c.h.b16 %v4281
    %v5001 = vunpack.c.l.b16 %v4282
    %v5002 = vunpack.c.h.b16 %v4282
    %v5003 = vunpack.c.l.b16 %v4283
    %v5004 = vunpack.c.h.b16 %v4283
    %v5005 = vunpack.c.l.b16 %v4284
    %v5006 = vunpack.c.h.b16 %v4284
    %v5007 = vunpack.c.l.b16 %v4285
    %v5008 = vunpack.c.h.b16 %v4285
    %v5009 = vunpack.c.l.b16 %v4286
    %v5010 = vunpack.c.h.b16 %v4286
    %v5011 = vunpack.c.l.b16 %v4287
    %v5012 = vunpack.c.h.b16 %v4287
    %v5013 = vunpack.c.l.b16 %v4288
    %v5014 = vunpack.c.h.b16 %v4288
    %v5015 = vunpack.c.l.b16 %v4289
    %v5016 = vunpack.c.h.b16 %v4289
    %v5017 = vunpack.c.l.b16 %v4290
    %v5018 = vunpack.c.h.b16 %v4290
    %v5019 = vunpack.c.l.b16 %v4291
    %v5020 = vunpack.c.h.b16 %v4291
    %v5021 = vunpack.c.l.b16 %v4292
    %v5022 = vunpack.c.h.b16 %v4292
    %v5023 = vunpack.c.l.b16 %v4293
    %v5024 = vunpack.c.h.b16 %v4293
    %v5025 = vunpack.c.l.b16 %v4294
    %v5026 = vunpack.c.h.b16 %v4294
    %v5027 = vunpack.c.l.b16 %v4295
    %v5028 = vunpack.c.h.b16 %v4295
    %v5029 = vunpack.c.l.b16 %v4296
    %v5030 = vunpack.c.h.b16 %v4296
    %v5031 = vunpack.c.l.b16 %v4297
    %v5032 = vunpack.c.h.b16 %v4297
    %v5033 = vunpack.c.l.b16 %v4298
    %v5034 = vunpack.c.h.b16 %v4298
    %v5035 = vunpack.c.l.b16 %v4299
    %v5036 = vunpack.c.h.b16 %v4299
    %v5037 = vunpack.c.l.b16 %v4300
    %v5038 = vunpack.c.h.b16 %v4300
    %v5039 = vunpack.c.l.b16 %v4301
    %v5040 = vunpack.c.h.b16 %v4301
    %v5041 = vunpack.c.l.b16 %v4302
    %v5042 = vunpack.c.h.b16 %v4302
    %v5043 = vunpack.c.l.b16 %v4303
    %v5044 = vunpack.c.h.b16 %v4303
    %v5045 = vunpack.c.l.b16 %v4304
    %v5046 = vunpack.c.h.b16 %v4304
    %v5047 = vunpack.c.l.b16 %v4305
    %v5048 = vunpack.c.h.b16 %v4305
    %v5049 = vunpack.c.l.b16 %v4306
    %v5050 = vunpack.c.h.b16 %v4306
    %v5051 = vunpack.c.l.b16 %v4307
    %v5052 = vunpack.c.h.b16 %v4307
    %v5053 = vunpack.c.l.b16 %v4308
    %v5054 = vunpack.c.h.b16 %v4308
    %v5055 = vunpack.c.l.b16 %v4309
    %v5056 = vunpack.c.h.b16 %v4309
    %v5057 = vunpack.c.l.b16 %v4310
    %v5058 = vunpack.c.h.b16 %v4310
    %v5059 = vunpack.c.l.b16 %v4311
    %v5060 = vunpack.c.h.b16 %v4311
    %v5061 = vunpack.c.l.b16 %v4312
    %v5062 = vunpack.c.h.b16 %v4312
    %v5063 = vunpack.c.l.b16 %v4313
    %v5064 = vunpack.c.h.b16 %v4313
    %v5065 = vunpack.c.l.b16 %v4314
    %v5066 = vunpack.c.h.b16 %v4314
    %v5067 = vunpack.c.l.b16 %v4315
    %v5068 = vunpack.c.h.b16 %v4315
    %v5069 = vunpack.c.l.b16 %v4316
    %v5070 = vunpack.c.h.b16 %v4316
    %v5071 = vunpack.c.l.b16 %v4317
    %v5072 = vunpack.c.h.b16 %v4317
    %v5073 = vunpack.c.l.b16 %v4318
    %v5074 = vunpack.c.h.b16 %v4318
    %v5075 = vunpack.c.l.b16 %v4319
    %v5076 = vunpack.c.h.b16 %v4319
    %v5077 = vunpack.c.l.b16 %v4320
    %v5078 = vunpack.c.h.b16 %v4320
    %v5079 = vunpack.c.l.b16 %v4321
    %v5080 = vunpack.c.h.b16 %v4321
    %v5081 = vunpack.c.l.b16 %v4322
    %v5082 = vunpack.c.h.b16 %v4322
    %v5083 = vunpack.c.l.b16 %v4323
    %v5084 = vunpack.c.h.b16 %v4323
    %v5085 = vunpack.c.l.b16 %v4324
    %v5086 = vunpack.c.h.b16 %v4324
    %v5087 = vunpack.c.l.b16 %v4325
    %v5088 = vunpack.c.h.b16 %v4325
    %v5089 = vunpack.c.l.b16 %v4326
    %v5090 = vunpack.c.h.b16 %v4326
    %v5091 = vunpack.c.l.b16 %v4327
    %v5092 = vunpack.c.h.b16 %v4327
    %v5093 = vunpack.c.l.b16 %v4328
    %v5094 = vunpack.c.h.b16 %v4328
    %v5095 = vunpack.c.l.b16 %v4329
    %v5096 = vunpack.c.h.b16 %v4329
    %v5097 = vunpack.c.l.b16 %v4330
    %v5098 = vunpack.c.h.b16 %v4330
    %v5099 = vunpack.c.l.b16 %v4331
    %v5100 = vunpack.c.h.b16 %v4331
    %v5101 = vunpack.c.l.b16 %v4332
    %v5102 = vunpack.c.h.b16 %v4332
    %v5103 = vunpack.c.l.b16 %v4333
    %v5104 = vunpack.c.h.b16 %v4333
    %v5105 = vunpack.c.l.b16 %v4334
    %v5106 = vunpack.c.h.b16 %v4334
    %v5107 = vunpack.c.l.b16 %v4335
    %v5108 = vunpack.c.h.b16 %v4335
    %v5109 = vunpack.c.l.b16 %v4336
    %v5110 = vunpack.c.h.b16 %v4336
    %v5111 = vunpack.c.l.b16 %v4337
    %v5112 = vunpack.c.h.b16 %v4337
    %v5113 = vunpack.c.l.b16 %v4338
    %v5114 = vunpack.c.h.b16 %v4338
    %v5115 = vunpack.c.l.b16 %v4339
    %v5116 = vunpack.c.h.b16 %v4339
    %v5117 = vunpack.c.l.b16 %v4340
    %v5118 = vunpack.c.h.b16 %v4340
    %v5119 = vpack.c.b16 %v4611, %v4607
    %v5120 = vpack.c.b16 %v4612, %v4608
    %v5121 = vpack.c.b16 %v4613, %v4609
    %v5122 = vpack.c.b16 %v4614, %v4610
    %v5123 = vpack.c.b16 %v4619, %v4615
    %v5124 = vpack.c.b16 %v4620, %v4616
    %v5125 = vpack.c.b16 %v4621, %v4617
    %v5126 = vpack.c.b16 %v4622, %v4618
    %v5127 = vpack.c.b16 %v4627, %v4623
    %v5128 = vpack.c.b16 %v4628, %v4624
    %v5129 = vpack.c.b16 %v4629, %v4625
    %v5130 = vpack.c.b16 %v4630, %v4626
    %v5131 = vpack.c.b16 %v4635, %v4631
    %v5132 = vpack.c.b16 %v4636, %v4632
    %v5133 = vpack.c.b16 %v4637, %v4633
    %v5134 = vpack.c.b16 %v4638, %v4634
    %v5135 = vpack.c.b16 %v4643, %v4639
    %v5136 = vpack.c.b16 %v4644, %v4640
    %v5137 = vpack.c.b16 %v4645, %v4641
    %v5138 = vpack.c.b16 %v4646, %v4642
    %v5139 = vpack.c.b16 %v4651, %v4647
    %v5140 = vpack.c.b16 %v4652, %v4648
    %v5141 = vpack.c.b16 %v4653, %v4649
    %v5142 = vpack.c.b16 %v4654, %v4650
    %v5143 = vpack.c.b16 %v4659, %v4655
    %v5144 = vpack.c.b16 %v4660, %v4656
    %v5145 = vpack.c.b16 %v4661, %v4657
    %v5146 = vpack.c.b16 %v4662, %v4658
    %v5147 = vpack.c.b16 %v4667, %v4663
    %v5148 = vpack.c.b16 %v4668, %v4664
    %v5149 = vpack.c.b16 %v4669, %v4665
    %v5150 = vpack.c.b16 %v4670, %v4666
    %v5151 = vpack.c.b16 %v4675, %v4671
    %v5152 = vpack.c.b16 %v4676, %v4672
    %v5153 = vpack.c.b16 %v4677, %v4673
    %v5154 = vpack.c.b16 %v4678, %v4674
    %v5155 = vpack.c.b16 %v4683, %v4679
    %v5156 = vpack.c.b16 %v4684, %v4680
    %v5157 = vpack.c.b16 %v4685, %v4681
    %v5158 = vpack.c.b16 %v4686, %v4682
    %v5159 = vpack.c.b16 %v4691, %v4687
    %v5160 = vpack.c.b16 %v4692, %v4688
    %v5161 = vpack.c.b16 %v4693, %v4689
    %v5162 = vpack.c.b16 %v4694, %v4690
    %v5163 = vpack.c.b16 %v4699, %v4695
    %v5164 = vpack.c.b16 %v4700, %v4696
    %v5165 = vpack.c.b16 %v4701, %v4697
    %v5166 = vpack.c.b16 %v4702, %v4698
    %v5167 = vpack.c.b16 %v4707, %v4703
    %v5168 = vpack.c.b16 %v4708, %v4704
    %v5169 = vpack.c.b16 %v4709, %v4705
    %v5170 = vpack.c.b16 %v4710, %v4706
    %v5171 = vpack.c.b16 %v4715, %v4711
    %v5172 = vpack.c.b16 %v4716, %v4712
    %v5173 = vpack.c.b16 %v4717, %v4713
    %v5174 = vpack.c.b16 %v4718, %v4714
    %v5175 = vpack.c.b16 %v4723, %v4719
    %v5176 = vpack.c.b16 %v4724, %v4720
    %v5177 = vpack.c.b16 %v4725, %v4721
    %v5178 = vpack.c.b16 %v4726, %v4722
    %v5179 = vpack.c.b16 %v4731, %v4727
    %v5180 = vpack.c.b16 %v4732, %v4728
    %v5181 = vpack.c.b16 %v4733, %v4729
    %v5182 = vpack.c.b16 %v4734, %v4730
    %v5183 = vpack.c.b16 %v4739, %v4735
    %v5184 = vpack.c.b16 %v4740, %v4736
    %v5185 = vpack.c.b16 %v4741, %v4737
    %v5186 = vpack.c.b16 %v4742, %v4738
    %v5187 = vpack.c.b16 %v4747, %v4743
    %v5188 = vpack.c.b16 %v4748, %v4744
    %v5189 = vpack.c.b16 %v4749, %v4745
    %v5190 = vpack.c.b16 %v4750, %v4746
    %v5191 = vpack.c.b16 %v4755, %v4751
    %v5192 = vpack.c.b16 %v4756, %v4752
    %v5193 = vpack.c.b16 %v4757, %v4753
    %v5194 = vpack.c.b16 %v4758, %v4754
    %v5195 = vpack.c.b16 %v4763, %v4759
    %v5196 = vpack.c.b16 %v4764, %v4760
    %v5197 = vpack.c.b16 %v4765, %v4761
    %v5198 = vpack.c.b16 %v4766, %v4762
    %v5199 = vpack.c.b16 %v4771, %v4767
    %v5200 = vpack.c.b16 %v4772, %v4768
    %v5201 = vpack.c.b16 %v4773, %v4769
    %v5202 = vpack.c.b16 %v4774, %v4770
    %v5203 = vpack.c.b16 %v4779, %v4775
    %v5204 = vpack.c.b16 %v4780, %v4776
    %v5205 = vpack.c.b16 %v4781, %v4777
    %v5206 = vpack.c.b16 %v4782, %v4778
    %v5207 = vpack.c.b16 %v4787, %v4783
    %v5208 = vpack.c.b16 %v4788, %v4784
    %v5209 = vpack.c.b16 %v4789, %v4785
    %v5210 = vpack.c.b16 %v4790, %v4786
    %v5211 = vpack.c.b16 %v4795, %v4791
    %v5212 = vpack.c.b16 %v4796, %v4792
    %v5213 = vpack.c.b16 %v4797, %v4793
    %v5214 = vpack.c.b16 %v4798, %v4794
    %v5215 = vpack.c.b16 %v4803, %v4799
    %v5216 = vpack.c.b16 %v4804, %v4800
    %v5217 = vpack.c.b16 %v4805, %v4801
    %v5218 = vpack.c.b16 %v4806, %v4802
    %v5219 = vpack.c.b16 %v4811, %v4807
    %v5220 = vpack.c.b16 %v4812, %v4808
    %v5221 = vpack.c.b16 %v4813, %v4809
    %v5222 = vpack.c.b16 %v4814, %v4810
    %v5223 = vpack.c.b16 %v4819, %v4815
    %v5224 = vpack.c.b16 %v4820, %v4816
    %v5225 = vpack.c.b16 %v4821, %v4817
    %v5226 = vpack.c.b16 %v4822, %v4818
    %v5227 = vpack.c.b16 %v4827, %v4823
    %v5228 = vpack.c.b16 %v4828, %v4824
    %v5229 = vpack.c.b16 %v4829, %v4825
    %v5230 = vpack.c.b16 %v4830, %v4826
    %v5231 = vpack.c.b16 %v4835, %v4831
    %v5232 = vpack.c.b16 %v4836, %v4832
    %v5233 = vpack.c.b16 %v4837, %v4833
    %v5234 = vpack.c.b16 %v4838, %v4834
    %v5235 = vpack.c.b16 %v4843, %v4839
    %v5236 = vpack.c.b16 %v4844, %v4840
    %v5237 = vpack.c.b16 %v4845, %v4841
    %v5238 = vpack.c.b16 %v4846, %v4842
    %v5239 = vpack.c.b16 %v4851, %v4847
    %v5240 = vpack.c.b16 %v4852, %v4848
    %v5241 = vpack.c.b16 %v4853, %v4849
    %v5242 = vpack.c.b16 %v4854, %v4850
    %v5243 = vpack.c.b16 %v4859, %v4855
    %v5244 = vpack.c.b16 %v4860, %v4856
    %v5245 = vpack.c.b16 %v4861, %v4857
    %v5246 = vpack.c.b16 %v4862, %v4858
    %v5247 = vpack.c.b16 %v4867, %v4863
    %v5248 = vpack.c.b16 %v4868, %v4864
    %v5249 = vpack.c.b16 %v4869, %v4865
    %v5250 = vpack.c.b16 %v4870, %v4866
    %v5251 = vpack.c.b16 %v4875, %v4871
    %v5252 = vpack.c.b16 %v4876, %v4872
    %v5253 = vpack.c.b16 %v4877, %v4873
    %v5254 = vpack.c.b16 %v4878, %v4874
    %v5255 = vpack.c.b16 %v4883, %v4879
    %v5256 = vpack.c.b16 %v4884, %v4880
    %v5257 = vpack.c.b16 %v4885, %v4881
    %v5258 = vpack.c.b16 %v4886, %v4882
    %v5259 = vpack.c.b16 %v4891, %v4887
    %v5260 = vpack.c.b16 %v4892, %v4888
    %v5261 = vpack.c.b16 %v4893, %v4889
    %v5262 = vpack.c.b16 %v4894, %v4890
    %v5263 = vpack.c.b16 %v4899, %v4895
    %v5264 = vpack.c.b16 %v4900, %v4896
    %v5265 = vpack.c.b16 %v4901, %v4897
    %v5266 = vpack.c.b16 %v4902, %v4898
    %v5267 = vpack.c.b16 %v4907, %v4903
    %v5268 = vpack.c.b16 %v4908, %v4904
    %v5269 = vpack.c.b16 %v4909, %v4905
    %v5270 = vpack.c.b16 %v4910, %v4906
    %v5271 = vpack.c.b16 %v4915, %v4911
    %v5272 = vpack.c.b16 %v4916, %v4912
    %v5273 = vpack.c.b16 %v4917, %v4913
    %v5274 = vpack.c.b16 %v4918, %v4914
    %v5275 = vpack.c.b16 %v4923, %v4919
    %v5276 = vpack.c.b16 %v4924, %v4920
    %v5277 = vpack.c.b16 %v4925, %v4921
    %v5278 = vpack.c.b16 %v4926, %v4922
    %v5279 = vpack.c.b16 %v4931, %v4927
    %v5280 = vpack.c.b16 %v4932, %v4928
    %v5281 = vpack.c.b16 %v4933, %v4929
    %v5282 = vpack.c.b16 %v4934, %v4930
    %v5283 = vpack.c.b16 %v4939, %v4935
    %v5284 = vpack.c.b16 %v4940, %v4936
    %v5285 = vpack.c.b16 %v4941, %v4937
    %v5286 = vpack.c.b16 %v4942, %v4938
    %v5287 = vpack.c.b16 %v4947, %v4943
    %v5288 = vpack.c.b16 %v4948, %v4944
    %v5289 = vpack.c.b16 %v4949, %v4945
    %v5290 = vpack.c.b16 %v4950, %v4946
    %v5291 = vpack.c.b16 %v4955, %v4951
    %v5292 = vpack.c.b16 %v4956, %v4952
    %v5293 = vpack.c.b16 %v4957, %v4953
    %v5294 = vpack.c.b16 %v4958, %v4954
    %v5295 = vpack.c.b16 %v4963, %v4959
    %v5296 = vpack.c.b16 %v4964, %v4960
    %v5297 = vpack.c.b16 %v4965, %v4961
    %v5298 = vpack.c.b16 %v4966, %v4962
    %v5299 = vpack.c.b16 %v4971, %v4967
    %v5300 = vpack.c.b16 %v4972, %v4968
    %v5301 = vpack.c.b16 %v4973, %v4969
    %v5302 = vpack.c.b16 %v4974, %v4970
    %v5303 = vpack.c.b16 %v4979, %v4975
    %v5304 = vpack.c.b16 %v4980, %v4976
    %v5305 = vpack.c.b16 %v4981, %v4977
    %v5306 = vpack.c.b16 %v4982, %v4978
    %v5307 = vpack.c.b16 %v4987, %v4983
    %v5308 = vpack.c.b16 %v4988, %v4984
    %v5309 = vpack.c.b16 %v4989, %v4985
    %v5310 = vpack.c.b16 %v4990, %v4986
    %v5311 = vpack.c.b16 %v4995, %v4991
    %v5312 = vpack.c.b16 %v4996, %v4992
    %v5313 = vpack.c.b16 %v4997, %v4993
    %v5314 = vpack.c.b16 %v4998, %v4994
    %v5315 = vpack.c.b16 %v5003, %v4999
    %v5316 = vpack.c.b16 %v5004, %v5000
    %v5317 = vpack.c.b16 %v5005, %v5001
    %v5318 = vpack.c.b16 %v5006, %v5002
    %v5319 = vpack.c.b16 %v5011, %v5007
    %v5320 = vpack.c.b16 %v5012, %v5008
    %v5321 = vpack.c.b16 %v5013, %v5009
    %v5322 = vpack.c.b16 %v5014, %v5010
    %v5323 = vpack.c.b16 %v5019, %v5015
    %v5324 = vpack.c.b16 %v5020, %v5016
    %v5325 = vpack.c.b16 %v5021, %v5017
    %v5326 = vpack.c.b16 %v5022, %v5018
    %v5327 = vpack.c.b16 %v5027, %v5023
    %v5328 = vpack.c.b16 %v5028, %v5024
    %v5329 = vpack.c.b16 %v5029, %v5025
    %v5330 = vpack.c.b16 %v5030, %v5026
    %v5331 = vpack.c.b16 %v5035, %v5031
    %v5332 = vpack.c.b16 %v5036, %v5032
    %v5333 = vpack.c.b16 %v5037, %v5033
    %v5334 = vpack.c.b16 %v5038, %v5034
    %v5335 = vpack.c.b16 %v5043, %v5039
    %v5336 = vpack.c.b16 %v5044, %v5040
    %v5337 = vpack.c.b16 %v5045, %v5041
    %v5338 = vpack.c.b16 %v5046, %v5042
    %v5339 = vpack.c.b16 %v5051, %v5047
    %v5340 = vpack.c.b16 %v5052, %v5048
    %v5341 = vpack.c.b16 %v5053, %v5049
    %v5342 = vpack.c.b16 %v5054, %v5050
    %v5343 = vpack.c.b16 %v5059, %v5055
    %v5344 = vpack.c.b16 %v5060, %v5056
    %v5345 = vpack.c.b16 %v5061, %v5057
    %v5346 = vpack.c.b16 %v5062, %v5058
    %v5347 = vpack.c.b16 %v5067, %v5063
    %v5348 = vpack.c.b16 %v5068, %v5064
    %v5349 = vpack.c.b16 %v5069, %v5065
    %v5350 = vpack.c.b16 %v5070, %v5066
    %v5351 = vpack.c.b16 %v5075, %v5071
    %v5352 = vpack.c.b16 %v5076, %v5072
    %v5353 = vpack.c.b16 %v5077, %v5073
    %v5354 = vpack.c.b16 %v5078, %v5074
    %v5355 = vpack.c.b16 %v5083, %v5079
    %v5356 = vpack.c.b16 %v5084, %v5080
    %v5357 = vpack.c.b16 %v5085, %v5081
    %v5358 = vpack.c.b16 %v5086, %v5082
    %v5359 = vpack.c.b16 %v5091, %v5087
    %v5360 = vpack.c.b16 %v5092, %v5088
    %v5361 = vpack.c.b16 %v5093, %v5089
    %v5362 = vpack.c.b16 %v5094, %v5090
    %v5363 = vpack.c.b16 %v5099, %v5095
    %v5364 = vpack.c.b16 %v5100, %v5096
    %v5365 = vpack.c.b16 %v5101, %v5097
    %v5366 = vpack.c.b16 %v5102, %v5098
    %v5367 = vpack.c.b16 %v5107, %v5103
    %v5368 = vpack.c.b16 %v5108, %v5104
    %v5369 = vpack.c.b16 %v5109, %v5105
    %v5370 = vpack.c.b16 %v5110, %v5106
    %v5371 = vpack.c.b16 %v5115, %v5111
    %v5372 = vpack.c.b16 %v5116, %v5112
    %v5373 = vpack.c.b16 %v5117, %v5113
    %v5374 = vpack.c.b16 %v5118, %v5114
    %5631 = vmatpush.bf16.msra.mxu0 %v5147
    %5632 = vmatpush.bf16.msra.mxu0 %v5143
    %5633 = vmatpush.bf16.msra.mxu0 %v5139
    %5634 = vmatpush.bf16.msra.mxu0 %v5135
    %5635 = vmatpush.bf16.msra.mxu0 %v5131
    %5636 = vmatpush.bf16.msra.mxu0 %v5127
    %5637 = vmatpush.bf16.msra.mxu0 %v5123
    %5638 = vmatpush.bf16.msra.mxu0 %v5119
    %5639 = vmatmul.bf16.gmra.mxu0 %v4077
    %v5640 = vpop.f32.mrf.mxu0
    %v5641 = vadd.f32 %v4343, %v5640
    %v5642 = vpop.f32.mrf.mxu0
    %5643 = vdwg.mxu0
    %5644 = vmatpush.bf16.msra.mxu0 %v5179
    %5645 = vmatpush.bf16.msra.mxu0 %v5175
    %5646 = vmatpush.bf16.msra.mxu0 %v5171
    %5647 = vmatpush.bf16.msra.mxu0 %v5167
    %5648 = vmatpush.bf16.msra.mxu0 %v5163
    %5649 = vmatpush.bf16.msra.mxu0 %v5159
    %5650 = vmatpush.bf16.msra.mxu0 %v5155
    %5651 = vmatpush.bf16.msra.mxu0 %v5151
    %5652 = vmatmul.bf16.gmra.mxu0 %v4078
    %v5653 = vpop.f32.mrf.mxu0
    %v5654 = vadd.f32 %v5641, %v5653
    %v5655 = vpop.f32.mrf.mxu0
    %5656 = vdwg.mxu0
    %5657 = vmatpush.bf16.msra.mxu0 %v5211
    %5658 = vmatpush.bf16.msra.mxu0 %v5207
    %5659 = vmatpush.bf16.msra.mxu0 %v5203
    %5660 = vmatpush.bf16.msra.mxu0 %v5199
    %5661 = vmatpush.bf16.msra.mxu0 %v5195
    %5662 = vmatpush.bf16.msra.mxu0 %v5191
    %5663 = vmatpush.bf16.msra.mxu0 %v5187
    %5664 = vmatpush.bf16.msra.mxu0 %v5183
    %5665 = vmatmul.bf16.gmra.mxu0 %v4079
    %v5666 = vpop.f32.mrf.mxu0
    %v5667 = vadd.f32 %v5654, %v5666
    %v5668 = vpop.f32.mrf.mxu0
    %5669 = vdwg.mxu0
    %5670 = vmatpush.bf16.msra.mxu0 %v5243
    %5671 = vmatpush.bf16.msra.mxu0 %v5239
    %5672 = vmatpush.bf16.msra.mxu0 %v5235
    %5673 = vmatpush.bf16.msra.mxu0 %v5231
    %5674 = vmatpush.bf16.msra.mxu0 %v5227
    %5675 = vmatpush.bf16.msra.mxu0 %v5223
    %5676 = vmatpush.bf16.msra.mxu0 %v5219
    %5677 = vmatpush.bf16.msra.mxu0 %v5215
    %5678 = vmatmul.bf16.gmra.mxu0 %v4080
    %v5679 = vpop.f32.mrf.mxu0
    %v5680 = vadd.f32 %v5667, %v5679
    %v5681 = vpop.f32.mrf.mxu0
    %5682 = vdwg.mxu0
    %5683 = vmatpush.bf16.msra.mxu0 %v5275
    %5684 = vmatpush.bf16.msra.mxu0 %v5271
    %5685 = vmatpush.bf16.msra.mxu0 %v5267
    %5686 = vmatpush.bf16.msra.mxu0 %v5263
    %5687 = vmatpush.bf16.msra.mxu0 %v5259
    %5688 = vmatpush.bf16.msra.mxu0 %v5255
    %5689 = vmatpush.bf16.msra.mxu0 %v5251
    %5690 = vmatpush.bf16.msra.mxu0 %v5247
    %5691 = vmatmul.bf16.gmra.mxu0 %v4081
    %v5692 = vpop.f32.mrf.mxu0
    %v5693 = vadd.f32 %v5680, %v5692
    %v5694 = vpop.f32.mrf.mxu0
    %5695 = vdwg.mxu0
    %5696 = vmatpush.bf16.msra.mxu0 %v5307
    %5697 = vmatpush.bf16.msra.mxu0 %v5303
    %5698 = vmatpush.bf16.msra.mxu0 %v5299
    %5699 = vmatpush.bf16.msra.mxu0 %v5295
    %5700 = vmatpush.bf16.msra.mxu0 %v5291
    %5701 = vmatpush.bf16.msra.mxu0 %v5287
    %5702 = vmatpush.bf16.msra.mxu0 %v5283
    %5703 = vmatpush.bf16.msra.mxu0 %v5279
    %5704 = vmatmul.bf16.gmra.mxu0 %v4082
    %v5705 = vpop.f32.mrf.mxu0
    %v5706 = vadd.f32 %v5693, %v5705
    %v5707 = vpop.f32.mrf.mxu0
    %5708 = vdwg.mxu0
    %5709 = vmatpush.bf16.msra.mxu0 %v5339
    %5710 = vmatpush.bf16.msra.mxu0 %v5335
    %5711 = vmatpush.bf16.msra.mxu0 %v5331
    %5712 = vmatpush.bf16.msra.mxu0 %v5327
    %5713 = vmatpush.bf16.msra.mxu0 %v5323
    %5714 = vmatpush.bf16.msra.mxu0 %v5319
    %5715 = vmatpush.bf16.msra.mxu0 %v5315
    %5716 = vmatpush.bf16.msra.mxu0 %v5311
    %5717 = vmatmul.bf16.gmra.mxu0 %v4083
    %v5718 = vpop.f32.mrf.mxu0
    %v5719 = vadd.f32 %v5706, %v5718
    %v5720 = vpop.f32.mrf.mxu0
    %5721 = vdwg.mxu0
    %5722 = vmatpush.bf16.msra.mxu0 %v5371
    %5723 = vmatpush.bf16.msra.mxu0 %v5367
    %5724 = vmatpush.bf16.msra.mxu0 %v5363
    %5725 = vmatpush.bf16.msra.mxu0 %v5359
    %5726 = vmatpush.bf16.msra.mxu0 %v5355
    %5727 = vmatpush.bf16.msra.mxu0 %v5351
    %5728 = vmatpush.bf16.msra.mxu0 %v5347
    %5729 = vmatpush.bf16.msra.mxu0 %v5343
    %5730 = vmatmul.bf16.gmra.mxu0 %v4084
    %v5731 = vpop.f32.mrf.mxu0
    %v5732 = vadd.f32 %v5719, %v5731
    %v5733 = vpop.f32.mrf.mxu0
    %5734 = vdwg.mxu0
    %5735 = vmatpush.bf16.msra.mxu0 %v5148
    %5736 = vmatpush.bf16.msra.mxu0 %v5144
    %5737 = vmatpush.bf16.msra.mxu0 %v5140
    %5738 = vmatpush.bf16.msra.mxu0 %v5136
    %5739 = vmatpush.bf16.msra.mxu0 %v5132
    %5740 = vmatpush.bf16.msra.mxu0 %v5128
    %5741 = vmatpush.bf16.msra.mxu0 %v5124
    %5742 = vmatpush.bf16.msra.mxu0 %v5120
    %5743 = vmatmul.bf16.gmra.mxu0 %v4077
    %v5744 = vpop.f32.mrf.mxu0
    %v5745 = vadd.f32 %v4344, %v5744
    %v5746 = vpop.f32.mrf.mxu0
    %5747 = vdwg.mxu0
    %5748 = vmatpush.bf16.msra.mxu0 %v5180
    %5749 = vmatpush.bf16.msra.mxu0 %v5176
    %5750 = vmatpush.bf16.msra.mxu0 %v5172
    %5751 = vmatpush.bf16.msra.mxu0 %v5168
    %5752 = vmatpush.bf16.msra.mxu0 %v5164
    %5753 = vmatpush.bf16.msra.mxu0 %v5160
    %5754 = vmatpush.bf16.msra.mxu0 %v5156
    %5755 = vmatpush.bf16.msra.mxu0 %v5152
    %5756 = vmatmul.bf16.gmra.mxu0 %v4078
    %v5757 = vpop.f32.mrf.mxu0
    %v5758 = vadd.f32 %v5745, %v5757
    %v5759 = vpop.f32.mrf.mxu0
    %5760 = vdwg.mxu0
    %5761 = vmatpush.bf16.msra.mxu0 %v5212
    %5762 = vmatpush.bf16.msra.mxu0 %v5208
    %5763 = vmatpush.bf16.msra.mxu0 %v5204
    %5764 = vmatpush.bf16.msra.mxu0 %v5200
    %5765 = vmatpush.bf16.msra.mxu0 %v5196
    %5766 = vmatpush.bf16.msra.mxu0 %v5192
    %5767 = vmatpush.bf16.msra.mxu0 %v5188
    %5768 = vmatpush.bf16.msra.mxu0 %v5184
    %5769 = vmatmul.bf16.gmra.mxu0 %v4079
    %v5770 = vpop.f32.mrf.mxu0
    %v5771 = vadd.f32 %v5758, %v5770
    %v5772 = vpop.f32.mrf.mxu0
    %5773 = vdwg.mxu0
    %5774 = vmatpush.bf16.msra.mxu0 %v5244
    %5775 = vmatpush.bf16.msra.mxu0 %v5240
    %5776 = vmatpush.bf16.msra.mxu0 %v5236
    %5777 = vmatpush.bf16.msra.mxu0 %v5232
    %5778 = vmatpush.bf16.msra.mxu0 %v5228
    %5779 = vmatpush.bf16.msra.mxu0 %v5224
    %5780 = vmatpush.bf16.msra.mxu0 %v5220
    %5781 = vmatpush.bf16.msra.mxu0 %v5216
    %5782 = vmatmul.bf16.gmra.mxu0 %v4080
    %v5783 = vpop.f32.mrf.mxu0
    %v5784 = vadd.f32 %v5771, %v5783
    %v5785 = vpop.f32.mrf.mxu0
    %5786 = vdwg.mxu0
    %5787 = vmatpush.bf16.msra.mxu0 %v5276
    %5788 = vmatpush.bf16.msra.mxu0 %v5272
    %5789 = vmatpush.bf16.msra.mxu0 %v5268
    %5790 = vmatpush.bf16.msra.mxu0 %v5264
    %5791 = vmatpush.bf16.msra.mxu0 %v5260
    %5792 = vmatpush.bf16.msra.mxu0 %v5256
    %5793 = vmatpush.bf16.msra.mxu0 %v5252
    %5794 = vmatpush.bf16.msra.mxu0 %v5248
    %5795 = vmatmul.bf16.gmra.mxu0 %v4081
    %v5796 = vpop.f32.mrf.mxu0
    %v5797 = vadd.f32 %v5784, %v5796
    %v5798 = vpop.f32.mrf.mxu0
    %5799 = vdwg.mxu0
    %5800 = vmatpush.bf16.msra.mxu0 %v5308
    %5801 = vmatpush.bf16.msra.mxu0 %v5304
    %5802 = vmatpush.bf16.msra.mxu0 %v5300
    %5803 = vmatpush.bf16.msra.mxu0 %v5296
    %5804 = vmatpush.bf16.msra.mxu0 %v5292
    %5805 = vmatpush.bf16.msra.mxu0 %v5288
    %5806 = vmatpush.bf16.msra.mxu0 %v5284
    %5807 = vmatpush.bf16.msra.mxu0 %v5280
    %5808 = vmatmul.bf16.gmra.mxu0 %v4082
    %v5809 = vpop.f32.mrf.mxu0
    %v5810 = vadd.f32 %v5797, %v5809
    %v5811 = vpop.f32.mrf.mxu0
    %5812 = vdwg.mxu0
    %5813 = vmatpush.bf16.msra.mxu0 %v5340
    %5814 = vmatpush.bf16.msra.mxu0 %v5336
    %5815 = vmatpush.bf16.msra.mxu0 %v5332
    %5816 = vmatpush.bf16.msra.mxu0 %v5328
    %5817 = vmatpush.bf16.msra.mxu0 %v5324
    %5818 = vmatpush.bf16.msra.mxu0 %v5320
    %5819 = vmatpush.bf16.msra.mxu0 %v5316
    %5820 = vmatpush.bf16.msra.mxu0 %v5312
    %5821 = vmatmul.bf16.gmra.mxu0 %v4083
    %v5822 = vpop.f32.mrf.mxu0
    %v5823 = vadd.f32 %v5810, %v5822
    %v5824 = vpop.f32.mrf.mxu0
    %5825 = vdwg.mxu0
    %5826 = vmatpush.bf16.msra.mxu0 %v5372
    %5827 = vmatpush.bf16.msra.mxu0 %v5368
    %5828 = vmatpush.bf16.msra.mxu0 %v5364
    %5829 = vmatpush.bf16.msra.mxu0 %v5360
    %5830 = vmatpush.bf16.msra.mxu0 %v5356
    %5831 = vmatpush.bf16.msra.mxu0 %v5352
    %5832 = vmatpush.bf16.msra.mxu0 %v5348
    %5833 = vmatpush.bf16.msra.mxu0 %v5344
    %5834 = vmatmul.bf16.gmra.mxu0 %v4084
    %v5835 = vpop.f32.mrf.mxu0
    %v5836 = vadd.f32 %v5823, %v5835
    %v5837 = vpop.f32.mrf.mxu0
    %5838 = vdwg.mxu0
    %5839 = vmatpush.bf16.msra.mxu0 %v5149
    %5840 = vmatpush.bf16.msra.mxu0 %v5145
    %5841 = vmatpush.bf16.msra.mxu0 %v5141
    %5842 = vmatpush.bf16.msra.mxu0 %v5137
    %5843 = vmatpush.bf16.msra.mxu0 %v5133
    %5844 = vmatpush.bf16.msra.mxu0 %v5129
    %5845 = vmatpush.bf16.msra.mxu0 %v5125
    %5846 = vmatpush.bf16.msra.mxu0 %v5121
    %5847 = vmatmul.bf16.gmra.mxu0 %v4077
    %v5848 = vpop.f32.mrf.mxu0
    %v5849 = vadd.f32 %v4345, %v5848
    %v5850 = vpop.f32.mrf.mxu0
    %5851 = vdwg.mxu0
    %5852 = vmatpush.bf16.msra.mxu0 %v5181
    %5853 = vmatpush.bf16.msra.mxu0 %v5177
    %5854 = vmatpush.bf16.msra.mxu0 %v5173
    %5855 = vmatpush.bf16.msra.mxu0 %v5169
    %5856 = vmatpush.bf16.msra.mxu0 %v5165
    %5857 = vmatpush.bf16.msra.mxu0 %v5161
    %5858 = vmatpush.bf16.msra.mxu0 %v5157
    %5859 = vmatpush.bf16.msra.mxu0 %v5153
    %5860 = vmatmul.bf16.gmra.mxu0 %v4078
    %v5861 = vpop.f32.mrf.mxu0
    %v5862 = vadd.f32 %v5849, %v5861
    %v5863 = vpop.f32.mrf.mxu0
    %5864 = vdwg.mxu0
    %5865 = vmatpush.bf16.msra.mxu0 %v5213
    %5866 = vmatpush.bf16.msra.mxu0 %v5209
    %5867 = vmatpush.bf16.msra.mxu0 %v5205
    %5868 = vmatpush.bf16.msra.mxu0 %v5201
    %5869 = vmatpush.bf16.msra.mxu0 %v5197
    %5870 = vmatpush.bf16.msra.mxu0 %v5193
    %5871 = vmatpush.bf16.msra.mxu0 %v5189
    %5872 = vmatpush.bf16.msra.mxu0 %v5185
    %5873 = vmatmul.bf16.gmra.mxu0 %v4079
    %v5874 = vpop.f32.mrf.mxu0
    %v5875 = vadd.f32 %v5862, %v5874
    %v5876 = vpop.f32.mrf.mxu0
    %5877 = vdwg.mxu0
    %5878 = vmatpush.bf16.msra.mxu0 %v5245
    %5879 = vmatpush.bf16.msra.mxu0 %v5241
    %5880 = vmatpush.bf16.msra.mxu0 %v5237
    %5881 = vmatpush.bf16.msra.mxu0 %v5233
    %5882 = vmatpush.bf16.msra.mxu0 %v5229
    %5883 = vmatpush.bf16.msra.mxu0 %v5225
    %5884 = vmatpush.bf16.msra.mxu0 %v5221
    %5885 = vmatpush.bf16.msra.mxu0 %v5217
    %5886 = vmatmul.bf16.gmra.mxu0 %v4080
    %v5887 = vpop.f32.mrf.mxu0
    %v5888 = vadd.f32 %v5875, %v5887
    %v5889 = vpop.f32.mrf.mxu0
    %5890 = vdwg.mxu0
    %5891 = vmatpush.bf16.msra.mxu0 %v5277
    %5892 = vmatpush.bf16.msra.mxu0 %v5273
    %5893 = vmatpush.bf16.msra.mxu0 %v5269
    %5894 = vmatpush.bf16.msra.mxu0 %v5265
    %5895 = vmatpush.bf16.msra.mxu0 %v5261
    %5896 = vmatpush.bf16.msra.mxu0 %v5257
    %5897 = vmatpush.bf16.msra.mxu0 %v5253
    %5898 = vmatpush.bf16.msra.mxu0 %v5249
    %5899 = vmatmul.bf16.gmra.mxu0 %v4081
    %v5900 = vpop.f32.mrf.mxu0
    %v5901 = vadd.f32 %v5888, %v5900
    %v5902 = vpop.f32.mrf.mxu0
    %5903 = vdwg.mxu0
    %5904 = vmatpush.bf16.msra.mxu0 %v5309
    %5905 = vmatpush.bf16.msra.mxu0 %v5305
    %5906 = vmatpush.bf16.msra.mxu0 %v5301
    %5907 = vmatpush.bf16.msra.mxu0 %v5297
    %5908 = vmatpush.bf16.msra.mxu0 %v5293
    %5909 = vmatpush.bf16.msra.mxu0 %v5289
    %5910 = vmatpush.bf16.msra.mxu0 %v5285
    %5911 = vmatpush.bf16.msra.mxu0 %v5281
    %5912 = vmatmul.bf16.gmra.mxu0 %v4082
    %v5913 = vpop.f32.mrf.mxu0
    %v5914 = vadd.f32 %v5901, %v5913
    %v5915 = vpop.f32.mrf.mxu0
    %5916 = vdwg.mxu0
    %5917 = vmatpush.bf16.msra.mxu0 %v5341
    %5918 = vmatpush.bf16.msra.mxu0 %v5337
    %5919 = vmatpush.bf16.msra.mxu0 %v5333
    %5920 = vmatpush.bf16.msra.mxu0 %v5329
    %5921 = vmatpush.bf16.msra.mxu0 %v5325
    %5922 = vmatpush.bf16.msra.mxu0 %v5321
    %5923 = vmatpush.bf16.msra.mxu0 %v5317
    %5924 = vmatpush.bf16.msra.mxu0 %v5313
    %5925 = vmatmul.bf16.gmra.mxu0 %v4083
    %v5926 = vpop.f32.mrf.mxu0
    %v5927 = vadd.f32 %v5914, %v5926
    %v5928 = vpop.f32.mrf.mxu0
    %5929 = vdwg.mxu0
    %5930 = vmatpush.bf16.msra.mxu0 %v5373
    %5931 = vmatpush.bf16.msra.mxu0 %v5369
    %5932 = vmatpush.bf16.msra.mxu0 %v5365
    %5933 = vmatpush.bf16.msra.mxu0 %v5361
    %5934 = vmatpush.bf16.msra.mxu0 %v5357
    %5935 = vmatpush.bf16.msra.mxu0 %v5353
    %5936 = vmatpush.bf16.msra.mxu0 %v5349
    %5937 = vmatpush.bf16.msra.mxu0 %v5345
    %5938 = vmatmul.bf16.gmra.mxu0 %v4084
    %v5939 = vpop.f32.mrf.mxu0
    %v5940 = vadd.f32 %v5927, %v5939
    %v5941 = vpop.f32.mrf.mxu0
    %5942 = vdwg.mxu0
    %5943 = vmatpush.bf16.msra.mxu0 %v5150
    %5944 = vmatpush.bf16.msra.mxu0 %v5146
    %5945 = vmatpush.bf16.msra.mxu0 %v5142
    %5946 = vmatpush.bf16.msra.mxu0 %v5138
    %5947 = vmatpush.bf16.msra.mxu0 %v5134
    %5948 = vmatpush.bf16.msra.mxu0 %v5130
    %5949 = vmatpush.bf16.msra.mxu0 %v5126
    %5950 = vmatpush.bf16.msra.mxu0 %v5122
    %5951 = vmatmul.bf16.gmra.mxu0 %v4077
    %v5952 = vpop.f32.mrf.mxu0
    %v5953 = vadd.f32 %v4346, %v5952
    %v5954 = vpop.f32.mrf.mxu0
    %5955 = vdwg.mxu0
    %5956 = vmatpush.bf16.msra.mxu0 %v5182
    %5957 = vmatpush.bf16.msra.mxu0 %v5178
    %5958 = vmatpush.bf16.msra.mxu0 %v5174
    %5959 = vmatpush.bf16.msra.mxu0 %v5170
    %5960 = vmatpush.bf16.msra.mxu0 %v5166
    %5961 = vmatpush.bf16.msra.mxu0 %v5162
    %5962 = vmatpush.bf16.msra.mxu0 %v5158
    %5963 = vmatpush.bf16.msra.mxu0 %v5154
    %5964 = vmatmul.bf16.gmra.mxu0 %v4078
    %v5965 = vpop.f32.mrf.mxu0
    %v5966 = vadd.f32 %v5953, %v5965
    %v5967 = vpop.f32.mrf.mxu0
    %5968 = vdwg.mxu0
    %5969 = vmatpush.bf16.msra.mxu0 %v5214
    %5970 = vmatpush.bf16.msra.mxu0 %v5210
    %5971 = vmatpush.bf16.msra.mxu0 %v5206
    %5972 = vmatpush.bf16.msra.mxu0 %v5202
    %5973 = vmatpush.bf16.msra.mxu0 %v5198
    %5974 = vmatpush.bf16.msra.mxu0 %v5194
    %5975 = vmatpush.bf16.msra.mxu0 %v5190
    %5976 = vmatpush.bf16.msra.mxu0 %v5186
    %5977 = vmatmul.bf16.gmra.mxu0 %v4079
    %v5978 = vpop.f32.mrf.mxu0
    %v5979 = vadd.f32 %v5966, %v5978
    %v5980 = vpop.f32.mrf.mxu0
    %5981 = vdwg.mxu0
    %5982 = vmatpush.bf16.msra.mxu0 %v5246
    %5983 = vmatpush.bf16.msra.mxu0 %v5242
    %5984 = vmatpush.bf16.msra.mxu0 %v5238
    %5985 = vmatpush.bf16.msra.mxu0 %v5234
    %5986 = vmatpush.bf16.msra.mxu0 %v5230
    %5987 = vmatpush.bf16.msra.mxu0 %v5226
    %5988 = vmatpush.bf16.msra.mxu0 %v5222
    %5989 = vmatpush.bf16.msra.mxu0 %v5218
    %5990 = vmatmul.bf16.gmra.mxu0 %v4080
    %v5991 = vpop.f32.mrf.mxu0
    %v5992 = vadd.f32 %v5979, %v5991
    %v5993 = vpop.f32.mrf.mxu0
    %5994 = vdwg.mxu0
    %5995 = vmatpush.bf16.msra.mxu0 %v5278
    %5996 = vmatpush.bf16.msra.mxu0 %v5274
    %5997 = vmatpush.bf16.msra.mxu0 %v5270
    %5998 = vmatpush.bf16.msra.mxu0 %v5266
    %5999 = vmatpush.bf16.msra.mxu0 %v5262
    %6000 = vmatpush.bf16.msra.mxu0 %v5258
    %6001 = vmatpush.bf16.msra.mxu0 %v5254
    %6002 = vmatpush.bf16.msra.mxu0 %v5250
    %6003 = vmatmul.bf16.gmra.mxu0 %v4081
    %v6004 = vpop.f32.mrf.mxu0
    %v6005 = vadd.f32 %v5992, %v6004
    %v6006 = vpop.f32.mrf.mxu0
    %6007 = vdwg.mxu0
    %6008 = vmatpush.bf16.msra.mxu0 %v5310
    %6009 = vmatpush.bf16.msra.mxu0 %v5306
    %6010 = vmatpush.bf16.msra.mxu0 %v5302
    %6011 = vmatpush.bf16.msra.mxu0 %v5298
    %6012 = vmatpush.bf16.msra.mxu0 %v5294
    %6013 = vmatpush.bf16.msra.mxu0 %v5290
    %6014 = vmatpush.bf16.msra.mxu0 %v5286
    %6015 = vmatpush.bf16.msra.mxu0 %v5282
    %6016 = vmatmul.bf16.gmra.mxu0 %v4082
    %v6017 = vpop.f32.mrf.mxu0
    %v6018 = vadd.f32 %v6005, %v6017
    %v6019 = vpop.f32.mrf.mxu0
    %6020 = vdwg.mxu0
    %6021 = vmatpush.bf16.msra.mxu0 %v5342
    %6022 = vmatpush.bf16.msra.mxu0 %v5338
    %6023 = vmatpush.bf16.msra.mxu0 %v5334
    %6024 = vmatpush.bf16.msra.mxu0 %v5330
    %6025 = vmatpush.bf16.msra.mxu0 %v5326
    %6026 = vmatpush.bf16.msra.mxu0 %v5322
    %6027 = vmatpush.bf16.msra.mxu0 %v5318
    %6028 = vmatpush.bf16.msra.mxu0 %v5314
    %6029 = vmatmul.bf16.gmra.mxu0 %v4083
    %v6030 = vpop.f32.mrf.mxu0
    %v6031 = vadd.f32 %v6018, %v6030
    %v6032 = vpop.f32.mrf.mxu0
    %6033 = vdwg.mxu0
    %6034 = vmatpush.bf16.msra.mxu0 %v5374
    %6035 = vmatpush.bf16.msra.mxu0 %v5370
    %6036 = vmatpush.bf16.msra.mxu0 %v5366
    %6037 = vmatpush.bf16.msra.mxu0 %v5362
    %6038 = vmatpush.bf16.msra.mxu0 %v5358
    %6039 = vmatpush.bf16.msra.mxu0 %v5354
    %6040 = vmatpush.bf16.msra.mxu0 %v5350
    %6041 = vmatpush.bf16.msra.mxu0 %v5346
    %6042 = vmatmul.bf16.gmra.mxu0 %v4084
    %v6043 = vpop.f32.mrf.mxu0
    %v6044 = vadd.f32 %v6031, %v6043
    %v6045 = vpop.f32.mrf.mxu0
    %6046 = vdwg.mxu0
    %v6047 = vmax.f32 %v5732, 0.0
    %v6048 = vmax.f32 %v5836, 0.0
    %v6049 = vmax.f32 %v5940, 0.0
    %v6050 = vmax.f32 %v6044, 0.0
    %v6051 = vpack.c.bf16 %v6047, %v6047
    %v6052 = vpack.c.bf16 %v6048, %v6048
    %v6053 = vpack.c.bf16 %v6049, %v6049
    %v6054 = vpack.c.bf16 %v6050, %v6050
    %v6055 = vld [vmem:[#allocation11] sm:$0xff]
    %v6056 = vld [vmem:[#allocation11 + $0x8] sm:$0xff]
    %v6057 = vld [vmem:[#allocation11 + $0x10] sm:$0xff]
    %v6058 = vld [vmem:[#allocation11 + $0x18] sm:$0xff]
    %v6059 = vld [vmem:[#allocation11 + $0x20] sm:$0xff]
    %v6060 = vld [vmem:[#allocation11 + $0x28] sm:$0xff]
    %v6061 = vld [vmem:[#allocation11 + $0x30] sm:$0xff]
    %v6062 = vld [vmem:[#allocation11 + $0x38] sm:$0xff]
    %v6063 = vld [vmem:[#allocation11 + $0x40] sm:$0xff]
    %v6064 = vld [vmem:[#allocation11 + $0x48] sm:$0xff]
    %v6065 = vld [vmem:[#allocation11 + $0x50] sm:$0xff]
    %v6066 = vld [vmem:[#allocation11 + $0x58] sm:$0xff]
    %v6067 = vld [vmem:[#allocation11 + $0x60] sm:$0xff]
    %v6068 = vld [vmem:[#allocation11 + $0x68] sm:$0xff]
    %v6069 = vld [vmem:[#allocation11 + $0x70] sm:$0xff]
    %v6070 = vld [vmem:[#allocation11 + $0x78] sm:$0xff]
    %v6071 = vld [vmem:[#allocation11 + $0x80] sm:$0xff]
    %v6072 = vld [vmem:[#allocation11 + $0x88] sm:$0xff]
    %v6073 = vld [vmem:[#allocation11 + $0x90] sm:$0xff]
    %v6074 = vld [vmem:[#allocation11 + $0x98] sm:$0xff]
    %v6075 = vld [vmem:[#allocation11 + $0xa0] sm:$0xff]
    %v6076 = vld [vmem:[#allocation11 + $0xa8] sm:$0xff]
    %v6077 = vld [vmem:[#allocation11 + $0xb0] sm:$0xff]
    %v6078 = vld [vmem:[#allocation11 + $0xb8] sm:$0xff]
    %v6079 = vld [vmem:[#allocation11 + $0xc0] sm:$0xff]
    %v6080 = vld [vmem:[#allocation11 + $0xc8] sm:$0xff]
    %v6081 = vld [vmem:[#allocation11 + $0xd0] sm:$0xff]
    %v6082 = vld [vmem:[#allocation11 + $0xd8] sm:$0xff]
    %v6083 = vld [vmem:[#allocation11 + $0xe0] sm:$0xff]
    %v6084 = vld [vmem:[#allocation11 + $0xe8] sm:$0xff]
    %v6085 = vld [vmem:[#allocation11 + $0xf0] sm:$0xff]
    %v6086 = vld [vmem:[#allocation11 + $0xf8] sm:$0xff]
    %v6087 = vld [vmem:[#allocation11 + $0x100] sm:$0xff]
    %v6088 = vld [vmem:[#allocation11 + $0x108] sm:$0xff]
    %v6089 = vld [vmem:[#allocation11 + $0x110] sm:$0xff]
    %v6090 = vld [vmem:[#allocation11 + $0x118] sm:$0xff]
    %v6091 = vld [vmem:[#allocation11 + $0x120] sm:$0xff]
    %v6092 = vld [vmem:[#allocation11 + $0x128] sm:$0xff]
    %v6093 = vld [vmem:[#allocation11 + $0x130] sm:$0xff]
    %v6094 = vld [vmem:[#allocation11 + $0x138] sm:$0xff]
    %v6095 = vld [vmem:[#allocation11 + $0x140] sm:$0xff]
    %v6096 = vld [vmem:[#allocation11 + $0x148] sm:$0xff]
    %v6097 = vld [vmem:[#allocation11 + $0x150] sm:$0xff]
    %v6098 = vld [vmem:[#allocation11 + $0x158] sm:$0xff]
    %v6099 = vld [vmem:[#allocation11 + $0x160] sm:$0xff]
    %v6100 = vld [vmem:[#allocation11 + $0x168] sm:$0xff]
    %v6101 = vld [vmem:[#allocation11 + $0x170] sm:$0xff]
    %v6102 = vld [vmem:[#allocation11 + $0x178] sm:$0xff]
    %v6103 = vld [vmem:[#allocation11 + $0x180] sm:$0xff]
    %v6104 = vld [vmem:[#allocation11 + $0x188] sm:$0xff]
    %v6105 = vld [vmem:[#allocation11 + $0x190] sm:$0xff]
    %v6106 = vld [vmem:[#allocation11 + $0x198] sm:$0xff]
    %v6107 = vld [vmem:[#allocation11 + $0x1a0] sm:$0xff]
    %v6108 = vld [vmem:[#allocation11 + $0x1a8] sm:$0xff]
    %v6109 = vld [vmem:[#allocation11 + $0x1b0] sm:$0xff]
    %v6110 = vld [vmem:[#allocation11 + $0x1b8] sm:$0xff]
    %v6111 = vld [vmem:[#allocation11 + $0x1c0] sm:$0xff]
    %v6112 = vld [vmem:[#allocation11 + $0x1c8] sm:$0xff]
    %v6113 = vld [vmem:[#allocation11 + $0x1d0] sm:$0xff]
    %v6114 = vld [vmem:[#allocation11 + $0x1d8] sm:$0xff]
    %v6115 = vld [vmem:[#allocation11 + $0x1e0] sm:$0xff]
    %v6116 = vld [vmem:[#allocation11 + $0x1e8] sm:$0xff]
    %v6117 = vld [vmem:[#allocation11 + $0x1f0] sm:$0xff]
    %v6118 = vld [vmem:[#allocation11 + $0x1f8] sm:$0xff]
    %v6119 = vld [vmem:[#allocation11 + $0x200] sm:$0xff]
    %v6120 = vld [vmem:[#allocation11 + $0x208] sm:$0xff]
    %v6121 = vld [vmem:[#allocation11 + $0x210] sm:$0xff]
    %v6122 = vld [vmem:[#allocation11 + $0x218] sm:$0xff]
    %v6123 = vld [vmem:[#allocation11 + $0x220] sm:$0xff]
    %v6124 = vld [vmem:[#allocation11 + $0x228] sm:$0xff]
    %v6125 = vld [vmem:[#allocation11 + $0x230] sm:$0xff]
    %v6126 = vld [vmem:[#allocation11 + $0x238] sm:$0xff]
    %v6127 = vld [vmem:[#allocation11 + $0x240] sm:$0xff]
    %v6128 = vld [vmem:[#allocation11 + $0x248] sm:$0xff]
    %v6129 = vld [vmem:[#allocation11 + $0x250] sm:$0xff]
    %v6130 = vld [vmem:[#allocation11 + $0x258] sm:$0xff]
    %v6131 = vld [vmem:[#allocation11 + $0x260] sm:$0xff]
    %v6132 = vld [vmem:[#allocation11 + $0x268] sm:$0xff]
    %v6133 = vld [vmem:[#allocation11 + $0x270] sm:$0xff]
    %v6134 = vld [vmem:[#allocation11 + $0x278] sm:$0xff]
    %v6135 = vld [vmem:[#allocation11 + $0x280] sm:$0xff]
    %v6136 = vld [vmem:[#allocation11 + $0x288] sm:$0xff]
    %v6137 = vld [vmem:[#allocation11 + $0x290] sm:$0xff]
    %v6138 = vld [vmem:[#allocation11 + $0x298] sm:$0xff]
    %v6139 = vld [vmem:[#allocation11 + $0x2a0] sm:$0xff]
    %v6140 = vld [vmem:[#allocation11 + $0x2a8] sm:$0xff]
    %v6141 = vld [vmem:[#allocation11 + $0x2b0] sm:$0xff]
    %v6142 = vld [vmem:[#allocation11 + $0x2b8] sm:$0xff]
    %v6143 = vld [vmem:[#allocation11 + $0x2c0] sm:$0xff]
    %v6144 = vld [vmem:[#allocation11 + $0x2c8] sm:$0xff]
    %v6145 = vld [vmem:[#allocation11 + $0x2d0] sm:$0xff]
    %v6146 = vld [vmem:[#allocation11 + $0x2d8] sm:$0xff]
    %v6147 = vld [vmem:[#allocation11 + $0x2e0] sm:$0xff]
    %v6148 = vld [vmem:[#allocation11 + $0x2e8] sm:$0xff]
    %v6149 = vld [vmem:[#allocation11 + $0x2f0] sm:$0xff]
    %v6150 = vld [vmem:[#allocation11 + $0x2f8] sm:$0xff]
    %v6151 = vld [vmem:[#allocation11 + $0x300] sm:$0xff]
    %v6152 = vld [vmem:[#allocation11 + $0x308] sm:$0xff]
    %v6153 = vld [vmem:[#allocation11 + $0x310] sm:$0xff]
    %v6154 = vld [vmem:[#allocation11 + $0x318] sm:$0xff]
    %v6155 = vld [vmem:[#allocation11 + $0x320] sm:$0xff]
    %v6156 = vld [vmem:[#allocation11 + $0x328] sm:$0xff]
    %v6157 = vld [vmem:[#allocation11 + $0x330] sm:$0xff]
    %v6158 = vld [vmem:[#allocation11 + $0x338] sm:$0xff]
    %v6159 = vld [vmem:[#allocation11 + $0x340] sm:$0xff]
    %v6160 = vld [vmem:[#allocation11 + $0x348] sm:$0xff]
    %v6161 = vld [vmem:[#allocation11 + $0x350] sm:$0xff]
    %v6162 = vld [vmem:[#allocation11 + $0x358] sm:$0xff]
    %v6163 = vld [vmem:[#allocation11 + $0x360] sm:$0xff]
    %v6164 = vld [vmem:[#allocation11 + $0x368] sm:$0xff]
    %v6165 = vld [vmem:[#allocation11 + $0x370] sm:$0xff]
    %v6166 = vld [vmem:[#allocation11 + $0x378] sm:$0xff]
    %v6167 = vld [vmem:[#allocation11 + $0x380] sm:$0xff]
    %v6168 = vld [vmem:[#allocation11 + $0x388] sm:$0xff]
    %v6169 = vld [vmem:[#allocation11 + $0x390] sm:$0xff]
    %v6170 = vld [vmem:[#allocation11 + $0x398] sm:$0xff]
    %v6171 = vld [vmem:[#allocation11 + $0x3a0] sm:$0xff]
    %v6172 = vld [vmem:[#allocation11 + $0x3a8] sm:$0xff]
    %v6173 = vld [vmem:[#allocation11 + $0x3b0] sm:$0xff]
    %v6174 = vld [vmem:[#allocation11 + $0x3b8] sm:$0xff]
    %v6175 = vld [vmem:[#allocation11 + $0x3c0] sm:$0xff]
    %v6176 = vld [vmem:[#allocation11 + $0x3c8] sm:$0xff]
    %v6177 = vld [vmem:[#allocation11 + $0x3d0] sm:$0xff]
    %v6178 = vld [vmem:[#allocation11 + $0x3d8] sm:$0xff]
    %v6179 = vld [vmem:[#allocation11 + $0x3e0] sm:$0xff]
    %v6180 = vld [vmem:[#allocation11 + $0x3e8] sm:$0xff]
    %v6181 = vld [vmem:[#allocation11 + $0x3f0] sm:$0xff]
    %v6182 = vld [vmem:[#allocation11 + $0x3f8] sm:$0xff]
    %v6183 = vld [vmem:[#allocation13] sm:$0xf]
    %v6185 = vperm.slane %v6183, 0
    %v6186 = vperm.slane %v6183, 1
    %v6187 = vperm.slane %v6183, 2
    %v6188 = vperm.slane %v6183, 3
    %v6321 = vunpack.c.l.b16 %v6055
    %v6322 = vunpack.c.h.b16 %v6055
    %v6323 = vunpack.c.l.b16 %v6056
    %v6324 = vunpack.c.h.b16 %v6056
    %v6325 = vunpack.c.l.b16 %v6057
    %v6326 = vunpack.c.h.b16 %v6057
    %v6327 = vunpack.c.l.b16 %v6058
    %v6328 = vunpack.c.h.b16 %v6058
    %v6329 = vunpack.c.l.b16 %v6059
    %v6330 = vunpack.c.h.b16 %v6059
    %v6331 = vunpack.c.l.b16 %v6060
    %v6332 = vunpack.c.h.b16 %v6060
    %v6333 = vunpack.c.l.b16 %v6061
    %v6334 = vunpack.c.h.b16 %v6061
    %v6335 = vunpack.c.l.b16 %v6062
    %v6336 = vunpack.c.h.b16 %v6062
    %v6337 = vunpack.c.l.b16 %v6063
    %v6338 = vunpack.c.h.b16 %v6063
    %v6339 = vunpack.c.l.b16 %v6064
    %v6340 = vunpack.c.h.b16 %v6064
    %v6341 = vunpack.c.l.b16 %v6065
    %v6342 = vunpack.c.h.b16 %v6065
    %v6343 = vunpack.c.l.b16 %v6066
    %v6344 = vunpack.c.h.b16 %v6066
    %v6345 = vunpack.c.l.b16 %v6067
    %v6346 = vunpack.c.h.b16 %v6067
    %v6347 = vunpack.c.l.b16 %v6068
    %v6348 = vunpack.c.h.b16 %v6068
    %v6349 = vunpack.c.l.b16 %v6069
    %v6350 = vunpack.c.h.b16 %v6069
    %v6351 = vunpack.c.l.b16 %v6070
    %v6352 = vunpack.c.h.b16 %v6070
    %v6353 = vunpack.c.l.b16 %v6071
    %v6354 = vunpack.c.h.b16 %v6071
    %v6355 = vunpack.c.l.b16 %v6072
    %v6356 = vunpack.c.h.b16 %v6072
    %v6357 = vunpack.c.l.b16 %v6073
    %v6358 = vunpack.c.h.b16 %v6073
    %v6359 = vunpack.c.l.b16 %v6074
    %v6360 = vunpack.c.h.b16 %v6074
    %v6361 = vunpack.c.l.b16 %v6075
    %v6362 = vunpack.c.h.b16 %v6075
    %v6363 = vunpack.c.l.b16 %v6076
    %v6364 = vunpack.c.h.b16 %v6076
    %v6365 = vunpack.c.l.b16 %v6077
    %v6366 = vunpack.c.h.b16 %v6077
    %v6367 = vunpack.c.l.b16 %v6078
    %v6368 = vunpack.c.h.b16 %v6078
    %v6369 = vunpack.c.l.b16 %v6079
    %v6370 = vunpack.c.h.b16 %v6079
    %v6371 = vunpack.c.l.b16 %v6080
    %v6372 = vunpack.c.h.b16 %v6080
    %v6373 = vunpack.c.l.b16 %v6081
    %v6374 = vunpack.c.h.b16 %v6081
    %v6375 = vunpack.c.l.b16 %v6082
    %v6376 = vunpack.c.h.b16 %v6082
    %v6377 = vunpack.c.l.b16 %v6083
    %v6378 = vunpack.c.h.b16 %v6083
    %v6379 = vunpack.c.l.b16 %v6084
    %v6380 = vunpack.c.h.b16 %v6084
    %v6381 = vunpack.c.l.b16 %v6085
    %v6382 = vunpack.c.h.b16 %v6085
    %v6383 = vunpack.c.l.b16 %v6086
    %v6384 = vunpack.c.h.b16 %v6086
    %v6385 = vunpack.c.l.b16 %v6087
    %v6386 = vunpack.c.h.b16 %v6087
    %v6387 = vunpack.c.l.b16 %v6088
    %v6388 = vunpack.c.h.b16 %v6088
    %v6389 = vunpack.c.l.b16 %v6089
    %v6390 = vunpack.c.h.b16 %v6089
    %v6391 = vunpack.c.l.b16 %v6090
    %v6392 = vunpack.c.h.b16 %v6090
    %v6393 = vunpack.c.l.b16 %v6091
    %v6394 = vunpack.c.h.b16 %v6091
    %v6395 = vunpack.c.l.b16 %v6092
    %v6396 = vunpack.c.h.b16 %v6092
    %v6397 = vunpack.c.l.b16 %v6093
    %v6398 = vunpack.c.h.b16 %v6093
    %v6399 = vunpack.c.l.b16 %v6094
    %v6400 = vunpack.c.h.b16 %v6094
    %v6401 = vunpack.c.l.b16 %v6095
    %v6402 = vunpack.c.h.b16 %v6095
    %v6403 = vunpack.c.l.b16 %v6096
    %v6404 = vunpack.c.h.b16 %v6096
    %v6405 = vunpack.c.l.b16 %v6097
    %v6406 = vunpack.c.h.b16 %v6097
    %v6407 = vunpack.c.l.b16 %v6098
    %v6408 = vunpack.c.h.b16 %v6098
    %v6409 = vunpack.c.l.b16 %v6099
    %v6410 = vunpack.c.h.b16 %v6099
    %v6411 = vunpack.c.l.b16 %v6100
    %v6412 = vunpack.c.h.b16 %v6100
    %v6413 = vunpack.c.l.b16 %v6101
    %v6414 = vunpack.c.h.b16 %v6101
    %v6415 = vunpack.c.l.b16 %v6102
    %v6416 = vunpack.c.h.b16 %v6102
    %v6417 = vunpack.c.l.b16 %v6103
    %v6418 = vunpack.c.h.b16 %v6103
    %v6419 = vunpack.c.l.b16 %v6104
    %v6420 = vunpack.c.h.b16 %v6104
    %v6421 = vunpack.c.l.b16 %v6105
    %v6422 = vunpack.c.h.b16 %v6105
    %v6423 = vunpack.c.l.b16 %v6106
    %v6424 = vunpack.c.h.b16 %v6106
    %v6425 = vunpack.c.l.b16 %v6107
    %v6426 = vunpack.c.h.b16 %v6107
    %v6427 = vunpack.c.l.b16 %v6108
    %v6428 = vunpack.c.h.b16 %v6108
    %v6429 = vunpack.c.l.b16 %v6109
    %v6430 = vunpack.c.h.b16 %v6109
    %v6431 = vunpack.c.l.b16 %v6110
    %v6432 = vunpack.c.h.b16 %v6110
    %v6433 = vunpack.c.l.b16 %v6111
    %v6434 = vunpack.c.h.b16 %v6111
    %v6435 = vunpack.c.l.b16 %v6112
    %v6436 = vunpack.c.h.b16 %v6112
    %v6437 = vunpack.c.l.b16 %v6113
    %v6438 = vunpack.c.h.b16 %v6113
    %v6439 = vunpack.c.l.b16 %v6114
    %v6440 = vunpack.c.h.b16 %v6114
    %v6441 = vunpack.c.l.b16 %v6115
    %v6442 = vunpack.c.h.b16 %v6115
    %v6443 = vunpack.c.l.b16 %v6116
    %v6444 = vunpack.c.h.b16 %v6116
    %v6445 = vunpack.c.l.b16 %v6117
    %v6446 = vunpack.c.h.b16 %v6117
    %v6447 = vunpack.c.l.b16 %v6118
    %v6448 = vunpack.c.h.b16 %v6118
    %v6449 = vunpack.c.l.b16 %v6119
    %v6450 = vunpack.c.h.b16 %v6119
    %v6451 = vunpack.c.l.b16 %v6120
    %v6452 = vunpack.c.h.b16 %v6120
    %v6453 = vunpack.c.l.b16 %v6121
    %v6454 = vunpack.c.h.b16 %v6121
    %v6455 = vunpack.c.l.b16 %v6122
    %v6456 = vunpack.c.h.b16 %v6122
    %v6457 = vunpack.c.l.b16 %v6123
    %v6458 = vunpack.c.h.b16 %v6123
    %v6459 = vunpack.c.l.b16 %v6124
    %v6460 = vunpack.c.h.b16 %v6124
    %v6461 = vunpack.c.l.b16 %v6125
    %v6462 = vunpack.c.h.b16 %v6125
    %v6463 = vunpack.c.l.b16 %v6126
    %v6464 = vunpack.c.h.b16 %v6126
    %v6465 = vunpack.c.l.b16 %v6127
    %v6466 = vunpack.c.h.b16 %v6127
    %v6467 = vunpack.c.l.b16 %v6128
    %v6468 = vunpack.c.h.b16 %v6128
    %v6469 = vunpack.c.l.b16 %v6129
    %v6470 = vunpack.c.h.b16 %v6129
    %v6471 = vunpack.c.l.b16 %v6130
    %v6472 = vunpack.c.h.b16 %v6130
    %v6473 = vunpack.c.l.b16 %v6131
    %v6474 = vunpack.c.h.b16 %v6131
    %v6475 = vunpack.c.l.b16 %v6132
    %v6476 = vunpack.c.h.b16 %v6132
    %v6477 = vunpack.c.l.b16 %v6133
    %v6478 = vunpack.c.h.b16 %v6133
    %v6479 = vunpack.c.l.b16 %v6134
    %v6480 = vunpack.c.h.b16 %v6134
    %v6481 = vunpack.c.l.b16 %v6135
    %v6482 = vunpack.c.h.b16 %v6135
    %v6483 = vunpack.c.l.b16 %v6136
    %v6484 = vunpack.c.h.b16 %v6136
    %v6485 = vunpack.c.l.b16 %v6137
    %v6486 = vunpack.c.h.b16 %v6137
    %v6487 = vunpack.c.l.b16 %v6138
    %v6488 = vunpack.c.h.b16 %v6138
    %v6489 = vunpack.c.l.b16 %v6139
    %v6490 = vunpack.c.h.b16 %v6139
    %v6491 = vunpack.c.l.b16 %v6140
    %v6492 = vunpack.c.h.b16 %v6140
    %v6493 = vunpack.c.l.b16 %v6141
    %v6494 = vunpack.c.h.b16 %v6141
    %v6495 = vunpack.c.l.b16 %v6142
    %v6496 = vunpack.c.h.b16 %v6142
    %v6497 = vunpack.c.l.b16 %v6143
    %v6498 = vunpack.c.h.b16 %v6143
    %v6499 = vunpack.c.l.b16 %v6144
    %v6500 = vunpack.c.h.b16 %v6144
    %v6501 = vunpack.c.l.b16 %v6145
    %v6502 = vunpack.c.h.b16 %v6145
    %v6503 = vunpack.c.l.b16 %v6146
    %v6504 = vunpack.c.h.b16 %v6146
    %v6505 = vunpack.c.l.b16 %v6147
    %v6506 = vunpack.c.h.b16 %v6147
    %v6507 = vunpack.c.l.b16 %v6148
    %v6508 = vunpack.c.h.b16 %v6148
    %v6509 = vunpack.c.l.b16 %v6149
    %v6510 = vunpack.c.h.b16 %v6149
    %v6511 = vunpack.c.l.b16 %v6150
    %v6512 = vunpack.c.h.b16 %v6150
    %v6513 = vunpack.c.l.b16 %v6151
    %v6514 = vunpack.c.h.b16 %v6151
    %v6515 = vunpack.c.l.b16 %v6152
    %v6516 = vunpack.c.h.b16 %v6152
    %v6517 = vunpack.c.l.b16 %v6153
    %v6518 = vunpack.c.h.b16 %v6153
    %v6519 = vunpack.c.l.b16 %v6154
    %v6520 = vunpack.c.h.b16 %v6154
    %v6521 = vunpack.c.l.b16 %v6155
    %v6522 = vunpack.c.h.b16 %v6155
    %v6523 = vunpack.c.l.b16 %v6156
    %v6524 = vunpack.c.h.b16 %v6156
    %v6525 = vunpack.c.l.b16 %v6157
    %v6526 = vunpack.c.h.b16 %v6157
    %v6527 = vunpack.c.l.b16 %v6158
    %v6528 = vunpack.c.h.b16 %v6158
    %v6529 = vunpack.c.l.b16 %v6159
    %v6530 = vunpack.c.h.b16 %v6159
    %v6531 = vunpack.c.l.b16 %v6160
    %v6532 = vunpack.c.h.b16 %v6160
    %v6533 = vunpack.c.l.b16 %v6161
    %v6534 = vunpack.c.h.b16 %v6161
    %v6535 = vunpack.c.l.b16 %v6162
    %v6536 = vunpack.c.h.b16 %v6162
    %v6537 = vunpack.c.l.b16 %v6163
    %v6538 = vunpack.c.h.b16 %v6163
    %v6539 = vunpack.c.l.b16 %v6164
    %v6540 = vunpack.c.h.b16 %v6164
    %v6541 = vunpack.c.l.b16 %v6165
    %v6542 = vunpack.c.h.b16 %v6165
    %v6543 = vunpack.c.l.b16 %v6166
    %v6544 = vunpack.c.h.b16 %v6166
    %v6545 = vunpack.c.l.b16 %v6167
    %v6546 = vunpack.c.h.b16 %v6167
    %v6547 = vunpack.c.l.b16 %v6168
    %v6548 = vunpack.c.h.b16 %v6168
    %v6549 = vunpack.c.l.b16 %v6169
    %v6550 = vunpack.c.h.b16 %v6169
    %v6551 = vunpack.c.l.b16 %v6170
    %v6552 = vunpack.c.h.b16 %v6170
    %v6553 = vunpack.c.l.b16 %v6171
    %v6554 = vunpack.c.h.b16 %v6171
    %v6555 = vunpack.c.l.b16 %v6172
    %v6556 = vunpack.c.h.b16 %v6172
    %v6557 = vunpack.c.l.b16 %v6173
    %v6558 = vunpack.c.h.b16 %v6173
    %v6559 = vunpack.c.l.b16 %v6174
    %v6560 = vunpack.c.h.b16 %v6174
    %v6561 = vunpack.c.l.b16 %v6175
    %v6562 = vunpack.c.h.b16 %v6175
    %v6563 = vunpack.c.l.b16 %v6176
    %v6564 = vunpack.c.h.b16 %v6176
    %v6565 = vunpack.c.l.b16 %v6177
    %v6566 = vunpack.c.h.b16 %v6177
    %v6567 = vunpack.c.l.b16 %v6178
    %v6568 = vunpack.c.h.b16 %v6178
    %v6569 = vunpack.c.l.b16 %v6179
    %v6570 = vunpack.c.h.b16 %v6179
    %v6571 = vunpack.c.l.b16 %v6180
    %v6572 = vunpack.c.h.b16 %v6180
    %v6573 = vunpack.c.l.b16 %v6181
    %v6574 = vunpack.c.h.b16 %v6181
    %v6575 = vunpack.c.l.b16 %v6182
    %v6576 = vunpack.c.h.b16 %v6182
    %v6577 = vpack.c.b16 %v6325, %v6321
    %v6578 = vpack.c.b16 %v6326, %v6322
    %v6579 = vpack.c.b16 %v6327, %v6323
    %v6580 = vpack.c.b16 %v6328, %v6324
    %v6581 = vpack.c.b16 %v6333, %v6329
    %v6582 = vpack.c.b16 %v6334, %v6330
    %v6583 = vpack.c.b16 %v6335, %v6331
    %v6584 = vpack.c.b16 %v6336, %v6332
    %v6585 = vpack.c.b16 %v6341, %v6337
    %v6586 = vpack.c.b16 %v6342, %v6338
    %v6587 = vpack.c.b16 %v6343, %v6339
    %v6588 = vpack.c.b16 %v6344, %v6340
    %v6589 = vpack.c.b16 %v6349, %v6345
    %v6590 = vpack.c.b16 %v6350, %v6346
    %v6591 = vpack.c.b16 %v6351, %v6347
    %v6592 = vpack.c.b16 %v6352, %v6348
    %v6593 = vpack.c.b16 %v6357, %v6353
    %v6594 = vpack.c.b16 %v6358, %v6354
    %v6595 = vpack.c.b16 %v6359, %v6355
    %v6596 = vpack.c.b16 %v6360, %v6356
    %v6597 = vpack.c.b16 %v6365, %v6361
    %v6598 = vpack.c.b16 %v6366, %v6362
    %v6599 = vpack.c.b16 %v6367, %v6363
    %v6600 = vpack.c.b16 %v6368, %v6364
    %v6601 = vpack.c.b16 %v6373, %v6369
    %v6602 = vpack.c.b16 %v6374, %v6370
    %v6603 = vpack.c.b16 %v6375, %v6371
    %v6604 = vpack.c.b16 %v6376, %v6372
    %v6605 = vpack.c.b16 %v6381, %v6377
    %v6606 = vpack.c.b16 %v6382, %v6378
    %v6607 = vpack.c.b16 %v6383, %v6379
    %v6608 = vpack.c.b16 %v6384, %v6380
    %v6609 = vpack.c.b16 %v6389, %v6385
    %v6610 = vpack.c.b16 %v6390, %v6386
    %v6611 = vpack.c.b16 %v6391, %v6387
    %v6612 = vpack.c.b16 %v6392, %v6388
    %v6613 = vpack.c.b16 %v6397, %v6393
    %v6614 = vpack.c.b16 %v6398, %v6394
    %v6615 = vpack.c.b16 %v6399, %v6395
    %v6616 = vpack.c.b16 %v6400, %v6396
    %v6617 = vpack.c.b16 %v6405, %v6401
    %v6618 = vpack.c.b16 %v6406, %v6402
    %v6619 = vpack.c.b16 %v6407, %v6403
    %v6620 = vpack.c.b16 %v6408, %v6404
    %v6621 = vpack.c.b16 %v6413, %v6409
    %v6622 = vpack.c.b16 %v6414, %v6410
    %v6623 = vpack.c.b16 %v6415, %v6411
    %v6624 = vpack.c.b16 %v6416, %v6412
    %v6625 = vpack.c.b16 %v6421, %v6417
    %v6626 = vpack.c.b16 %v6422, %v6418
    %v6627 = vpack.c.b16 %v6423, %v6419
    %v6628 = vpack.c.b16 %v6424, %v6420
    %v6629 = vpack.c.b16 %v6429, %v6425
    %v6630 = vpack.c.b16 %v6430, %v6426
    %v6631 = vpack.c.b16 %v6431, %v6427
    %v6632 = vpack.c.b16 %v6432, %v6428
    %v6633 = vpack.c.b16 %v6437, %v6433
    %v6634 = vpack.c.b16 %v6438, %v6434
    %v6635 = vpack.c.b16 %v6439, %v6435
    %v6636 = vpack.c.b16 %v6440, %v6436
    %v6637 = vpack.c.b16 %v6445, %v6441
    %v6638 = vpack.c.b16 %v6446, %v6442
    %v6639 = vpack.c.b16 %v6447, %v6443
    %v6640 = vpack.c.b16 %v6448, %v6444
    %v6641 = vpack.c.b16 %v6453, %v6449
    %v6642 = vpack.c.b16 %v6454, %v6450
    %v6643 = vpack.c.b16 %v6455, %v6451
    %v6644 = vpack.c.b16 %v6456, %v6452
    %v6645 = vpack.c.b16 %v6461, %v6457
    %v6646 = vpack.c.b16 %v6462, %v6458
    %v6647 = vpack.c.b16 %v6463, %v6459
    %v6648 = vpack.c.b16 %v6464, %v6460
    %v6649 = vpack.c.b16 %v6469, %v6465
    %v6650 = vpack.c.b16 %v6470, %v6466
    %v6651 = vpack.c.b16 %v6471, %v6467
    %v6652 = vpack.c.b16 %v6472, %v6468
    %v6653 = vpack.c.b16 %v6477, %v6473
    %v6654 = vpack.c.b16 %v6478, %v6474
    %v6655 = vpack.c.b16 %v6479, %v6475
    %v6656 = vpack.c.b16 %v6480, %v6476
    %v6657 = vpack.c.b16 %v6485, %v6481
    %v6658 = vpack.c.b16 %v6486, %v6482
    %v6659 = vpack.c.b16 %v6487, %v6483
    %v6660 = vpack.c.b16 %v6488, %v6484
    %v6661 = vpack.c.b16 %v6493, %v6489
    %v6662 = vpack.c.b16 %v6494, %v6490
    %v6663 = vpack.c.b16 %v6495, %v6491
    %v6664 = vpack.c.b16 %v6496, %v6492
    %v6665 = vpack.c.b16 %v6501, %v6497
    %v6666 = vpack.c.b16 %v6502, %v6498
    %v6667 = vpack.c.b16 %v6503, %v6499
    %v6668 = vpack.c.b16 %v6504, %v6500
    %v6669 = vpack.c.b16 %v6509, %v6505
    %v6670 = vpack.c.b16 %v6510, %v6506
    %v6671 = vpack.c.b16 %v6511, %v6507
    %v6672 = vpack.c.b16 %v6512, %v6508
    %v6673 = vpack.c.b16 %v6517, %v6513
    %v6674 = vpack.c.b16 %v6518, %v6514
    %v6675 = vpack.c.b16 %v6519, %v6515
    %v6676 = vpack.c.b16 %v6520, %v6516
    %v6677 = vpack.c.b16 %v6525, %v6521
    %v6678 = vpack.c.b16 %v6526, %v6522
    %v6679 = vpack.c.b16 %v6527, %v6523
    %v6680 = vpack.c.b16 %v6528, %v6524
    %v6681 = vpack.c.b16 %v6533, %v6529
    %v6682 = vpack.c.b16 %v6534, %v6530
    %v6683 = vpack.c.b16 %v6535, %v6531
    %v6684 = vpack.c.b16 %v6536, %v6532
    %v6685 = vpack.c.b16 %v6541, %v6537
    %v6686 = vpack.c.b16 %v6542, %v6538
    %v6687 = vpack.c.b16 %v6543, %v6539
    %v6688 = vpack.c.b16 %v6544, %v6540
    %v6689 = vpack.c.b16 %v6549, %v6545
    %v6690 = vpack.c.b16 %v6550, %v6546
    %v6691 = vpack.c.b16 %v6551, %v6547
    %v6692 = vpack.c.b16 %v6552, %v6548
    %v6693 = vpack.c.b16 %v6557, %v6553
    %v6694 = vpack.c.b16 %v6558, %v6554
    %v6695 = vpack.c.b16 %v6559, %v6555
    %v6696 = vpack.c.b16 %v6560, %v6556
    %v6697 = vpack.c.b16 %v6565, %v6561
    %v6698 = vpack.c.b16 %v6566, %v6562
    %v6699 = vpack.c.b16 %v6567, %v6563
    %v6700 = vpack.c.b16 %v6568, %v6564
    %v6701 = vpack.c.b16 %v6573, %v6569
    %v6702 = vpack.c.b16 %v6574, %v6570
    %v6703 = vpack.c.b16 %v6575, %v6571
    %v6704 = vpack.c.b16 %v6576, %v6572
    %6833 = vmatpush.bf16.msra.mxu0 %v6605
    %6834 = vmatpush.bf16.msra.mxu0 %v6601
    %6835 = vmatpush.bf16.msra.mxu0 %v6597
    %6836 = vmatpush.bf16.msra.mxu0 %v6593
    %6837 = vmatpush.bf16.msra.mxu0 %v6589
    %6838 = vmatpush.bf16.msra.mxu0 %v6585
    %6839 = vmatpush.bf16.msra.mxu0 %v6581
    %6840 = vmatpush.bf16.msra.mxu0 %v6577
    %6841 = vmatmul.bf16.gmra.mxu0 %v6051
    %v6842 = vpop.f32.mrf.mxu0
    %v6843 = vadd.f32 %v6185, %v6842
    %v6844 = vpop.f32.mrf.mxu0
    %6845 = vdwg.mxu0
    %6846 = vmatpush.bf16.msra.mxu0 %v6637
    %6847 = vmatpush.bf16.msra.mxu0 %v6633
    %6848 = vmatpush.bf16.msra.mxu0 %v6629
    %6849 = vmatpush.bf16.msra.mxu0 %v6625
    %6850 = vmatpush.bf16.msra.mxu0 %v6621
    %6851 = vmatpush.bf16.msra.mxu0 %v6617
    %6852 = vmatpush.bf16.msra.mxu0 %v6613
    %6853 = vmatpush.bf16.msra.mxu0 %v6609
    %6854 = vmatmul.bf16.gmra.mxu0 %v6052
    %v6855 = vpop.f32.mrf.mxu0
    %v6856 = vadd.f32 %v6843, %v6855
    %v6857 = vpop.f32.mrf.mxu0
    %6858 = vdwg.mxu0
    %6859 = vmatpush.bf16.msra.mxu0 %v6669
    %6860 = vmatpush.bf16.msra.mxu0 %v6665
    %6861 = vmatpush.bf16.msra.mxu0 %v6661
    %6862 = vmatpush.bf16.msra.mxu0 %v6657
    %6863 = vmatpush.bf16.msra.mxu0 %v6653
    %6864 = vmatpush.bf16.msra.mxu0 %v6649
    %6865 = vmatpush.bf16.msra.mxu0 %v6645
    %6866 = vmatpush.bf16.msra.mxu0 %v6641
    %6867 = vmatmul.bf16.gmra.mxu0 %v6053
    %v6868 = vpop.f32.mrf.mxu0
    %v6869 = vadd.f32 %v6856, %v6868
    %v6870 = vpop.f32.mrf.mxu0
    %6871 = vdwg.mxu0
    %6872 = vmatpush.bf16.msra.mxu0 %v6701
    %6873 = vmatpush.bf16.msra.mxu0 %v6697
    %6874 = vmatpush.bf16.msra.mxu0 %v6693
    %6875 = vmatpush.bf16.msra.mxu0 %v6689
    %6876 = vmatpush.bf16.msra.mxu0 %v6685
    %6877 = vmatpush.bf16.msra.mxu0 %v6681
    %6878 = vmatpush.bf16.msra.mxu0 %v6677
    %6879 = vmatpush.bf16.msra.mxu0 %v6673
    %6880 = vmatmul.bf16.gmra.mxu0 %v6054
    %v6881 = vpop.f32.mrf.mxu0
    %v6882 = vadd.f32 %v6869, %v6881
    %v6883 = vpop.f32.mrf.mxu0
    %6884 = vdwg.mxu0
    %6885 = vmatpush.bf16.msra.mxu0 %v6606
    %6886 = vmatpush.bf16.msra.mxu0 %v6602
    %6887 = vmatpush.bf16.msra.mxu0 %v6598
    %6888 = vmatpush.bf16.msra.mxu0 %v6594
    %6889 = vmatpush.bf16.msra.mxu0 %v6590
    %6890 = vmatpush.bf16.msra.mxu0 %v6586
    %6891 = vmatpush.bf16.msra.mxu0 %v6582
    %6892 = vmatpush.bf16.msra.mxu0 %v6578
    %6893 = vmatmul.bf16.gmra.mxu0 %v6051
    %v6894 = vpop.f32.mrf.mxu0
    %v6895 = vadd.f32 %v6186, %v6894
    %v6896 = vpop.f32.mrf.mxu0
    %6897 = vdwg.mxu0
    %6898 = vmatpush.bf16.msra.mxu0 %v6638
    %6899 = vmatpush.bf16.msra.mxu0 %v6634
    %6900 = vmatpush.bf16.msra.mxu0 %v6630
    %6901 = vmatpush.bf16.msra.mxu0 %v6626
    %6902 = vmatpush.bf16.msra.mxu0 %v6622
    %6903 = vmatpush.bf16.msra.mxu0 %v6618
    %6904 = vmatpush.bf16.msra.mxu0 %v6614
    %6905 = vmatpush.bf16.msra.mxu0 %v6610
    %6906 = vmatmul.bf16.gmra.mxu0 %v6052
    %v6907 = vpop.f32.mrf.mxu0
    %v6908 = vadd.f32 %v6895, %v6907
    %v6909 = vpop.f32.mrf.mxu0
    %6910 = vdwg.mxu0
    %6911 = vmatpush.bf16.msra.mxu0 %v6670
    %6912 = vmatpush.bf16.msra.mxu0 %v6666
    %6913 = vmatpush.bf16.msra.mxu0 %v6662
    %6914 = vmatpush.bf16.msra.mxu0 %v6658
    %6915 = vmatpush.bf16.msra.mxu0 %v6654
    %6916 = vmatpush.bf16.msra.mxu0 %v6650
    %6917 = vmatpush.bf16.msra.mxu0 %v6646
    %6918 = vmatpush.bf16.msra.mxu0 %v6642
    %6919 = vmatmul.bf16.gmra.mxu0 %v6053
    %v6920 = vpop.f32.mrf.mxu0
    %v6921 = vadd.f32 %v6908, %v6920
    %v6922 = vpop.f32.mrf.mxu0
    %6923 = vdwg.mxu0
    %6924 = vmatpush.bf16.msra.mxu0 %v6702
    %6925 = vmatpush.bf16.msra.mxu0 %v6698
    %6926 = vmatpush.bf16.msra.mxu0 %v6694
    %6927 = vmatpush.bf16.msra.mxu0 %v6690
    %6928 = vmatpush.bf16.msra.mxu0 %v6686
    %6929 = vmatpush.bf16.msra.mxu0 %v6682
    %6930 = vmatpush.bf16.msra.mxu0 %v6678
    %6931 = vmatpush.bf16.msra.mxu0 %v6674
    %6932 = vmatmul.bf16.gmra.mxu0 %v6054
    %v6933 = vpop.f32.mrf.mxu0
    %v6934 = vadd.f32 %v6921, %v6933
    %v6935 = vpop.f32.mrf.mxu0
    %6936 = vdwg.mxu0
    %6937 = vmatpush.bf16.msra.mxu0 %v6607
    %6938 = vmatpush.bf16.msra.mxu0 %v6603
    %6939 = vmatpush.bf16.msra.mxu0 %v6599
    %6940 = vmatpush.bf16.msra.mxu0 %v6595
    %6941 = vmatpush.bf16.msra.mxu0 %v6591
    %6942 = vmatpush.bf16.msra.mxu0 %v6587
    %6943 = vmatpush.bf16.msra.mxu0 %v6583
    %6944 = vmatpush.bf16.msra.mxu0 %v6579
    %6945 = vmatmul.bf16.gmra.mxu0 %v6051
    %v6946 = vpop.f32.mrf.mxu0
    %v6947 = vadd.f32 %v6187, %v6946
    %v6948 = vpop.f32.mrf.mxu0
    %6949 = vdwg.mxu0
    %6950 = vmatpush.bf16.msra.mxu0 %v6639
    %6951 = vmatpush.bf16.msra.mxu0 %v6635
    %6952 = vmatpush.bf16.msra.mxu0 %v6631
    %6953 = vmatpush.bf16.msra.mxu0 %v6627
    %6954 = vmatpush.bf16.msra.mxu0 %v6623
    %6955 = vmatpush.bf16.msra.mxu0 %v6619
    %6956 = vmatpush.bf16.msra.mxu0 %v6615
    %6957 = vmatpush.bf16.msra.mxu0 %v6611
    %6958 = vmatmul.bf16.gmra.mxu0 %v6052
    %v6959 = vpop.f32.mrf.mxu0
    %v6960 = vadd.f32 %v6947, %v6959
    %v6961 = vpop.f32.mrf.mxu0
    %6962 = vdwg.mxu0
    %6963 = vmatpush.bf16.msra.mxu0 %v6671
    %6964 = vmatpush.bf16.msra.mxu0 %v6667
    %6965 = vmatpush.bf16.msra.mxu0 %v6663
    %6966 = vmatpush.bf16.msra.mxu0 %v6659
    %6967 = vmatpush.bf16.msra.mxu0 %v6655
    %6968 = vmatpush.bf16.msra.mxu0 %v6651
    %6969 = vmatpush.bf16.msra.mxu0 %v6647
    %6970 = vmatpush.bf16.msra.mxu0 %v6643
    %6971 = vmatmul.bf16.gmra.mxu0 %v6053
    %v6972 = vpop.f32.mrf.mxu0
    %v6973 = vadd.f32 %v6960, %v6972
    %v6974 = vpop.f32.mrf.mxu0
    %6975 = vdwg.mxu0
    %6976 = vmatpush.bf16.msra.mxu0 %v6703
    %6977 = vmatpush.bf16.msra.mxu0 %v6699
    %6978 = vmatpush.bf16.msra.mxu0 %v6695
    %6979 = vmatpush.bf16.msra.mxu0 %v6691
    %6980 = vmatpush.bf16.msra.mxu0 %v6687
    %6981 = vmatpush.bf16.msra.mxu0 %v6683
    %6982 = vmatpush.bf16.msra.mxu0 %v6679
    %6983 = vmatpush.bf16.msra.mxu0 %v6675
    %6984 = vmatmul.bf16.gmra.mxu0 %v6054
    %v6985 = vpop.f32.mrf.mxu0
    %v6986 = vadd.f32 %v6973, %v6985
    %v6987 = vpop.f32.mrf.mxu0
    %6988 = vdwg.mxu0
    %6989 = vmatpush.bf16.msra.mxu0 %v6608
    %6990 = vmatpush.bf16.msra.mxu0 %v6604
    %6991 = vmatpush.bf16.msra.mxu0 %v6600
    %6992 = vmatpush.bf16.msra.mxu0 %v6596
    %6993 = vmatpush.bf16.msra.mxu0 %v6592
    %6994 = vmatpush.bf16.msra.mxu0 %v6588
    %6995 = vmatpush.bf16.msra.mxu0 %v6584
    %6996 = vmatpush.bf16.msra.mxu0 %v6580
    %6997 = vmatmul.bf16.gmra.mxu0 %v6051
    %v6998 = vpop.f32.mrf.mxu0
    %v6999 = vadd.f32 %v6188, %v6998
    %v7000 = vpop.f32.mrf.mxu0
    %7001 = vdwg.mxu0
    %7002 = vmatpush.bf16.msra.mxu0 %v6640
    %7003 = vmatpush.bf16.msra.mxu0 %v6636
    %7004 = vmatpush.bf16.msra.mxu0 %v6632
    %7005 = vmatpush.bf16.msra.mxu0 %v6628
    %7006 = vmatpush.bf16.msra.mxu0 %v6624
    %7007 = vmatpush.bf16.msra.mxu0 %v6620
    %7008 = vmatpush.bf16.msra.mxu0 %v6616
    %7009 = vmatpush.bf16.msra.mxu0 %v6612
    %7010 = vmatmul.bf16.gmra.mxu0 %v6052
    %v7011 = vpop.f32.mrf.mxu0
    %v7012 = vadd.f32 %v6999, %v7011
    %v7013 = vpop.f32.mrf.mxu0
    %7014 = vdwg.mxu0
    %7015 = vmatpush.bf16.msra.mxu0 %v6672
    %7016 = vmatpush.bf16.msra.mxu0 %v6668
    %7017 = vmatpush.bf16.msra.mxu0 %v6664
    %7018 = vmatpush.bf16.msra.mxu0 %v6660
    %7019 = vmatpush.bf16.msra.mxu0 %v6656
    %7020 = vmatpush.bf16.msra.mxu0 %v6652
    %7021 = vmatpush.bf16.msra.mxu0 %v6648
    %7022 = vmatpush.bf16.msra.mxu0 %v6644
    %7023 = vmatmul.bf16.gmra.mxu0 %v6053
    %v7024 = vpop.f32.mrf.mxu0
    %v7025 = vadd.f32 %v7012, %v7024
    %v7026 = vpop.f32.mrf.mxu0
    %7027 = vdwg.mxu0
    %7028 = vmatpush.bf16.msra.mxu0 %v6704
    %7029 = vmatpush.bf16.msra.mxu0 %v6700
    %7030 = vmatpush.bf16.msra.mxu0 %v6696
    %7031 = vmatpush.bf16.msra.mxu0 %v6692
    %7032 = vmatpush.bf16.msra.mxu0 %v6688
    %7033 = vmatpush.bf16.msra.mxu0 %v6684
    %7034 = vmatpush.bf16.msra.mxu0 %v6680
    %7035 = vmatpush.bf16.msra.mxu0 %v6676
    %7036 = vmatmul.bf16.gmra.mxu0 %v6054
    %v7037 = vpop.f32.mrf.mxu0
    %v7038 = vadd.f32 %v7025, %v7037
    %v7039 = vpop.f32.mrf.mxu0
    %7040 = vdwg.mxu0
    %v7045 = vrot.slane %v6934, 6
    %v7046 = vrot.slane %v6986, 4
    %v7047 = vrot.slane %v7038, 2
    %vm7048 = vcmask 1041408
    %v7049 = vsel %vm7048, %v6882, %v7045
    %vm7050 = vcmask 1045508
    %v7051 = vsel %vm7050, %v7046, %v7047
    %vm7052 = vcmask 1043456
    %v7053 = vsel %vm7052, %v7049, %v7051
    %7055 = vst [vmem:[#allocation14] sm:$0xff] %v7053
    // Predicated region
    $region58: #{tpu_custom_call.1} parent=1 // pred_check
      _
    $region59: #{tpu_custom_call.1} parent=1 // pred_check_branch
      %7057 = sbr.rel (0) target = $region61
    $region60: #{tpu_custom_call.1} parent=1 // pred_region
      %7059 = vsyncadd [#allocation4], 0
      %s7061 = sshll.u32 [#allocation14], 4
      %s7062 = int_to_ptr.vmem [resolvable:$true] %s7061
      %s7063 = sshll.u32 %s7, 4
      %s7064 = int_to_ptr.hbm [resolvable:$true] %s7063
      %7066 = dma.vmem_to_hbm [thread:$0]  %s7062, 128, %s7064, [#allocation4]
    $region61: #{tpu_custom_call.1} parent=1 // pred_fallthru
      _
    // Predicated region
    $region62: #{tpu_custom_call.1} parent=1 // pred_check
      _
    $region63: #{tpu_custom_call.1} parent=1 // pred_check_branch
      %7068 = sbr.rel (0) target = $region65
    $region64: #{tpu_custom_call.1} parent=1 // pred_region
      %7070 = dma.done [#allocation4], 128
    $region65: #{tpu_custom_call.1} parent=1 // pred_fallthru
      _
    %7071 = vsyncpa [#allocation3], 1
    %7072 = vsyncpa [#allocation6], 1
    %7073 = vsyncpa [#allocation9], 1
    %7074 = vsyncpa [#allocation12], 1
    %7075 = vsyncpa [#allocation4], 1

</llo_original>
